<compile_context>
chip_gen: v7x
topology: tpu7x:2x2x1
jax: 0.10.0
libtpu: 0.0.40
codegen_flags: <defaults>
</compile_context>

<pallas_src>
import jax
import jax.numpy as jnp
from jax.experimental import pallas as pl
from jax.experimental.pallas import tpu as pltpu


# ----------------------------------------------------------------------------
# Pallas kernels
# ----------------------------------------------------------------------------

def conv_block_kernel(w_ref, b_ref, p_ref, m_ref, o_ref):
    """Fused Conv(5x5, pad 2) + bias + ReLU + MaxPool(2x2).

    w_ref: (Cout, K)      conv weight reshaped, K = Cin*25
    b_ref: (Cout, 1)      bias (broadcast over lanes)
    p_ref: (4, K, M)      im2col patches, one slab per pool sub-position,
                          M = B*Ho*Wo  (pixels on the lane axis -> lane dense)
    m_ref: (4, 1, M)      validity masks for pool padding (1.0 / 0.0)
    o_ref: (Cout, M)      pooled, ReLU'd activations
    """
    w = w_ref[...]
    b = b_ref[...]
    acc = None
    for s in range(4):  # static unroll over the 4 pool sub-positions
        y = jnp.dot(w, p_ref[s], preferred_element_type=jnp.float32) + b
        y = jnp.maximum(y, 0.0) * m_ref[s]
        acc = y if acc is None else jnp.maximum(acc, y)
    o_ref[...] = acc.astype(o_ref.dtype)


def linear_kernel(x_ref, w_ref, b_ref, o_ref):
    """out = x @ W_t + b  (W_t already transposed in the wrapper)."""
    o_ref[...] = (jnp.dot(x_ref[...], w_ref[...],
                          preferred_element_type=jnp.float32)
                  + b_ref[...]).astype(o_ref.dtype)


# ----------------------------------------------------------------------------
# Wrappers (layout plumbing + pallas_call)
# ----------------------------------------------------------------------------

def _conv_relu_pool_block(x, w, b, pool_pad):
    """x: (B, Cin, H, W) f32, w: (Cout, Cin, 5, 5), b: (Cout,)."""
    B, Cin, H, W = x.shape
    Cout = w.shape[0]
    Ho = (H + 2 * pool_pad - 2) // 2 + 1
    Wo = (W + 2 * pool_pad - 2) // 2 + 1
    M = B * Ho * Wo
    K = Cin * 25

    xpad = jnp.pad(x, ((0, 0), (0, 0), (2, 2), (2, 2)))  # conv padding = 2

    io = jnp.arange(Ho)
    jo = jnp.arange(Wo)
    patch_slabs = []
    mask_slabs = []
    for p in range(2):
        for q in range(2):
            # conv-output coordinates covered by this pool sub-position
            r = 2 * io - pool_pad + p          # (Ho,)
            c = 2 * jo - pool_pad + q          # (Wo,)
            valid = (((r >= 0) & (r < H))[:, None]
                     & ((c >= 0) & (c < W))[None, :])      # (Ho, Wo)
            r_cl = jnp.clip(r, 0, H - 1)
            c_cl = jnp.clip(c, 0, W - 1)
            taps = []
            for dy in range(5):
                for dx in range(5):
                    # (B, Cin, Ho, Wo) gather of the shifted conv input
                    taps.append(xpad[:, :, (r_cl + dy)[:, None],
                                     (c_cl + dx)[None, :]])
            pat = jnp.stack(taps, axis=0)                  # (25, B, Cin, Ho, Wo)
            pat = pat.transpose(2, 0, 1, 3, 4)             # (Cin, 25, B, Ho, Wo)
            patch_slabs.append(pat.reshape(K, M))
            mask_slabs.append(
                jnp.broadcast_to(valid[None], (B, Ho, Wo))
                .reshape(1, M).astype(jnp.float32))

    patches = jnp.stack(patch_slabs, axis=0)   # (4, K, M)
    masks = jnp.stack(mask_slabs, axis=0)      # (4, 1, M)
    wmat = w.reshape(Cout, K)                  # row index = ci*25 + dy*5 + dx
    bcol = b.reshape(Cout, 1)

    out = pl.pallas_call(
        conv_block_kernel,
        out_shape=jax.ShapeDtypeStruct((Cout, M), jnp.float32),
        grid=(1,),
        in_specs=[
            pl.BlockSpec((Cout, K), lambda i: (0, 0)),
            pl.BlockSpec((Cout, 1), lambda i: (0, 0)),
            pl.BlockSpec((4, K, M), lambda i: (0, 0, 0)),
            pl.BlockSpec((4, 1, M), lambda i: (0, 0, 0)),
        ],
        out_specs=pl.BlockSpec((Cout, M), lambda i: (0, 0)),
        compiler_params=pltpu.CompilerParams(
            dimension_semantics=("arbitrary",)),
    )(wmat, bcol, patches, masks)

    # back to NCHW for the next layer / flatten (wrapper-side layout plumbing)
    return out.reshape(Cout, B, Ho, Wo).transpose(1, 0, 2, 3)


def _linear(x2d, w, b):
    """x2d: (B, Din), w: (Dout, Din), b: (Dout,)."""
    B, Din = x2d.shape
    Dout = w.shape[0]
    wt = w.T                    # pre-transpose in the wrapper (no in-kernel .T)
    b2 = b.reshape(1, Dout)
    return pl.pallas_call(
        linear_kernel,
        out_shape=jax.ShapeDtypeStruct((B, Dout), jnp.float32),
        grid=(1,),
        in_specs=[
            pl.BlockSpec((B, Din), lambda i: (0, 0)),
            pl.BlockSpec((Din, Dout), lambda i: (0, 0)),
            pl.BlockSpec((1, Dout), lambda i: (0, 0)),
        ],
        out_specs=pl.BlockSpec((B, Dout), lambda i: (0, 0)),
        compiler_params=pltpu.CompilerParams(
            dimension_semantics=("arbitrary",)),
    )(x2d, wt, b2)


@jax.jit
def cnn_forward(x, params):
    w1, b1, w2, b2, w3, b3, wo, bo = params
    x = _conv_relu_pool_block(x, w1, b1, pool_pad=0)   # (B, 10, 14, 14)
    x = _conv_relu_pool_block(x, w2, b2, pool_pad=0)   # (B, 20, 7, 7)
    x = _conv_relu_pool_block(x, w3, b3, pool_pad=1)   # (B, 40, 4, 4)
    feat = x.reshape(x.shape[0], -1)                   # (B, 640), torch .view order
    return _linear(feat, wo, bo)                       # (B, 40)


# ----------------------------------------------------------------------------
# Pure-JAX reference (independent of the kernel path)
# ----------------------------------------------------------------------------

def reference_forward(x, params):
    w1, b1, w2, b2, w3, b3, wo, bo = params

    def conv(x, w, b):
        y = jax.lax.conv_general_dilated(
            x, w, window_strides=(1, 1), padding=((2, 2), (2, 2)),
            dimension_numbers=("NCHW", "OIHW", "NCHW"),
            precision=jax.lax.Precision.HIGHEST)
        return y + b[None, :, None, None]

    def pool(x, pad):
        return jax.lax.reduce_window(
            x, -jnp.inf, jax.lax.max,
            window_dimensions=(1, 1, 2, 2), window_strides=(1, 1, 2, 2),
            padding=((0, 0), (0, 0), (pad, pad), (pad, pad)))

    x = pool(jnp.maximum(conv(x, w1, b1), 0.0), 0)
    x = pool(jnp.maximum(conv(x, w2, b2), 0.0), 0)
    x = pool(jnp.maximum(conv(x, w3, b3), 0.0), 1)
    feat = x.reshape(x.shape[0], -1)
    return jnp.dot(feat, wo.T, precision=jax.lax.Precision.HIGHEST) + bo[None, :]


# ----------------------------------------------------------------------------
# Main
# ----------------------------------------------------------------------------

if __name__ == "__main__":
    key = jax.random.PRNGKey(0)
    keys = jax.random.split(key, 9)

    def uinit(k, shape, fan_in):
        bound = 1.0 / (fan_in ** 0.5)
        return jax.random.uniform(k, shape, jnp.float32, -bound, bound)

    # PyTorch-style Linear/Conv2d uniform init (deterministic).
    w1 = uinit(keys[0], (10, 1, 5, 5), 1 * 25);   b1 = uinit(keys[1], (10,), 1 * 25)
    w2 = uinit(keys[2], (20, 10, 5, 5), 10 * 25); b2 = uinit(keys[3], (20,), 10 * 25)
    w3 = uinit(keys[4], (40, 20, 5, 5), 20 * 25); b3 = uinit(keys[5], (40,), 20 * 25)
    wo = uinit(keys[6], (40, 640), 640);          bo = uinit(keys[7], (40,), 640)
    params = (w1, b1, w2, b2, w3, b3, wo, bo)

    # batch=2, 1 channel, 28x28 (the spatial size implied by Linear(40*4*4, 40))
    x = jax.random.normal(keys[8], (2, 1, 28, 28), jnp.float32)

    out = cnn_forward(x, params)
    out = jax.block_until_ready(out)

    ref = reference_forward(x, params)
    assert out.shape == (2, 40), f"bad shape {out.shape}"
    assert jnp.allclose(out, ref, atol=2e-2, rtol=2e-2), (
        "mismatch vs reference: max abs diff = "
        f"{float(jnp.max(jnp.abs(out - ref)))}")

    print("KERNEL_OK")
</pallas_src>

<mosaic_0001>
module attributes {stable_mosaic.version = 11 : i64} {
  func.func @conv_block_kernel(%arg0: i32, %arg1: memref<10x25xf32, #tpu.memory_space<vmem>>, %arg2: memref<10x1xf32, #tpu.memory_space<vmem>>, %arg3: memref<4x25x392xf32, #tpu.memory_space<vmem>>, %arg4: memref<4x1x392xf32, #tpu.memory_space<vmem>>, %arg5: memref<10x392xf32, #tpu.memory_space<vmem>>) attributes {dimension_semantics = [#tpu.dimension_semantics<arbitrary>], iteration_bounds = array<i64: 1>, scalar_prefetch = 0 : i64, scratch_operands = 0 : i64, tpu.core_type = #tpu.core_type<tc>, window_params = [{pipeline_mode = #tpu.pipeline_mode<synchronous>, transform_indices = @transform_0, window_bounds = array<i64: 10, 25>}, {pipeline_mode = #tpu.pipeline_mode<synchronous>, transform_indices = @transform_1, window_bounds = array<i64: 10, 1>}, {pipeline_mode = #tpu.pipeline_mode<synchronous>, transform_indices = @transform_2, window_bounds = array<i64: 4, 25, 392>}, {pipeline_mode = #tpu.pipeline_mode<synchronous>, transform_indices = @transform_3, window_bounds = array<i64: 4, 1, 392>}, {pipeline_mode = #tpu.pipeline_mode<synchronous>, transform_indices = @transform_4, window_bounds = array<i64: 10, 392>}]} {
    %c0 = arith.constant 0 : index
    %c0_0 = arith.constant 0 : index
    %0 = vector.load %arg1[%c0, %c0_0] : memref<10x25xf32, #tpu.memory_space<vmem>>, vector<10x25xf32>
    %c0_1 = arith.constant 0 : index
    %c0_2 = arith.constant 0 : index
    %1 = vector.load %arg2[%c0_1, %c0_2] : memref<10x1xf32, #tpu.memory_space<vmem>>, vector<10x1xf32>
    %c0_3 = arith.constant 0 : index
    %c0_4 = arith.constant 0 : index
    %c0_5 = arith.constant 0 : index
    %2 = vector.load %arg3[%c0_3, %c0_4, %c0_5] : memref<4x25x392xf32, #tpu.memory_space<vmem>>, vector<1x25x392xf32>
    %3 = vector.shape_cast %2 : vector<1x25x392xf32> to vector<25x392xf32>
    %cst = arith.constant dense<0.000000e+00> : vector<10x392xf32>
    %4 = tpu.matmul %0, %3, %cst {dimension_numbers = #tpu.dot_dimension_numbers<[1], [0], [0], [1], [0, 0, 1, 1], [], []>} : vector<10x25xf32>, vector<25x392xf32>, vector<10x392xf32> -> vector<10x392xf32>
    %5 = vector.broadcast %1 : vector<10x1xf32> to vector<10x392xf32>
    %6 = arith.addf %4, %5 : vector<10x392xf32>
    %cst_6 = arith.constant 0.000000e+00 : f32
    %7 = vector.broadcast %cst_6 : f32 to vector<10x392xf32>
    %8 = arith.maximumf %6, %7 : vector<10x392xf32>
    %c0_7 = arith.constant 0 : index
    %c0_8 = arith.constant 0 : index
    %c0_9 = arith.constant 0 : index
    %9 = vector.load %arg4[%c0_7, %c0_8, %c0_9] : memref<4x1x392xf32, #tpu.memory_space<vmem>>, vector<1x1x392xf32>
    %10 = vector.shape_cast %9 : vector<1x1x392xf32> to vector<1x392xf32>
    %11 = vector.broadcast %10 : vector<1x392xf32> to vector<10x392xf32>
    %12 = arith.mulf %8, %11 : vector<10x392xf32>
    %c1 = arith.constant 1 : index
    %c0_10 = arith.constant 0 : index
    %c0_11 = arith.constant 0 : index
    %13 = vector.load %arg3[%c1, %c0_10, %c0_11] : memref<4x25x392xf32, #tpu.memory_space<vmem>>, vector<1x25x392xf32>
    %14 = vector.shape_cast %13 : vector<1x25x392xf32> to vector<25x392xf32>
    %cst_12 = arith.constant dense<0.000000e+00> : vector<10x392xf32>
    %15 = tpu.matmul %0, %14, %cst_12 {dimension_numbers = #tpu.dot_dimension_numbers<[1], [0], [0], [1], [0, 0, 1, 1], [], []>} : vector<10x25xf32>, vector<25x392xf32>, vector<10x392xf32> -> vector<10x392xf32>
    %16 = vector.broadcast %1 : vector<10x1xf32> to vector<10x392xf32>
    %17 = arith.addf %15, %16 : vector<10x392xf32>
    %cst_13 = arith.constant 0.000000e+00 : f32
    %18 = vector.broadcast %cst_13 : f32 to vector<10x392xf32>
    %19 = arith.maximumf %17, %18 : vector<10x392xf32>
    %c1_14 = arith.constant 1 : index
    %c0_15 = arith.constant 0 : index
    %c0_16 = arith.constant 0 : index
    %20 = vector.load %arg4[%c1_14, %c0_15, %c0_16] : memref<4x1x392xf32, #tpu.memory_space<vmem>>, vector<1x1x392xf32>
    %21 = vector.shape_cast %20 : vector<1x1x392xf32> to vector<1x392xf32>
    %22 = vector.broadcast %21 : vector<1x392xf32> to vector<10x392xf32>
    %23 = arith.mulf %19, %22 : vector<10x392xf32>
    %24 = arith.maximumf %12, %23 : vector<10x392xf32>
    %c2 = arith.constant 2 : index
    %c0_17 = arith.constant 0 : index
    %c0_18 = arith.constant 0 : index
    %25 = vector.load %arg3[%c2, %c0_17, %c0_18] : memref<4x25x392xf32, #tpu.memory_space<vmem>>, vector<1x25x392xf32>
    %26 = vector.shape_cast %25 : vector<1x25x392xf32> to vector<25x392xf32>
    %cst_19 = arith.constant dense<0.000000e+00> : vector<10x392xf32>
    %27 = tpu.matmul %0, %26, %cst_19 {dimension_numbers = #tpu.dot_dimension_numbers<[1], [0], [0], [1], [0, 0, 1, 1], [], []>} : vector<10x25xf32>, vector<25x392xf32>, vector<10x392xf32> -> vector<10x392xf32>
    %28 = vector.broadcast %1 : vector<10x1xf32> to vector<10x392xf32>
    %29 = arith.addf %27, %28 : vector<10x392xf32>
    %cst_20 = arith.constant 0.000000e+00 : f32
    %30 = vector.broadcast %cst_20 : f32 to vector<10x392xf32>
    %31 = arith.maximumf %29, %30 : vector<10x392xf32>
    %c2_21 = arith.constant 2 : index
    %c0_22 = arith.constant 0 : index
    %c0_23 = arith.constant 0 : index
    %32 = vector.load %arg4[%c2_21, %c0_22, %c0_23] : memref<4x1x392xf32, #tpu.memory_space<vmem>>, vector<1x1x392xf32>
    %33 = vector.shape_cast %32 : vector<1x1x392xf32> to vector<1x392xf32>
    %34 = vector.broadcast %33 : vector<1x392xf32> to vector<10x392xf32>
    %35 = arith.mulf %31, %34 : vector<10x392xf32>
    %36 = arith.maximumf %24, %35 : vector<10x392xf32>
    %c3 = arith.constant 3 : index
    %c0_24 = arith.constant 0 : index
    %c0_25 = arith.constant 0 : index
    %37 = vector.load %arg3[%c3, %c0_24, %c0_25] : memref<4x25x392xf32, #tpu.memory_space<vmem>>, vector<1x25x392xf32>
    %38 = vector.shape_cast %37 : vector<1x25x392xf32> to vector<25x392xf32>
    %cst_26 = arith.constant dense<0.000000e+00> : vector<10x392xf32>
    %39 = tpu.matmul %0, %38, %cst_26 {dimension_numbers = #tpu.dot_dimension_numbers<[1], [0], [0], [1], [0, 0, 1, 1], [], []>} : vector<10x25xf32>, vector<25x392xf32>, vector<10x392xf32> -> vector<10x392xf32>
    %40 = vector.broadcast %1 : vector<10x1xf32> to vector<10x392xf32>
    %41 = arith.addf %39, %40 : vector<10x392xf32>
    %cst_27 = arith.constant 0.000000e+00 : f32
    %42 = vector.broadcast %cst_27 : f32 to vector<10x392xf32>
    %43 = arith.maximumf %41, %42 : vector<10x392xf32>
    %c3_28 = arith.constant 3 : index
    %c0_29 = arith.constant 0 : index
    %c0_30 = arith.constant 0 : index
    %44 = vector.load %arg4[%c3_28, %c0_29, %c0_30] : memref<4x1x392xf32, #tpu.memory_space<vmem>>, vector<1x1x392xf32>
    %45 = vector.shape_cast %44 : vector<1x1x392xf32> to vector<1x392xf32>
    %46 = vector.broadcast %45 : vector<1x392xf32> to vector<10x392xf32>
    %47 = arith.mulf %43, %46 : vector<10x392xf32>
    %48 = arith.maximumf %36, %47 : vector<10x392xf32>
    %c0_31 = arith.constant 0 : index
    %c0_32 = arith.constant 0 : index
    %49 = vector.load %arg5[%c0_31, %c0_32] : memref<10x392xf32, #tpu.memory_space<vmem>>, vector<10x392xf32>
    tpu.vector_store %arg5[%c0_31, %c0_32], %48 {strides = array<i32>} : memref<10x392xf32, #tpu.memory_space<vmem>>, vector<10x392xf32>,
    return
  }
  func.func @transform_0(%arg0: i32) -> (i32, i32) {
    %c0_i32 = arith.constant 0 : i32
    %c0_i32_0 = arith.constant 0 : i32
    %c0_i32_1 = arith.constant 0 : i32
    return %c0_i32, %c0_i32_0 : i32, i32
  }
  func.func @transform_1(%arg0: i32) -> (i32, i32) {
    %c0_i32 = arith.constant 0 : i32
    %c0_i32_0 = arith.constant 0 : i32
    %c0_i32_1 = arith.constant 0 : i32
    return %c0_i32, %c0_i32_0 : i32, i32
  }
  func.func @transform_2(%arg0: i32) -> (i32, i32, i32) {
    %c0_i32 = arith.constant 0 : i32
    %c0_i32_0 = arith.constant 0 : i32
    %c0_i32_1 = arith.constant 0 : i32
    %c0_i32_2 = arith.constant 0 : i32
    return %c0_i32, %c0_i32_0, %c0_i32_1 : i32, i32, i32
  }
  func.func @transform_3(%arg0: i32) -> (i32, i32, i32) {
    %c0_i32 = arith.constant 0 : i32
    %c0_i32_0 = arith.constant 0 : i32
    %c0_i32_1 = arith.constant 0 : i32
    %c0_i32_2 = arith.constant 0 : i32
    return %c0_i32, %c0_i32_0, %c0_i32_1 : i32, i32, i32
  }
  func.func @transform_4(%arg0: i32) -> (i32, i32) {
    %c0_i32 = arith.constant 0 : i32
    %c0_i32_0 = arith.constant 0 : i32
    %c0_i32_1 = arith.constant 0 : i32
    return %c0_i32, %c0_i32_0 : i32, i32
  }
}

module attributes {stable_mosaic.version = 11 : i64} {
  func.func @conv_block_kernel(%arg0: i32, %arg1: memref<20x250xf32, #tpu.memory_space<vmem>>, %arg2: memref<20x1xf32, #tpu.memory_space<vmem>>, %arg3: memref<4x250x98xf32, #tpu.memory_space<vmem>>, %arg4: memref<4x1x98xf32, #tpu.memory_space<vmem>>, %arg5: memref<20x98xf32, #tpu.memory_space<vmem>>) attributes {dimension_semantics = [#tpu.dimension_semantics<arbitrary>], iteration_bounds = array<i64: 1>, scalar_prefetch = 0 : i64, scratch_operands = 0 : i64, tpu.core_type = #tpu.core_type<tc>, window_params = [{pipeline_mode = #tpu.pipeline_mode<synchronous>, transform_indices = @transform_0, window_bounds = array<i64: 20, 250>}, {pipeline_mode = #tpu.pipeline_mode<synchronous>, transform_indices = @transform_1, window_bounds = array<i64: 20, 1>}, {pipeline_mode = #tpu.pipeline_mode<synchronous>, transform_indices = @transform_2, window_bounds = array<i64: 4, 250, 98>}, {pipeline_mode = #tpu.pipeline_mode<synchronous>, transform_indices = @transform_3, window_bounds = array<i64: 4, 1, 98>}, {pipeline_mode = #tpu.pipeline_mode<synchronous>, transform_indices = @transform_4, window_bounds = array<i64: 20, 98>}]} {
    %c0 = arith.constant 0 : index
    %c0_0 = arith.constant 0 : index
    %0 = vector.load %arg1[%c0, %c0_0] : memref<20x250xf32, #tpu.memory_space<vmem>>, vector<20x250xf32>
    %c0_1 = arith.constant 0 : index
    %c0_2 = arith.constant 0 : index
    %1 = vector.load %arg2[%c0_1, %c0_2] : memref<20x1xf32, #tpu.memory_space<vmem>>, vector<20x1xf32>
    %c0_3 = arith.constant 0 : index
    %c0_4 = arith.constant 0 : index
    %c0_5 = arith.constant 0 : index
    %2 = vector.load %arg3[%c0_3, %c0_4, %c0_5] : memref<4x250x98xf32, #tpu.memory_space<vmem>>, vector<1x250x98xf32>
    %3 = vector.shape_cast %2 : vector<1x250x98xf32> to vector<250x98xf32>
    %cst = arith.constant dense<0.000000e+00> : vector<20x98xf32>
    %4 = tpu.matmul %0, %3, %cst {dimension_numbers = #tpu.dot_dimension_numbers<[1], [0], [0], [1], [0, 0, 1, 1], [], []>} : vector<20x250xf32>, vector<250x98xf32>, vector<20x98xf32> -> vector<20x98xf32>
    %5 = vector.broadcast %1 : vector<20x1xf32> to vector<20x98xf32>
    %6 = arith.addf %4, %5 : vector<20x98xf32>
    %cst_6 = arith.constant 0.000000e+00 : f32
    %7 = vector.broadcast %cst_6 : f32 to vector<20x98xf32>
    %8 = arith.maximumf %6, %7 : vector<20x98xf32>
    %c0_7 = arith.constant 0 : index
    %c0_8 = arith.constant 0 : index
    %c0_9 = arith.constant 0 : index
    %9 = vector.load %arg4[%c0_7, %c0_8, %c0_9] : memref<4x1x98xf32, #tpu.memory_space<vmem>>, vector<1x1x98xf32>
    %10 = vector.shape_cast %9 : vector<1x1x98xf32> to vector<1x98xf32>
    %11 = vector.broadcast %10 : vector<1x98xf32> to vector<20x98xf32>
    %12 = arith.mulf %8, %11 : vector<20x98xf32>
    %c1 = arith.constant 1 : index
    %c0_10 = arith.constant 0 : index
    %c0_11 = arith.constant 0 : index
    %13 = vector.load %arg3[%c1, %c0_10, %c0_11] : memref<4x250x98xf32, #tpu.memory_space<vmem>>, vector<1x250x98xf32>
    %14 = vector.shape_cast %13 : vector<1x250x98xf32> to vector<250x98xf32>
    %cst_12 = arith.constant dense<0.000000e+00> : vector<20x98xf32>
    %15 = tpu.matmul %0, %14, %cst_12 {dimension_numbers = #tpu.dot_dimension_numbers<[1], [0], [0], [1], [0, 0, 1, 1], [], []>} : vector<20x250xf32>, vector<250x98xf32>, vector<20x98xf32> -> vector<20x98xf32>
    %16 = vector.broadcast %1 : vector<20x1xf32> to vector<20x98xf32>
    %17 = arith.addf %15, %16 : vector<20x98xf32>
    %cst_13 = arith.constant 0.000000e+00 : f32
    %18 = vector.broadcast %cst_13 : f32 to vector<20x98xf32>
    %19 = arith.maximumf %17, %18 : vector<20x98xf32>
    %c1_14 = arith.constant 1 : index
    %c0_15 = arith.constant 0 : index
    %c0_16 = arith.constant 0 : index
    %20 = vector.load %arg4[%c1_14, %c0_15, %c0_16] : memref<4x1x98xf32, #tpu.memory_space<vmem>>, vector<1x1x98xf32>
    %21 = vector.shape_cast %20 : vector<1x1x98xf32> to vector<1x98xf32>
    %22 = vector.broadcast %21 : vector<1x98xf32> to vector<20x98xf32>
    %23 = arith.mulf %19, %22 : vector<20x98xf32>
    %24 = arith.maximumf %12, %23 : vector<20x98xf32>
    %c2 = arith.constant 2 : index
    %c0_17 = arith.constant 0 : index
    %c0_18 = arith.constant 0 : index
    %25 = vector.load %arg3[%c2, %c0_17, %c0_18] : memref<4x250x98xf32, #tpu.memory_space<vmem>>, vector<1x250x98xf32>
    %26 = vector.shape_cast %25 : vector<1x250x98xf32> to vector<250x98xf32>
    %cst_19 = arith.constant dense<0.000000e+00> : vector<20x98xf32>
    %27 = tpu.matmul %0, %26, %cst_19 {dimension_numbers = #tpu.dot_dimension_numbers<[1], [0], [0], [1], [0, 0, 1, 1], [], []>} : vector<20x250xf32>, vector<250x98xf32>, vector<20x98xf32> -> vector<20x98xf32>
    %28 = vector.broadcast %1 : vector<20x1xf32> to vector<20x98xf32>
    %29 = arith.addf %27, %28 : vector<20x98xf32>
    %cst_20 = arith.constant 0.000000e+00 : f32
    %30 = vector.broadcast %cst_20 : f32 to vector<20x98xf32>
    %31 = arith.maximumf %29, %30 : vector<20x98xf32>
    %c2_21 = arith.constant 2 : index
    %c0_22 = arith.constant 0 : index
    %c0_23 = arith.constant 0 : index
    %32 = vector.load %arg4[%c2_21, %c0_22, %c0_23] : memref<4x1x98xf32, #tpu.memory_space<vmem>>, vector<1x1x98xf32>
    %33 = vector.shape_cast %32 : vector<1x1x98xf32> to vector<1x98xf32>
    %34 = vector.broadcast %33 : vector<1x98xf32> to vector<20x98xf32>
    %35 = arith.mulf %31, %34 : vector<20x98xf32>
    %36 = arith.maximumf %24, %35 : vector<20x98xf32>
    %c3 = arith.constant 3 : index
    %c0_24 = arith.constant 0 : index
    %c0_25 = arith.constant 0 : index
    %37 = vector.load %arg3[%c3, %c0_24, %c0_25] : memref<4x250x98xf32, #tpu.memory_space<vmem>>, vector<1x250x98xf32>
    %38 = vector.shape_cast %37 : vector<1x250x98xf32> to vector<250x98xf32>
    %cst_26 = arith.constant dense<0.000000e+00> : vector<20x98xf32>
    %39 = tpu.matmul %0, %38, %cst_26 {dimension_numbers = #tpu.dot_dimension_numbers<[1], [0], [0], [1], [0, 0, 1, 1], [], []>} : vector<20x250xf32>, vector<250x98xf32>, vector<20x98xf32> -> vector<20x98xf32>
    %40 = vector.broadcast %1 : vector<20x1xf32> to vector<20x98xf32>
    %41 = arith.addf %39, %40 : vector<20x98xf32>
    %cst_27 = arith.constant 0.000000e+00 : f32
    %42 = vector.broadcast %cst_27 : f32 to vector<20x98xf32>
    %43 = arith.maximumf %41, %42 : vector<20x98xf32>
    %c3_28 = arith.constant 3 : index
    %c0_29 = arith.constant 0 : index
    %c0_30 = arith.constant 0 : index
    %44 = vector.load %arg4[%c3_28, %c0_29, %c0_30] : memref<4x1x98xf32, #tpu.memory_space<vmem>>, vector<1x1x98xf32>
    %45 = vector.shape_cast %44 : vector<1x1x98xf32> to vector<1x98xf32>
    %46 = vector.broadcast %45 : vector<1x98xf32> to vector<20x98xf32>
    %47 = arith.mulf %43, %46 : vector<20x98xf32>
    %48 = arith.maximumf %36, %47 : vector<20x98xf32>
    %c0_31 = arith.constant 0 : index
    %c0_32 = arith.constant 0 : index
    %49 = vector.load %arg5[%c0_31, %c0_32] : memref<20x98xf32, #tpu.memory_space<vmem>>, vector<20x98xf32>
    tpu.vector_store %arg5[%c0_31, %c0_32], %48 {strides = array<i32>} : memref<20x98xf32, #tpu.memory_space<vmem>>, vector<20x98xf32>,
    return
  }
  func.func @transform_0(%arg0: i32) -> (i32, i32) {
    %c0_i32 = arith.constant 0 : i32
    %c0_i32_0 = arith.constant 0 : i32
    %c0_i32_1 = arith.constant 0 : i32
    return %c0_i32, %c0_i32_0 : i32, i32
  }
  func.func @transform_1(%arg0: i32) -> (i32, i32) {
    %c0_i32 = arith.constant 0 : i32
    %c0_i32_0 = arith.constant 0 : i32
    %c0_i32_1 = arith.constant 0 : i32
    return %c0_i32, %c0_i32_0 : i32, i32
  }
  func.func @transform_2(%arg0: i32) -> (i32, i32, i32) {
    %c0_i32 = arith.constant 0 : i32
    %c0_i32_0 = arith.constant 0 : i32
    %c0_i32_1 = arith.constant 0 : i32
    %c0_i32_2 = arith.constant 0 : i32
    return %c0_i32, %c0_i32_0, %c0_i32_1 : i32, i32, i32
  }
  func.func @transform_3(%arg0: i32) -> (i32, i32, i32) {
    %c0_i32 = arith.constant 0 : i32
    %c0_i32_0 = arith.constant 0 : i32
    %c0_i32_1 = arith.constant 0 : i32
    %c0_i32_2 = arith.constant 0 : i32
    return %c0_i32, %c0_i32_0, %c0_i32_1 : i32, i32, i32
  }
  func.func @transform_4(%arg0: i32) -> (i32, i32) {
    %c0_i32 = arith.constant 0 : i32
    %c0_i32_0 = arith.constant 0 : i32
    %c0_i32_1 = arith.constant 0 : i32
    return %c0_i32, %c0_i32_0 : i32, i32
  }
}

module attributes {stable_mosaic.version = 11 : i64} {
  func.func @conv_block_kernel(%arg0: i32, %arg1: memref<40x500xf32, #tpu.memory_space<vmem>>, %arg2: memref<40x1xf32, #tpu.memory_space<vmem>>, %arg3: memref<4x500x32xf32, #tpu.memory_space<vmem>>, %arg4: memref<4x1x32xf32, #tpu.memory_space<vmem>>, %arg5: memref<40x32xf32, #tpu.memory_space<vmem>>) attributes {dimension_semantics = [#tpu.dimension_semantics<arbitrary>], iteration_bounds = array<i64: 1>, scalar_prefetch = 0 : i64, scratch_operands = 0 : i64, tpu.core_type = #tpu.core_type<tc>, window_params = [{pipeline_mode = #tpu.pipeline_mode<synchronous>, transform_indices = @transform_0, window_bounds = array<i64: 40, 500>}, {pipeline_mode = #tpu.pipeline_mode<synchronous>, transform_indices = @transform_1, window_bounds = array<i64: 40, 1>}, {pipeline_mode = #tpu.pipeline_mode<synchronous>, transform_indices = @transform_2, window_bounds = array<i64: 4, 500, 32>}, {pipeline_mode = #tpu.pipeline_mode<synchronous>, transform_indices = @transform_3, window_bounds = array<i64: 4, 1, 32>}, {pipeline_mode = #tpu.pipeline_mode<synchronous>, transform_indices = @transform_4, window_bounds = array<i64: 40, 32>}]} {
    %c0 = arith.constant 0 : index
    %c0_0 = arith.constant 0 : index
    %0 = vector.load %arg1[%c0, %c0_0] : memref<40x500xf32, #tpu.memory_space<vmem>>, vector<40x500xf32>
    %c0_1 = arith.constant 0 : index
    %c0_2 = arith.constant 0 : index
    %1 = vector.load %arg2[%c0_1, %c0_2] : memref<40x1xf32, #tpu.memory_space<vmem>>, vector<40x1xf32>
    %c0_3 = arith.constant 0 : index
    %c0_4 = arith.constant 0 : index
    %c0_5 = arith.constant 0 : index
    %2 = vector.load %arg3[%c0_3, %c0_4, %c0_5] : memref<4x500x32xf32, #tpu.memory_space<vmem>>, vector<1x500x32xf32>
    %3 = vector.shape_cast %2 : vector<1x500x32xf32> to vector<500x32xf32>
    %cst = arith.constant dense<0.000000e+00> : vector<40x32xf32>
    %4 = tpu.matmul %0, %3, %cst {dimension_numbers = #tpu.dot_dimension_numbers<[1], [0], [0], [1], [0, 0, 1, 1], [], []>} : vector<40x500xf32>, vector<500x32xf32>, vector<40x32xf32> -> vector<40x32xf32>
    %5 = vector.broadcast %1 : vector<40x1xf32> to vector<40x32xf32>
    %6 = arith.addf %4, %5 : vector<40x32xf32>
    %cst_6 = arith.constant 0.000000e+00 : f32
    %7 = vector.broadcast %cst_6 : f32 to vector<40x32xf32>
    %8 = arith.maximumf %6, %7 : vector<40x32xf32>
    %c0_7 = arith.constant 0 : index
    %c0_8 = arith.constant 0 : index
    %c0_9 = arith.constant 0 : index
    %9 = vector.load %arg4[%c0_7, %c0_8, %c0_9] : memref<4x1x32xf32, #tpu.memory_space<vmem>>, vector<1x1x32xf32>
    %10 = vector.shape_cast %9 : vector<1x1x32xf32> to vector<1x32xf32>
    %11 = vector.broadcast %10 : vector<1x32xf32> to vector<40x32xf32>
    %12 = arith.mulf %8, %11 : vector<40x32xf32>
    %c1 = arith.constant 1 : index
    %c0_10 = arith.constant 0 : index
    %c0_11 = arith.constant 0 : index
    %13 = vector.load %arg3[%c1, %c0_10, %c0_11] : memref<4x500x32xf32, #tpu.memory_space<vmem>>, vector<1x500x32xf32>
    %14 = vector.shape_cast %13 : vector<1x500x32xf32> to vector<500x32xf32>
    %cst_12 = arith.constant dense<0.000000e+00> : vector<40x32xf32>
    %15 = tpu.matmul %0, %14, %cst_12 {dimension_numbers = #tpu.dot_dimension_numbers<[1], [0], [0], [1], [0, 0, 1, 1], [], []>} : vector<40x500xf32>, vector<500x32xf32>, vector<40x32xf32> -> vector<40x32xf32>
    %16 = vector.broadcast %1 : vector<40x1xf32> to vector<40x32xf32>
    %17 = arith.addf %15, %16 : vector<40x32xf32>
    %cst_13 = arith.constant 0.000000e+00 : f32
    %18 = vector.broadcast %cst_13 : f32 to vector<40x32xf32>
    %19 = arith.maximumf %17, %18 : vector<40x32xf32>
    %c1_14 = arith.constant 1 : index
    %c0_15 = arith.constant 0 : index
    %c0_16 = arith.constant 0 : index
    %20 = vector.load %arg4[%c1_14, %c0_15, %c0_16] : memref<4x1x32xf32, #tpu.memory_space<vmem>>, vector<1x1x32xf32>
    %21 = vector.shape_cast %20 : vector<1x1x32xf32> to vector<1x32xf32>
    %22 = vector.broadcast %21 : vector<1x32xf32> to vector<40x32xf32>
    %23 = arith.mulf %19, %22 : vector<40x32xf32>
    %24 = arith.maximumf %12, %23 : vector<40x32xf32>
    %c2 = arith.constant 2 : index
    %c0_17 = arith.constant 0 : index
    %c0_18 = arith.constant 0 : index
    %25 = vector.load %arg3[%c2, %c0_17, %c0_18] : memref<4x500x32xf32, #tpu.memory_space<vmem>>, vector<1x500x32xf32>
    %26 = vector.shape_cast %25 : vector<1x500x32xf32> to vector<500x32xf32>
    %cst_19 = arith.constant dense<0.000000e+00> : vector<40x32xf32>
    %27 = tpu.matmul %0, %26, %cst_19 {dimension_numbers = #tpu.dot_dimension_numbers<[1], [0], [0], [1], [0, 0, 1, 1], [], []>} : vector<40x500xf32>, vector<500x32xf32>, vector<40x32xf32> -> vector<40x32xf32>
    %28 = vector.broadcast %1 : vector<40x1xf32> to vector<40x32xf32>
    %29 = arith.addf %27, %28 : vector<40x32xf32>
    %cst_20 = arith.constant 0.000000e+00 : f32
    %30 = vector.broadcast %cst_20 : f32 to vector<40x32xf32>
    %31 = arith.maximumf %29, %30 : vector<40x32xf32>
    %c2_21 = arith.constant 2 : index
    %c0_22 = arith.constant 0 : index
    %c0_23 = arith.constant 0 : index
    %32 = vector.load %arg4[%c2_21, %c0_22, %c0_23] : memref<4x1x32xf32, #tpu.memory_space<vmem>>, vector<1x1x32xf32>
    %33 = vector.shape_cast %32 : vector<1x1x32xf32> to vector<1x32xf32>
    %34 = vector.broadcast %33 : vector<1x32xf32> to vector<40x32xf32>
    %35 = arith.mulf %31, %34 : vector<40x32xf32>
    %36 = arith.maximumf %24, %35 : vector<40x32xf32>
    %c3 = arith.constant 3 : index
    %c0_24 = arith.constant 0 : index
    %c0_25 = arith.constant 0 : index
    %37 = vector.load %arg3[%c3, %c0_24, %c0_25] : memref<4x500x32xf32, #tpu.memory_space<vmem>>, vector<1x500x32xf32>
    %38 = vector.shape_cast %37 : vector<1x500x32xf32> to vector<500x32xf32>
    %cst_26 = arith.constant dense<0.000000e+00> : vector<40x32xf32>
    %39 = tpu.matmul %0, %38, %cst_26 {dimension_numbers = #tpu.dot_dimension_numbers<[1], [0], [0], [1], [0, 0, 1, 1], [], []>} : vector<40x500xf32>, vector<500x32xf32>, vector<40x32xf32> -> vector<40x32xf32>
    %40 = vector.broadcast %1 : vector<40x1xf32> to vector<40x32xf32>
    %41 = arith.addf %39, %40 : vector<40x32xf32>
    %cst_27 = arith.constant 0.000000e+00 : f32
    %42 = vector.broadcast %cst_27 : f32 to vector<40x32xf32>
    %43 = arith.maximumf %41, %42 : vector<40x32xf32>
    %c3_28 = arith.constant 3 : index
    %c0_29 = arith.constant 0 : index
    %c0_30 = arith.constant 0 : index
    %44 = vector.load %arg4[%c3_28, %c0_29, %c0_30] : memref<4x1x32xf32, #tpu.memory_space<vmem>>, vector<1x1x32xf32>
    %45 = vector.shape_cast %44 : vector<1x1x32xf32> to vector<1x32xf32>
    %46 = vector.broadcast %45 : vector<1x32xf32> to vector<40x32xf32>
    %47 = arith.mulf %43, %46 : vector<40x32xf32>
    %48 = arith.maximumf %36, %47 : vector<40x32xf32>
    %c0_31 = arith.constant 0 : index
    %c0_32 = arith.constant 0 : index
    %49 = vector.load %arg5[%c0_31, %c0_32] : memref<40x32xf32, #tpu.memory_space<vmem>>, vector<40x32xf32>
    tpu.vector_store %arg5[%c0_31, %c0_32], %48 {strides = array<i32>} : memref<40x32xf32, #tpu.memory_space<vmem>>, vector<40x32xf32>,
    return
  }
  func.func @transform_0(%arg0: i32) -> (i32, i32) {
    %c0_i32 = arith.constant 0 : i32
    %c0_i32_0 = arith.constant 0 : i32
    %c0_i32_1 = arith.constant 0 : i32
    return %c0_i32, %c0_i32_0 : i32, i32
  }
  func.func @transform_1(%arg0: i32) -> (i32, i32) {
    %c0_i32 = arith.constant 0 : i32
    %c0_i32_0 = arith.constant 0 : i32
    %c0_i32_1 = arith.constant 0 : i32
    return %c0_i32, %c0_i32_0 : i32, i32
  }
  func.func @transform_2(%arg0: i32) -> (i32, i32, i32) {
    %c0_i32 = arith.constant 0 : i32
    %c0_i32_0 = arith.constant 0 : i32
    %c0_i32_1 = arith.constant 0 : i32
    %c0_i32_2 = arith.constant 0 : i32
    return %c0_i32, %c0_i32_0, %c0_i32_1 : i32, i32, i32
  }
  func.func @transform_3(%arg0: i32) -> (i32, i32, i32) {
    %c0_i32 = arith.constant 0 : i32
    %c0_i32_0 = arith.constant 0 : i32
    %c0_i32_1 = arith.constant 0 : i32
    %c0_i32_2 = arith.constant 0 : i32
    return %c0_i32, %c0_i32_0, %c0_i32_1 : i32, i32, i32
  }
  func.func @transform_4(%arg0: i32) -> (i32, i32) {
    %c0_i32 = arith.constant 0 : i32
    %c0_i32_0 = arith.constant 0 : i32
    %c0_i32_1 = arith.constant 0 : i32
    return %c0_i32, %c0_i32_0 : i32, i32
  }
}

module attributes {stable_mosaic.version = 11 : i64} {
  func.func @linear_kernel(%arg0: i32, %arg1: memref<2x640xf32, #tpu.memory_space<vmem>>, %arg2: memref<640x40xf32, #tpu.memory_space<vmem>>, %arg3: memref<1x40xf32, #tpu.memory_space<vmem>>, %arg4: memref<2x40xf32, #tpu.memory_space<vmem>>) attributes {dimension_semantics = [#tpu.dimension_semantics<arbitrary>], iteration_bounds = array<i64: 1>, scalar_prefetch = 0 : i64, scratch_operands = 0 : i64, tpu.core_type = #tpu.core_type<tc>, window_params = [{pipeline_mode = #tpu.pipeline_mode<synchronous>, transform_indices = @transform_0, window_bounds = array<i64: 2, 640>}, {pipeline_mode = #tpu.pipeline_mode<synchronous>, transform_indices = @transform_1, window_bounds = array<i64: 640, 40>}, {pipeline_mode = #tpu.pipeline_mode<synchronous>, transform_indices = @transform_2, window_bounds = array<i64: 1, 40>}, {pipeline_mode = #tpu.pipeline_mode<synchronous>, transform_indices = @transform_3, window_bounds = array<i64: 2, 40>}]} {
    %c0 = arith.constant 0 : index
    %c0_0 = arith.constant 0 : index
    %0 = vector.load %arg1[%c0, %c0_0] : memref<2x640xf32, #tpu.memory_space<vmem>>, vector<2x640xf32>
    %c0_1 = arith.constant 0 : index
    %c0_2 = arith.constant 0 : index
    %1 = vector.load %arg2[%c0_1, %c0_2] : memref<640x40xf32, #tpu.memory_space<vmem>>, vector<640x40xf32>
    %cst = arith.constant dense<0.000000e+00> : vector<2x40xf32>
    %2 = tpu.matmul %0, %1, %cst {dimension_numbers = #tpu.dot_dimension_numbers<[1], [0], [0], [1], [0, 0, 1, 1], [], []>} : vector<2x640xf32>, vector<640x40xf32>, vector<2x40xf32> -> vector<2x40xf32>
    %c0_3 = arith.constant 0 : index
    %c0_4 = arith.constant 0 : index
    %3 = vector.load %arg3[%c0_3, %c0_4] : memref<1x40xf32, #tpu.memory_space<vmem>>, vector<1x40xf32>
    %4 = vector.broadcast %3 : vector<1x40xf32> to vector<2x40xf32>
    %5 = arith.addf %2, %4 : vector<2x40xf32>
    %c0_5 = arith.constant 0 : index
    %c0_6 = arith.constant 0 : index
    %6 = vector.load %arg4[%c0_5, %c0_6] : memref<2x40xf32, #tpu.memory_space<vmem>>, vector<2x40xf32>
    tpu.vector_store %arg4[%c0_5, %c0_6], %5 {strides = array<i32>} : memref<2x40xf32, #tpu.memory_space<vmem>>, vector<2x40xf32>,
    return
  }
  func.func @transform_0(%arg0: i32) -> (i32, i32) {
    %c0_i32 = arith.constant 0 : i32
    %c0_i32_0 = arith.constant 0 : i32
    %c0_i32_1 = arith.constant 0 : i32
    return %c0_i32, %c0_i32_0 : i32, i32
  }
  func.func @transform_1(%arg0: i32) -> (i32, i32) {
    %c0_i32 = arith.constant 0 : i32
    %c0_i32_0 = arith.constant 0 : i32
    %c0_i32_1 = arith.constant 0 : i32
    return %c0_i32, %c0_i32_0 : i32, i32
  }
  func.func @transform_2(%arg0: i32) -> (i32, i32) {
    %c0_i32 = arith.constant 0 : i32
    %c0_i32_0 = arith.constant 0 : i32
    %c0_i32_1 = arith.constant 0 : i32
    return %c0_i32, %c0_i32_0 : i32, i32
  }
  func.func @transform_3(%arg0: i32) -> (i32, i32) {
    %c0_i32 = arith.constant 0 : i32
    %c0_i32_0 = arith.constant 0 : i32
    %c0_i32_1 = arith.constant 0 : i32
    return %c0_i32, %c0_i32_0 : i32, i32
  }
}

</mosaic_0001>

<llo_original>
// kernel: cnn_forward.4
$region0: #{cnn_forward.4}
  #allocation0 [shape = 'u32[]', space=smem, size = 0x4, offset = 0x4, fixed_abs, tag = 'smem constant byte address 0x4 - core index']
  #allocation1 [shape = 'u32[144,128]{1,0:T(1,128)}', space=vmem, size = 0x12000, scoped, tag = 'internal scratch']
  %s0 = inlined_call_operand.vmem [shape: f32[10,25], index: 0, kind: input, shape index: {}]
  %s1 = inlined_call_operand.vmem [shape: f32[10,1], index: 1, kind: input, shape index: {}]
  %s2 = inlined_call_operand.vmem [shape: f32[4,25,392], index: 2, kind: input, shape index: {}]
  %s3 = inlined_call_operand.vmem [shape: f32[4,1,392], index: 3, kind: input, shape index: {}]
  %s4 = inlined_call_operand.vmem [shape: f32[10,392], index: 4, kind: output, shape index: {}]
  %s5 = sld [smem:[#allocation0]]
  $region26: #{cnn_forward.4} parent=0
    _
  %s7 = ssub.s32 1, %s5
  %s8 = scalar_select 0, %s7, %s5
  // Predicated region
  $region2: #{cnn_forward.4} parent=0 // pred_check
    _
  $region3: #{cnn_forward.4} parent=0 // pred_check_branch
    %10 = sbr.rel (0) target = $region5
  $region4: #{cnn_forward.4} parent=0 // pred_region
    _
  $region5: #{cnn_forward.4} parent=0 // pred_fallthru
    _
  // Predicated region
  $region6: #{cnn_forward.4} parent=0 // pred_check
    _
  $region7: #{cnn_forward.4} parent=0 // pred_check_branch
    %12 = sbr.rel (0) target = $region9
  $region8: #{cnn_forward.4} parent=0 // pred_region
    _
  $region9: #{cnn_forward.4} parent=0 // pred_fallthru
    _
  // Predicated region
  $region10: #{cnn_forward.4} parent=0 // pred_check
    _
  $region11: #{cnn_forward.4} parent=0 // pred_check_branch
    %14 = sbr.rel (0) target = $region13
  $region12: #{cnn_forward.4} parent=0 // pred_region
    _
  $region13: #{cnn_forward.4} parent=0 // pred_fallthru
    _
  // Predicated region
  $region14: #{cnn_forward.4} parent=0 // pred_check
    _
  $region15: #{cnn_forward.4} parent=0 // pred_check_branch
    %16 = sbr.rel (0) target = $region17
  $region16: #{cnn_forward.4} parent=0 // pred_region
    _
  $region17: #{cnn_forward.4} parent=0 // pred_fallthru
    _
  %v17 = vld [vmem:[%s0] sm:$0xff]
  %v18 = vld [vmem:[%s0 + $0x8] sm:$0x3]
  %v19 = vld [vmem:[%s1] sm:$0xff]
  %v20 = vld [vmem:[%s1 + $0x8] sm:$0x3]
  %v21 = vld [vmem:[%s2] sm:$0xff]
  %v22 = vld [vmem:[%s2 + $0x8] sm:$0xff]
  %v23 = vld [vmem:[%s2 + $0x10] sm:$0xff]
  %v24 = vld [vmem:[%s2 + $0x18] sm:$0xff]
  %v25 = vld [vmem:[%s2 + $0x20] sm:$0xff]
  %v26 = vld [vmem:[%s2 + $0x28] sm:$0xff]
  %v27 = vld [vmem:[%s2 + $0x30] sm:$0xff]
  %v28 = vld [vmem:[%s2 + $0x38] sm:$0xff]
  %v29 = vld [vmem:[%s2 + $0x40] sm:$0xff]
  %v30 = vld [vmem:[%s2 + $0x48] sm:$0xff]
  %v31 = vld [vmem:[%s2 + $0x50] sm:$0xff]
  %v32 = vld [vmem:[%s2 + $0x58] sm:$0xff]
  %v33 = vld [vmem:[%s2 + $0x60] sm:$0x1]
  %v34 = vld [vmem:[%s2 + $0x68] sm:$0x1]
  %v35 = vld [vmem:[%s2 + $0x70] sm:$0x1]
  %v36 = vld [vmem:[%s2 + $0x78] sm:$0x1]
  %38 = vset.pattern.permute.xlu0 0
  %39 = vperm.xlu0 %38, %v19
  %v40 = vpop.permute.xlu0 %39
  %43 = vset.pattern.permute.xlu0 0
  %44 = vperm.xlu0 %43, %v20
  %v45 = vpop.permute.xlu0 %44
  %vm47 = vcmask 203776
  %v49 = vsel %vm47, %v17, 0
  %v52 = vsel %vm47, %v18, 0
  %vm54 = vcmask 1040384
  %v56 = vsel %vm54, %v33, 0
  %v59 = vsel %vm54, %v34, 0
  %v62 = vsel %vm54, %v35, 0
  %v65 = vsel %vm54, %v36, 0
  %67 = vmatprep.subr.mxu0 %v22
  %68 = vmatpush1.msra.mxu0 %v21
  %69 = vmatprep.subr.mxu0 %v26
  %70 = vmatpush1.msra.mxu0 %v25
  %71 = vmatprep.subr.mxu0 %v30
  %72 = vmatpush1.msra.mxu0 %v29
  %73 = vmatprep.subr.mxu0 %v59
  %74 = vmatpush1.msra.mxu0 %v56
  %75 = vmatprep.subr.mxu0 0.0
  %76 = vmatpush1.msra.mxu0 0.0
  %77 = vmatprep.subr.mxu0 0.0
  %78 = vmatpush1.msra.mxu0 0.0
  %79 = vmatprep.subr.mxu0 0.0
  %80 = vmatpush1.msra.mxu0 0.0
  %81 = vmatprep.subr.mxu0 0.0
  %82 = vmatpush1.msra.mxu0 0.0
  %83 = vmatprep.subr.mxu0 0.0
  %84 = vmatpush1.msra.mxu0 0.0
  %85 = vmatprep.subr.mxu0 0.0
  %86 = vmatpush1.msra.mxu0 0.0
  %87 = vmatprep.subr.mxu0 0.0
  %88 = vmatpush1.msra.mxu0 0.0
  %89 = vmatprep.subr.mxu0 0.0
  %90 = vmatpush1.msra.mxu0 0.0
  %91 = vmatprep.subr.mxu0 0.0
  %92 = vmatpush1.msra.mxu0 0.0
  %93 = vmatprep.subr.mxu0 0.0
  %94 = vmatpush1.msra.mxu0 0.0
  %95 = vmatprep.subr.mxu0 0.0
  %96 = vmatpush1.msra.mxu0 0.0
  %97 = vmatprep.subr.mxu0 0.0
  %98 = vmatpush1.msra.mxu0 0.0
  %99 = vmatprep.subr.mxu0 0.0
  %100 = vmatpush1.msra.mxu0 0.0
  %101 = vmatprep.subr.mxu0 0.0
  %102 = vmatpush1.msra.mxu0 0.0
  %103 = vmatprep.subr.mxu0 0.0
  %104 = vmatpush1.msra.mxu0 0.0
  %105 = vmatprep.subr.mxu0 0.0
  %106 = vmatpush1.msra.mxu0 0.0
  %107 = vmatprep.subr.mxu0 0.0
  %108 = vmatpush1.msra.mxu0 0.0
  %109 = vmatprep.subr.mxu0 0.0
  %110 = vmatpush1.msra.mxu0 0.0
  %111 = vmatprep.subr.mxu0 0.0
  %112 = vmatpush1.msra.mxu0 0.0
  %113 = vmatprep.subr.mxu0 0.0
  %114 = vmatpush1.msra.mxu0 0.0
  %115 = vmatprep.subr.mxu0 0.0
  %116 = vmatpush1.msra.mxu0 0.0
  %117 = vmatprep.subr.mxu0 0.0
  %118 = vmatpush1.msra.mxu0 0.0
  %119 = vmatprep.subr.mxu0 0.0
  %120 = vmatpush1.msra.mxu0 0.0
  %121 = vmatprep.subr.mxu0 0.0
  %122 = vmatpush1.msra.mxu0 0.0
  %123 = vmatprep.subr.mxu0 0.0
  %124 = vmatpush1.msra.mxu0 0.0
  %125 = vmatprep.subr.mxu0 0.0
  %126 = vmatpush1.msra.mxu0 0.0
  %127 = vmatprep.subr.mxu0 0.0
  %128 = vmatpush1.msra.mxu0 0.0
  %129 = vmatprep.subr.mxu0 0.0
  %130 = vmatpush1.msra.mxu0 0.0
  %131 = vmatprep.mubr.f32.mxu0 0.0
  %132 = vmatmul.mubr.f32.gmra.mrb[0].mxu0 %v49
  %v133 = vpop.f32.mrb[0].mxu0
  %v134 = vadd.f32 %v40, %v133
  %v135 = vpop.f32.mrb[0].mxu0
  %v136 = vadd.f32 %v40, %v135
  %137 = vmatprep.mubr.f32.mxu0 0.0
  %138 = vmatmul.mubr.f32.gmra.mrb[0].mxu0 %v52
  %v139 = vpop.f32.mrb[0].mxu0
  %v140 = vadd.f32 %v45, %v139
  %v141 = vpop.f32.mrb[0].mxu0
  %v142 = vadd.f32 %v45, %v141
  %143 = vdwg.mxu0
  %144 = vmatprep.subr.mxu0 %v24
  %145 = vmatpush1.msra.mxu0 %v23
  %146 = vmatprep.subr.mxu0 %v28
  %147 = vmatpush1.msra.mxu0 %v27
  %148 = vmatprep.subr.mxu0 %v32
  %149 = vmatpush1.msra.mxu0 %v31
  %150 = vmatprep.subr.mxu0 %v65
  %151 = vmatpush1.msra.mxu0 %v62
  %152 = vmatprep.subr.mxu0 0.0
  %153 = vmatpush1.msra.mxu0 0.0
  %154 = vmatprep.subr.mxu0 0.0
  %155 = vmatpush1.msra.mxu0 0.0
  %156 = vmatprep.subr.mxu0 0.0
  %157 = vmatpush1.msra.mxu0 0.0
  %158 = vmatprep.subr.mxu0 0.0
  %159 = vmatpush1.msra.mxu0 0.0
  %160 = vmatprep.subr.mxu0 0.0
  %161 = vmatpush1.msra.mxu0 0.0
  %162 = vmatprep.subr.mxu0 0.0
  %163 = vmatpush1.msra.mxu0 0.0
  %164 = vmatprep.subr.mxu0 0.0
  %165 = vmatpush1.msra.mxu0 0.0
  %166 = vmatprep.subr.mxu0 0.0
  %167 = vmatpush1.msra.mxu0 0.0
  %168 = vmatprep.subr.mxu0 0.0
  %169 = vmatpush1.msra.mxu0 0.0
  %170 = vmatprep.subr.mxu0 0.0
  %171 = vmatpush1.msra.mxu0 0.0
  %172 = vmatprep.subr.mxu0 0.0
  %173 = vmatpush1.msra.mxu0 0.0
  %174 = vmatprep.subr.mxu0 0.0
  %175 = vmatpush1.msra.mxu0 0.0
  %176 = vmatprep.subr.mxu0 0.0
  %177 = vmatpush1.msra.mxu0 0.0
  %178 = vmatprep.subr.mxu0 0.0
  %179 = vmatpush1.msra.mxu0 0.0
  %180 = vmatprep.subr.mxu0 0.0
  %181 = vmatpush1.msra.mxu0 0.0
  %182 = vmatprep.subr.mxu0 0.0
  %183 = vmatpush1.msra.mxu0 0.0
  %184 = vmatprep.subr.mxu0 0.0
  %185 = vmatpush1.msra.mxu0 0.0
  %186 = vmatprep.subr.mxu0 0.0
  %187 = vmatpush1.msra.mxu0 0.0
  %188 = vmatprep.subr.mxu0 0.0
  %189 = vmatpush1.msra.mxu0 0.0
  %190 = vmatprep.subr.mxu0 0.0
  %191 = vmatpush1.msra.mxu0 0.0
  %192 = vmatprep.subr.mxu0 0.0
  %193 = vmatpush1.msra.mxu0 0.0
  %194 = vmatprep.subr.mxu0 0.0
  %195 = vmatpush1.msra.mxu0 0.0
  %196 = vmatprep.subr.mxu0 0.0
  %197 = vmatpush1.msra.mxu0 0.0
  %198 = vmatprep.subr.mxu0 0.0
  %199 = vmatpush1.msra.mxu0 0.0
  %200 = vmatprep.subr.mxu0 0.0
  %201 = vmatpush1.msra.mxu0 0.0
  %202 = vmatprep.subr.mxu0 0.0
  %203 = vmatpush1.msra.mxu0 0.0
  %204 = vmatprep.subr.mxu0 0.0
  %205 = vmatpush1.msra.mxu0 0.0
  %206 = vmatprep.subr.mxu0 0.0
  %207 = vmatpush1.msra.mxu0 0.0
  %208 = vmatprep.mubr.f32.mxu0 0.0
  %209 = vmatmul.mubr.f32.gmra.mrb[0].mxu0 %v49
  %v210 = vpop.f32.mrb[0].mxu0
  %v211 = vadd.f32 %v40, %v210
  %v212 = vpop.f32.mrb[0].mxu0
  %v213 = vadd.f32 %v40, %v212
  %214 = vmatprep.mubr.f32.mxu0 0.0
  %215 = vmatmul.mubr.f32.gmra.mrb[0].mxu0 %v52
  %v216 = vpop.f32.mrb[0].mxu0
  %v217 = vadd.f32 %v45, %v216
  %v218 = vpop.f32.mrb[0].mxu0
  %v219 = vadd.f32 %v45, %v218
  %220 = vdwg.mxu0
  %v221 = vmax.f32 %v134, 0.0
  %v222 = vmax.f32 %v136, 0.0
  %v223 = vmax.f32 %v211, 0.0
  %v224 = vmax.f32 %v213, 0.0
  %v225 = vmax.f32 %v140, 0.0
  %v226 = vmax.f32 %v142, 0.0
  %v227 = vmax.f32 %v217, 0.0
  %v228 = vmax.f32 %v219, 0.0
  %v229 = vld [vmem:[%s3] sm:$0xf]
  %v231 = vlaneseq
  %v232 = vshrl.u32 %v231, 7
  %v233 = vsub.s32 0, %v232
  %v234 = vrot.slane %v229, %v233
  %v235 = vlaneseq
  %v236 = vshrl.u32 %v235, 7
  %v237 = vsub.s32 1, %v236
  %v238 = vrot.slane %v229, %v237
  %v239 = vlaneseq
  %v240 = vshrl.u32 %v239, 7
  %v241 = vsub.s32 2, %v240
  %v242 = vrot.slane %v229, %v241
  %v243 = vlaneseq
  %v244 = vshrl.u32 %v243, 7
  %v245 = vsub.s32 3, %v244
  %v246 = vrot.slane %v229, %v245
  %v251 = vmul.f32 %v221, %v234
  %v252 = vmul.f32 %v222, %v238
  %v253 = vmul.f32 %v223, %v242
  %v254 = vmul.f32 %v224, %v246
  %v255 = vmul.f32 %v225, %v234
  %v256 = vmul.f32 %v226, %v238
  %v257 = vmul.f32 %v227, %v242
  %v258 = vmul.f32 %v228, %v246
  %s259 = scalar_lea.vmem %s2, 128
  %v260 = vld [vmem:[%s259] sm:$0xff]
  %v261 = vld [vmem:[%s259 + $0x8] sm:$0xff]
  %v262 = vld [vmem:[%s259 + $0x10] sm:$0xff]
  %v263 = vld [vmem:[%s259 + $0x18] sm:$0xff]
  %v264 = vld [vmem:[%s259 + $0x20] sm:$0xff]
  %v265 = vld [vmem:[%s259 + $0x28] sm:$0xff]
  %v266 = vld [vmem:[%s259 + $0x30] sm:$0xff]
  %v267 = vld [vmem:[%s259 + $0x38] sm:$0xff]
  %v268 = vld [vmem:[%s259 + $0x40] sm:$0xff]
  %v269 = vld [vmem:[%s259 + $0x48] sm:$0xff]
  %v270 = vld [vmem:[%s259 + $0x50] sm:$0xff]
  %v271 = vld [vmem:[%s259 + $0x58] sm:$0xff]
  %v272 = vld [vmem:[%s259 + $0x60] sm:$0x1]
  %v273 = vld [vmem:[%s259 + $0x68] sm:$0x1]
  %v274 = vld [vmem:[%s259 + $0x70] sm:$0x1]
  %v275 = vld [vmem:[%s259 + $0x78] sm:$0x1]
  %v277 = vsel %vm54, %v272, 0
  %v280 = vsel %vm54, %v273, 0
  %v283 = vsel %vm54, %v274, 0
  %v286 = vsel %vm54, %v275, 0
  %288 = vmatprep.subr.mxu0 %v261
  %289 = vmatpush1.msra.mxu0 %v260
  %290 = vmatprep.subr.mxu0 %v265
  %291 = vmatpush1.msra.mxu0 %v264
  %292 = vmatprep.subr.mxu0 %v269
  %293 = vmatpush1.msra.mxu0 %v268
  %294 = vmatprep.subr.mxu0 %v280
  %295 = vmatpush1.msra.mxu0 %v277
  %296 = vmatprep.subr.mxu0 0.0
  %297 = vmatpush1.msra.mxu0 0.0
  %298 = vmatprep.subr.mxu0 0.0
  %299 = vmatpush1.msra.mxu0 0.0
  %300 = vmatprep.subr.mxu0 0.0
  %301 = vmatpush1.msra.mxu0 0.0
  %302 = vmatprep.subr.mxu0 0.0
  %303 = vmatpush1.msra.mxu0 0.0
  %304 = vmatprep.subr.mxu0 0.0
  %305 = vmatpush1.msra.mxu0 0.0
  %306 = vmatprep.subr.mxu0 0.0
  %307 = vmatpush1.msra.mxu0 0.0
  %308 = vmatprep.subr.mxu0 0.0
  %309 = vmatpush1.msra.mxu0 0.0
  %310 = vmatprep.subr.mxu0 0.0
  %311 = vmatpush1.msra.mxu0 0.0
  %312 = vmatprep.subr.mxu0 0.0
  %313 = vmatpush1.msra.mxu0 0.0
  %314 = vmatprep.subr.mxu0 0.0
  %315 = vmatpush1.msra.mxu0 0.0
  %316 = vmatprep.subr.mxu0 0.0
  %317 = vmatpush1.msra.mxu0 0.0
  %318 = vmatprep.subr.mxu0 0.0
  %319 = vmatpush1.msra.mxu0 0.0
  %320 = vmatprep.subr.mxu0 0.0
  %321 = vmatpush1.msra.mxu0 0.0
  %322 = vmatprep.subr.mxu0 0.0
  %323 = vmatpush1.msra.mxu0 0.0
  %324 = vmatprep.subr.mxu0 0.0
  %325 = vmatpush1.msra.mxu0 0.0
  %326 = vmatprep.subr.mxu0 0.0
  %327 = vmatpush1.msra.mxu0 0.0
  %328 = vmatprep.subr.mxu0 0.0
  %329 = vmatpush1.msra.mxu0 0.0
  %330 = vmatprep.subr.mxu0 0.0
  %331 = vmatpush1.msra.mxu0 0.0
  %332 = vmatprep.subr.mxu0 0.0
  %333 = vmatpush1.msra.mxu0 0.0
  %334 = vmatprep.subr.mxu0 0.0
  %335 = vmatpush1.msra.mxu0 0.0
  %336 = vmatprep.subr.mxu0 0.0
  %337 = vmatpush1.msra.mxu0 0.0
  %338 = vmatprep.subr.mxu0 0.0
  %339 = vmatpush1.msra.mxu0 0.0
  %340 = vmatprep.subr.mxu0 0.0
  %341 = vmatpush1.msra.mxu0 0.0
  %342 = vmatprep.subr.mxu0 0.0
  %343 = vmatpush1.msra.mxu0 0.0
  %344 = vmatprep.subr.mxu0 0.0
  %345 = vmatpush1.msra.mxu0 0.0
  %346 = vmatprep.subr.mxu0 0.0
  %347 = vmatpush1.msra.mxu0 0.0
  %348 = vmatprep.subr.mxu0 0.0
  %349 = vmatpush1.msra.mxu0 0.0
  %350 = vmatprep.subr.mxu0 0.0
  %351 = vmatpush1.msra.mxu0 0.0
  %352 = vmatprep.mubr.f32.mxu0 0.0
  %353 = vmatmul.mubr.f32.gmra.mrb[0].mxu0 %v49
  %v354 = vpop.f32.mrb[0].mxu0
  %v355 = vadd.f32 %v40, %v354
  %v356 = vpop.f32.mrb[0].mxu0
  %v357 = vadd.f32 %v40, %v356
  %358 = vmatprep.mubr.f32.mxu0 0.0
  %359 = vmatmul.mubr.f32.gmra.mrb[0].mxu0 %v52
  %v360 = vpop.f32.mrb[0].mxu0
  %v361 = vadd.f32 %v45, %v360
  %v362 = vpop.f32.mrb[0].mxu0
  %v363 = vadd.f32 %v45, %v362
  %364 = vdwg.mxu0
  %365 = vmatprep.subr.mxu0 %v263
  %366 = vmatpush1.msra.mxu0 %v262
  %367 = vmatprep.subr.mxu0 %v267
  %368 = vmatpush1.msra.mxu0 %v266
  %369 = vmatprep.subr.mxu0 %v271
  %370 = vmatpush1.msra.mxu0 %v270
  %371 = vmatprep.subr.mxu0 %v286
  %372 = vmatpush1.msra.mxu0 %v283
  %373 = vmatprep.subr.mxu0 0.0
  %374 = vmatpush1.msra.mxu0 0.0
  %375 = vmatprep.subr.mxu0 0.0
  %376 = vmatpush1.msra.mxu0 0.0
  %377 = vmatprep.subr.mxu0 0.0
  %378 = vmatpush1.msra.mxu0 0.0
  %379 = vmatprep.subr.mxu0 0.0
  %380 = vmatpush1.msra.mxu0 0.0
  %381 = vmatprep.subr.mxu0 0.0
  %382 = vmatpush1.msra.mxu0 0.0
  %383 = vmatprep.subr.mxu0 0.0
  %384 = vmatpush1.msra.mxu0 0.0
  %385 = vmatprep.subr.mxu0 0.0
  %386 = vmatpush1.msra.mxu0 0.0
  %387 = vmatprep.subr.mxu0 0.0
  %388 = vmatpush1.msra.mxu0 0.0
  %389 = vmatprep.subr.mxu0 0.0
  %390 = vmatpush1.msra.mxu0 0.0
  %391 = vmatprep.subr.mxu0 0.0
  %392 = vmatpush1.msra.mxu0 0.0
  %393 = vmatprep.subr.mxu0 0.0
  %394 = vmatpush1.msra.mxu0 0.0
  %395 = vmatprep.subr.mxu0 0.0
  %396 = vmatpush1.msra.mxu0 0.0
  %397 = vmatprep.subr.mxu0 0.0
  %398 = vmatpush1.msra.mxu0 0.0
  %399 = vmatprep.subr.mxu0 0.0
  %400 = vmatpush1.msra.mxu0 0.0
  %401 = vmatprep.subr.mxu0 0.0
  %402 = vmatpush1.msra.mxu0 0.0
  %403 = vmatprep.subr.mxu0 0.0
  %404 = vmatpush1.msra.mxu0 0.0
  %405 = vmatprep.subr.mxu0 0.0
  %406 = vmatpush1.msra.mxu0 0.0
  %407 = vmatprep.subr.mxu0 0.0
  %408 = vmatpush1.msra.mxu0 0.0
  %409 = vmatprep.subr.mxu0 0.0
  %410 = vmatpush1.msra.mxu0 0.0
  %411 = vmatprep.subr.mxu0 0.0
  %412 = vmatpush1.msra.mxu0 0.0
  %413 = vmatprep.subr.mxu0 0.0
  %414 = vmatpush1.msra.mxu0 0.0
  %415 = vmatprep.subr.mxu0 0.0
  %416 = vmatpush1.msra.mxu0 0.0
  %417 = vmatprep.subr.mxu0 0.0
  %418 = vmatpush1.msra.mxu0 0.0
  %419 = vmatprep.subr.mxu0 0.0
  %420 = vmatpush1.msra.mxu0 0.0
  %421 = vmatprep.subr.mxu0 0.0
  %422 = vmatpush1.msra.mxu0 0.0
  %423 = vmatprep.subr.mxu0 0.0
  %424 = vmatpush1.msra.mxu0 0.0
  %425 = vmatprep.subr.mxu0 0.0
  %426 = vmatpush1.msra.mxu0 0.0
  %427 = vmatprep.subr.mxu0 0.0
  %428 = vmatpush1.msra.mxu0 0.0
  %429 = vmatprep.mubr.f32.mxu0 0.0
  %430 = vmatmul.mubr.f32.gmra.mrb[0].mxu0 %v49
  %v431 = vpop.f32.mrb[0].mxu0
  %v432 = vadd.f32 %v40, %v431
  %v433 = vpop.f32.mrb[0].mxu0
  %v434 = vadd.f32 %v40, %v433
  %435 = vmatprep.mubr.f32.mxu0 0.0
  %436 = vmatmul.mubr.f32.gmra.mrb[0].mxu0 %v52
  %v437 = vpop.f32.mrb[0].mxu0
  %v438 = vadd.f32 %v45, %v437
  %v439 = vpop.f32.mrb[0].mxu0
  %v440 = vadd.f32 %v45, %v439
  %441 = vdwg.mxu0
  %v442 = vmax.f32 %v355, 0.0
  %v443 = vmax.f32 %v357, 0.0
  %v444 = vmax.f32 %v432, 0.0
  %v445 = vmax.f32 %v434, 0.0
  %v446 = vmax.f32 %v361, 0.0
  %v447 = vmax.f32 %v363, 0.0
  %v448 = vmax.f32 %v438, 0.0
  %v449 = vmax.f32 %v440, 0.0
  %s450 = scalar_lea.vmem %s3, 4
  %v451 = vld [vmem:[%s450] sm:$0xf]
  %v453 = vlaneseq
  %v454 = vshrl.u32 %v453, 7
  %v455 = vsub.s32 0, %v454
  %v456 = vrot.slane %v451, %v455
  %v457 = vlaneseq
  %v458 = vshrl.u32 %v457, 7
  %v459 = vsub.s32 1, %v458
  %v460 = vrot.slane %v451, %v459
  %v461 = vlaneseq
  %v462 = vshrl.u32 %v461, 7
  %v463 = vsub.s32 2, %v462
  %v464 = vrot.slane %v451, %v463
  %v465 = vlaneseq
  %v466 = vshrl.u32 %v465, 7
  %v467 = vsub.s32 3, %v466
  %v468 = vrot.slane %v451, %v467
  %v473 = vmul.f32 %v442, %v456
  %v474 = vmul.f32 %v443, %v460
  %v475 = vmul.f32 %v444, %v464
  %v476 = vmul.f32 %v445, %v468
  %v477 = vmul.f32 %v446, %v456
  %v478 = vmul.f32 %v447, %v460
  %v479 = vmul.f32 %v448, %v464
  %v480 = vmul.f32 %v449, %v468
  %v481 = vmax.f32 %v251, %v473
  %v482 = vmax.f32 %v252, %v474
  %v483 = vmax.f32 %v253, %v475
  %v484 = vmax.f32 %v254, %v476
  %v485 = vmax.f32 %v255, %v477
  %v486 = vmax.f32 %v256, %v478
  %v487 = vmax.f32 %v257, %v479
  %v488 = vmax.f32 %v258, %v480
  %s489 = scalar_lea.vmem %s2, 256
  %v490 = vld [vmem:[%s489] sm:$0xff]
  %v491 = vld [vmem:[%s489 + $0x8] sm:$0xff]
  %v492 = vld [vmem:[%s489 + $0x10] sm:$0xff]
  %v493 = vld [vmem:[%s489 + $0x18] sm:$0xff]
  %v494 = vld [vmem:[%s489 + $0x20] sm:$0xff]
  %v495 = vld [vmem:[%s489 + $0x28] sm:$0xff]
  %v496 = vld [vmem:[%s489 + $0x30] sm:$0xff]
  %v497 = vld [vmem:[%s489 + $0x38] sm:$0xff]
  %v498 = vld [vmem:[%s489 + $0x40] sm:$0xff]
  %v499 = vld [vmem:[%s489 + $0x48] sm:$0xff]
  %v500 = vld [vmem:[%s489 + $0x50] sm:$0xff]
  %v501 = vld [vmem:[%s489 + $0x58] sm:$0xff]
  %v502 = vld [vmem:[%s489 + $0x60] sm:$0x1]
  %v503 = vld [vmem:[%s489 + $0x68] sm:$0x1]
  %v504 = vld [vmem:[%s489 + $0x70] sm:$0x1]
  %v505 = vld [vmem:[%s489 + $0x78] sm:$0x1]
  %v507 = vsel %vm54, %v502, 0
  %v510 = vsel %vm54, %v503, 0
  %v513 = vsel %vm54, %v504, 0
  %v516 = vsel %vm54, %v505, 0
  %518 = vmatprep.subr.mxu0 %v491
  %519 = vmatpush1.msra.mxu0 %v490
  %520 = vmatprep.subr.mxu0 %v495
  %521 = vmatpush1.msra.mxu0 %v494
  %522 = vmatprep.subr.mxu0 %v499
  %523 = vmatpush1.msra.mxu0 %v498
  %524 = vmatprep.subr.mxu0 %v510
  %525 = vmatpush1.msra.mxu0 %v507
  %526 = vmatprep.subr.mxu0 0.0
  %527 = vmatpush1.msra.mxu0 0.0
  %528 = vmatprep.subr.mxu0 0.0
  %529 = vmatpush1.msra.mxu0 0.0
  %530 = vmatprep.subr.mxu0 0.0
  %531 = vmatpush1.msra.mxu0 0.0
  %532 = vmatprep.subr.mxu0 0.0
  %533 = vmatpush1.msra.mxu0 0.0
  %534 = vmatprep.subr.mxu0 0.0
  %535 = vmatpush1.msra.mxu0 0.0
  %536 = vmatprep.subr.mxu0 0.0
  %537 = vmatpush1.msra.mxu0 0.0
  %538 = vmatprep.subr.mxu0 0.0
  %539 = vmatpush1.msra.mxu0 0.0
  %540 = vmatprep.subr.mxu0 0.0
  %541 = vmatpush1.msra.mxu0 0.0
  %542 = vmatprep.subr.mxu0 0.0
  %543 = vmatpush1.msra.mxu0 0.0
  %544 = vmatprep.subr.mxu0 0.0
  %545 = vmatpush1.msra.mxu0 0.0
  %546 = vmatprep.subr.mxu0 0.0
  %547 = vmatpush1.msra.mxu0 0.0
  %548 = vmatprep.subr.mxu0 0.0
  %549 = vmatpush1.msra.mxu0 0.0
  %550 = vmatprep.subr.mxu0 0.0
  %551 = vmatpush1.msra.mxu0 0.0
  %552 = vmatprep.subr.mxu0 0.0
  %553 = vmatpush1.msra.mxu0 0.0
  %554 = vmatprep.subr.mxu0 0.0
  %555 = vmatpush1.msra.mxu0 0.0
  %556 = vmatprep.subr.mxu0 0.0
  %557 = vmatpush1.msra.mxu0 0.0
  %558 = vmatprep.subr.mxu0 0.0
  %559 = vmatpush1.msra.mxu0 0.0
  %560 = vmatprep.subr.mxu0 0.0
  %561 = vmatpush1.msra.mxu0 0.0
  %562 = vmatprep.subr.mxu0 0.0
  %563 = vmatpush1.msra.mxu0 0.0
  %564 = vmatprep.subr.mxu0 0.0
  %565 = vmatpush1.msra.mxu0 0.0
  %566 = vmatprep.subr.mxu0 0.0
  %567 = vmatpush1.msra.mxu0 0.0
  %568 = vmatprep.subr.mxu0 0.0
  %569 = vmatpush1.msra.mxu0 0.0
  %570 = vmatprep.subr.mxu0 0.0
  %571 = vmatpush1.msra.mxu0 0.0
  %572 = vmatprep.subr.mxu0 0.0
  %573 = vmatpush1.msra.mxu0 0.0
  %574 = vmatprep.subr.mxu0 0.0
  %575 = vmatpush1.msra.mxu0 0.0
  %576 = vmatprep.subr.mxu0 0.0
  %577 = vmatpush1.msra.mxu0 0.0
  %578 = vmatprep.subr.mxu0 0.0
  %579 = vmatpush1.msra.mxu0 0.0
  %580 = vmatprep.subr.mxu0 0.0
  %581 = vmatpush1.msra.mxu0 0.0
  %582 = vmatprep.mubr.f32.mxu0 0.0
  %583 = vmatmul.mubr.f32.gmra.mrb[0].mxu0 %v49
  %v584 = vpop.f32.mrb[0].mxu0
  %v585 = vadd.f32 %v40, %v584
  %v586 = vpop.f32.mrb[0].mxu0
  %v587 = vadd.f32 %v40, %v586
  %588 = vmatprep.mubr.f32.mxu0 0.0
  %589 = vmatmul.mubr.f32.gmra.mrb[0].mxu0 %v52
  %v590 = vpop.f32.mrb[0].mxu0
  %v591 = vadd.f32 %v45, %v590
  %v592 = vpop.f32.mrb[0].mxu0
  %v593 = vadd.f32 %v45, %v592
  %594 = vdwg.mxu0
  %595 = vmatprep.subr.mxu0 %v493
  %596 = vmatpush1.msra.mxu0 %v492
  %597 = vmatprep.subr.mxu0 %v497
  %598 = vmatpush1.msra.mxu0 %v496
  %599 = vmatprep.subr.mxu0 %v501
  %600 = vmatpush1.msra.mxu0 %v500
  %601 = vmatprep.subr.mxu0 %v516
  %602 = vmatpush1.msra.mxu0 %v513
  %603 = vmatprep.subr.mxu0 0.0
  %604 = vmatpush1.msra.mxu0 0.0
  %605 = vmatprep.subr.mxu0 0.0
  %606 = vmatpush1.msra.mxu0 0.0
  %607 = vmatprep.subr.mxu0 0.0
  %608 = vmatpush1.msra.mxu0 0.0
  %609 = vmatprep.subr.mxu0 0.0
  %610 = vmatpush1.msra.mxu0 0.0
  %611 = vmatprep.subr.mxu0 0.0
  %612 = vmatpush1.msra.mxu0 0.0
  %613 = vmatprep.subr.mxu0 0.0
  %614 = vmatpush1.msra.mxu0 0.0
  %615 = vmatprep.subr.mxu0 0.0
  %616 = vmatpush1.msra.mxu0 0.0
  %617 = vmatprep.subr.mxu0 0.0
  %618 = vmatpush1.msra.mxu0 0.0
  %619 = vmatprep.subr.mxu0 0.0
  %620 = vmatpush1.msra.mxu0 0.0
  %621 = vmatprep.subr.mxu0 0.0
  %622 = vmatpush1.msra.mxu0 0.0
  %623 = vmatprep.subr.mxu0 0.0
  %624 = vmatpush1.msra.mxu0 0.0
  %625 = vmatprep.subr.mxu0 0.0
  %626 = vmatpush1.msra.mxu0 0.0
  %627 = vmatprep.subr.mxu0 0.0
  %628 = vmatpush1.msra.mxu0 0.0
  %629 = vmatprep.subr.mxu0 0.0
  %630 = vmatpush1.msra.mxu0 0.0
  %631 = vmatprep.subr.mxu0 0.0
  %632 = vmatpush1.msra.mxu0 0.0
  %633 = vmatprep.subr.mxu0 0.0
  %634 = vmatpush1.msra.mxu0 0.0
  %635 = vmatprep.subr.mxu0 0.0
  %636 = vmatpush1.msra.mxu0 0.0
  %637 = vmatprep.subr.mxu0 0.0
  %638 = vmatpush1.msra.mxu0 0.0
  %639 = vmatprep.subr.mxu0 0.0
  %640 = vmatpush1.msra.mxu0 0.0
  %641 = vmatprep.subr.mxu0 0.0
  %642 = vmatpush1.msra.mxu0 0.0
  %643 = vmatprep.subr.mxu0 0.0
  %644 = vmatpush1.msra.mxu0 0.0
  %645 = vmatprep.subr.mxu0 0.0
  %646 = vmatpush1.msra.mxu0 0.0
  %647 = vmatprep.subr.mxu0 0.0
  %648 = vmatpush1.msra.mxu0 0.0
  %649 = vmatprep.subr.mxu0 0.0
  %650 = vmatpush1.msra.mxu0 0.0
  %651 = vmatprep.subr.mxu0 0.0
  %652 = vmatpush1.msra.mxu0 0.0
  %653 = vmatprep.subr.mxu0 0.0
  %654 = vmatpush1.msra.mxu0 0.0
  %655 = vmatprep.subr.mxu0 0.0
  %656 = vmatpush1.msra.mxu0 0.0
  %657 = vmatprep.subr.mxu0 0.0
  %658 = vmatpush1.msra.mxu0 0.0
  %659 = vmatprep.mubr.f32.mxu0 0.0
  %660 = vmatmul.mubr.f32.gmra.mrb[0].mxu0 %v49
  %v661 = vpop.f32.mrb[0].mxu0
  %v662 = vadd.f32 %v40, %v661
  %v663 = vpop.f32.mrb[0].mxu0
  %v664 = vadd.f32 %v40, %v663
  %665 = vmatprep.mubr.f32.mxu0 0.0
  %666 = vmatmul.mubr.f32.gmra.mrb[0].mxu0 %v52
  %v667 = vpop.f32.mrb[0].mxu0
  %v668 = vadd.f32 %v45, %v667
  %v669 = vpop.f32.mrb[0].mxu0
  %v670 = vadd.f32 %v45, %v669
  %671 = vdwg.mxu0
  %v672 = vmax.f32 %v585, 0.0
  %v673 = vmax.f32 %v587, 0.0
  %v674 = vmax.f32 %v662, 0.0
  %v675 = vmax.f32 %v664, 0.0
  %v676 = vmax.f32 %v591, 0.0
  %v677 = vmax.f32 %v593, 0.0
  %v678 = vmax.f32 %v668, 0.0
  %v679 = vmax.f32 %v670, 0.0
  %s680 = scalar_lea.vmem %s3, 8
  %v681 = vld [vmem:[%s680] sm:$0xf]
  %v683 = vlaneseq
  %v684 = vshrl.u32 %v683, 7
  %v685 = vsub.s32 0, %v684
  %v686 = vrot.slane %v681, %v685
  %v687 = vlaneseq
  %v688 = vshrl.u32 %v687, 7
  %v689 = vsub.s32 1, %v688
  %v690 = vrot.slane %v681, %v689
  %v691 = vlaneseq
  %v692 = vshrl.u32 %v691, 7
  %v693 = vsub.s32 2, %v692
  %v694 = vrot.slane %v681, %v693
  %v695 = vlaneseq
  %v696 = vshrl.u32 %v695, 7
  %v697 = vsub.s32 3, %v696
  %v698 = vrot.slane %v681, %v697
  %v703 = vmul.f32 %v672, %v686
  %v704 = vmul.f32 %v673, %v690
  %v705 = vmul.f32 %v674, %v694
  %v706 = vmul.f32 %v675, %v698
  %v707 = vmul.f32 %v676, %v686
  %v708 = vmul.f32 %v677, %v690
  %v709 = vmul.f32 %v678, %v694
  %v710 = vmul.f32 %v679, %v698
  %v711 = vmax.f32 %v481, %v703
  %v712 = vmax.f32 %v482, %v704
  %v713 = vmax.f32 %v483, %v705
  %v714 = vmax.f32 %v484, %v706
  %v715 = vmax.f32 %v485, %v707
  %v716 = vmax.f32 %v486, %v708
  %v717 = vmax.f32 %v487, %v709
  %v718 = vmax.f32 %v488, %v710
  %s719 = scalar_lea.vmem %s2, 384
  %v720 = vld [vmem:[%s719] sm:$0xff]
  %v721 = vld [vmem:[%s719 + $0x8] sm:$0xff]
  %v722 = vld [vmem:[%s719 + $0x10] sm:$0xff]
  %v723 = vld [vmem:[%s719 + $0x18] sm:$0xff]
  %v724 = vld [vmem:[%s719 + $0x20] sm:$0xff]
  %v725 = vld [vmem:[%s719 + $0x28] sm:$0xff]
  %v726 = vld [vmem:[%s719 + $0x30] sm:$0xff]
  %v727 = vld [vmem:[%s719 + $0x38] sm:$0xff]
  %v728 = vld [vmem:[%s719 + $0x40] sm:$0xff]
  %v729 = vld [vmem:[%s719 + $0x48] sm:$0xff]
  %v730 = vld [vmem:[%s719 + $0x50] sm:$0xff]
  %v731 = vld [vmem:[%s719 + $0x58] sm:$0xff]
  %v732 = vld [vmem:[%s719 + $0x60] sm:$0x1]
  %v733 = vld [vmem:[%s719 + $0x68] sm:$0x1]
  %v734 = vld [vmem:[%s719 + $0x70] sm:$0x1]
  %v735 = vld [vmem:[%s719 + $0x78] sm:$0x1]
  %v737 = vsel %vm54, %v732, 0
  %v740 = vsel %vm54, %v733, 0
  %v743 = vsel %vm54, %v734, 0
  %v746 = vsel %vm54, %v735, 0
  %748 = vmatprep.subr.mxu0 %v721
  %749 = vmatpush1.msra.mxu0 %v720
  %750 = vmatprep.subr.mxu0 %v725
  %751 = vmatpush1.msra.mxu0 %v724
  %752 = vmatprep.subr.mxu0 %v729
  %753 = vmatpush1.msra.mxu0 %v728
  %754 = vmatprep.subr.mxu0 %v740
  %755 = vmatpush1.msra.mxu0 %v737
  %756 = vmatprep.subr.mxu0 0.0
  %757 = vmatpush1.msra.mxu0 0.0
  %758 = vmatprep.subr.mxu0 0.0
  %759 = vmatpush1.msra.mxu0 0.0
  %760 = vmatprep.subr.mxu0 0.0
  %761 = vmatpush1.msra.mxu0 0.0
  %762 = vmatprep.subr.mxu0 0.0
  %763 = vmatpush1.msra.mxu0 0.0
  %764 = vmatprep.subr.mxu0 0.0
  %765 = vmatpush1.msra.mxu0 0.0
  %766 = vmatprep.subr.mxu0 0.0
  %767 = vmatpush1.msra.mxu0 0.0
  %768 = vmatprep.subr.mxu0 0.0
  %769 = vmatpush1.msra.mxu0 0.0
  %770 = vmatprep.subr.mxu0 0.0
  %771 = vmatpush1.msra.mxu0 0.0
  %772 = vmatprep.subr.mxu0 0.0
  %773 = vmatpush1.msra.mxu0 0.0
  %774 = vmatprep.subr.mxu0 0.0
  %775 = vmatpush1.msra.mxu0 0.0
  %776 = vmatprep.subr.mxu0 0.0
  %777 = vmatpush1.msra.mxu0 0.0
  %778 = vmatprep.subr.mxu0 0.0
  %779 = vmatpush1.msra.mxu0 0.0
  %780 = vmatprep.subr.mxu0 0.0
  %781 = vmatpush1.msra.mxu0 0.0
  %782 = vmatprep.subr.mxu0 0.0
  %783 = vmatpush1.msra.mxu0 0.0
  %784 = vmatprep.subr.mxu0 0.0
  %785 = vmatpush1.msra.mxu0 0.0
  %786 = vmatprep.subr.mxu0 0.0
  %787 = vmatpush1.msra.mxu0 0.0
  %788 = vmatprep.subr.mxu0 0.0
  %789 = vmatpush1.msra.mxu0 0.0
  %790 = vmatprep.subr.mxu0 0.0
  %791 = vmatpush1.msra.mxu0 0.0
  %792 = vmatprep.subr.mxu0 0.0
  %793 = vmatpush1.msra.mxu0 0.0
  %794 = vmatprep.subr.mxu0 0.0
  %795 = vmatpush1.msra.mxu0 0.0
  %796 = vmatprep.subr.mxu0 0.0
  %797 = vmatpush1.msra.mxu0 0.0
  %798 = vmatprep.subr.mxu0 0.0
  %799 = vmatpush1.msra.mxu0 0.0
  %800 = vmatprep.subr.mxu0 0.0
  %801 = vmatpush1.msra.mxu0 0.0
  %802 = vmatprep.subr.mxu0 0.0
  %803 = vmatpush1.msra.mxu0 0.0
  %804 = vmatprep.subr.mxu0 0.0
  %805 = vmatpush1.msra.mxu0 0.0
  %806 = vmatprep.subr.mxu0 0.0
  %807 = vmatpush1.msra.mxu0 0.0
  %808 = vmatprep.subr.mxu0 0.0
  %809 = vmatpush1.msra.mxu0 0.0
  %810 = vmatprep.subr.mxu0 0.0
  %811 = vmatpush1.msra.mxu0 0.0
  %812 = vmatprep.mubr.f32.mxu0 0.0
  %813 = vmatmul.mubr.f32.gmra.mrb[0].mxu0 %v49
  %v814 = vpop.f32.mrb[0].mxu0
  %v815 = vadd.f32 %v40, %v814
  %v816 = vpop.f32.mrb[0].mxu0
  %v817 = vadd.f32 %v40, %v816
  %818 = vmatprep.mubr.f32.mxu0 0.0
  %819 = vmatmul.mubr.f32.gmra.mrb[0].mxu0 %v52
  %v820 = vpop.f32.mrb[0].mxu0
  %v821 = vadd.f32 %v45, %v820
  %v822 = vpop.f32.mrb[0].mxu0
  %v823 = vadd.f32 %v45, %v822
  %824 = vdwg.mxu0
  %825 = vmatprep.subr.mxu0 %v723
  %826 = vmatpush1.msra.mxu0 %v722
  %827 = vmatprep.subr.mxu0 %v727
  %828 = vmatpush1.msra.mxu0 %v726
  %829 = vmatprep.subr.mxu0 %v731
  %830 = vmatpush1.msra.mxu0 %v730
  %831 = vmatprep.subr.mxu0 %v746
  %832 = vmatpush1.msra.mxu0 %v743
  %833 = vmatprep.subr.mxu0 0.0
  %834 = vmatpush1.msra.mxu0 0.0
  %835 = vmatprep.subr.mxu0 0.0
  %836 = vmatpush1.msra.mxu0 0.0
  %837 = vmatprep.subr.mxu0 0.0
  %838 = vmatpush1.msra.mxu0 0.0
  %839 = vmatprep.subr.mxu0 0.0
  %840 = vmatpush1.msra.mxu0 0.0
  %841 = vmatprep.subr.mxu0 0.0
  %842 = vmatpush1.msra.mxu0 0.0
  %843 = vmatprep.subr.mxu0 0.0
  %844 = vmatpush1.msra.mxu0 0.0
  %845 = vmatprep.subr.mxu0 0.0
  %846 = vmatpush1.msra.mxu0 0.0
  %847 = vmatprep.subr.mxu0 0.0
  %848 = vmatpush1.msra.mxu0 0.0
  %849 = vmatprep.subr.mxu0 0.0
  %850 = vmatpush1.msra.mxu0 0.0
  %851 = vmatprep.subr.mxu0 0.0
  %852 = vmatpush1.msra.mxu0 0.0
  %853 = vmatprep.subr.mxu0 0.0
  %854 = vmatpush1.msra.mxu0 0.0
  %855 = vmatprep.subr.mxu0 0.0
  %856 = vmatpush1.msra.mxu0 0.0
  %857 = vmatprep.subr.mxu0 0.0
  %858 = vmatpush1.msra.mxu0 0.0
  %859 = vmatprep.subr.mxu0 0.0
  %860 = vmatpush1.msra.mxu0 0.0
  %861 = vmatprep.subr.mxu0 0.0
  %862 = vmatpush1.msra.mxu0 0.0
  %863 = vmatprep.subr.mxu0 0.0
  %864 = vmatpush1.msra.mxu0 0.0
  %865 = vmatprep.subr.mxu0 0.0
  %866 = vmatpush1.msra.mxu0 0.0
  %867 = vmatprep.subr.mxu0 0.0
  %868 = vmatpush1.msra.mxu0 0.0
  %869 = vmatprep.subr.mxu0 0.0
  %870 = vmatpush1.msra.mxu0 0.0
  %871 = vmatprep.subr.mxu0 0.0
  %872 = vmatpush1.msra.mxu0 0.0
  %873 = vmatprep.subr.mxu0 0.0
  %874 = vmatpush1.msra.mxu0 0.0
  %875 = vmatprep.subr.mxu0 0.0
  %876 = vmatpush1.msra.mxu0 0.0
  %877 = vmatprep.subr.mxu0 0.0
  %878 = vmatpush1.msra.mxu0 0.0
  %879 = vmatprep.subr.mxu0 0.0
  %880 = vmatpush1.msra.mxu0 0.0
  %881 = vmatprep.subr.mxu0 0.0
  %882 = vmatpush1.msra.mxu0 0.0
  %883 = vmatprep.subr.mxu0 0.0
  %884 = vmatpush1.msra.mxu0 0.0
  %885 = vmatprep.subr.mxu0 0.0
  %886 = vmatpush1.msra.mxu0 0.0
  %887 = vmatprep.subr.mxu0 0.0
  %888 = vmatpush1.msra.mxu0 0.0
  %889 = vmatprep.mubr.f32.mxu0 0.0
  %890 = vmatmul.mubr.f32.gmra.mrb[0].mxu0 %v49
  %v891 = vpop.f32.mrb[0].mxu0
  %v892 = vadd.f32 %v40, %v891
  %v893 = vpop.f32.mrb[0].mxu0
  %v894 = vadd.f32 %v40, %v893
  %895 = vmatprep.mubr.f32.mxu0 0.0
  %896 = vmatmul.mubr.f32.gmra.mrb[0].mxu0 %v52
  %v897 = vpop.f32.mrb[0].mxu0
  %v898 = vadd.f32 %v45, %v897
  %v899 = vpop.f32.mrb[0].mxu0
  %v900 = vadd.f32 %v45, %v899
  %901 = vdwg.mxu0
  %v902 = vmax.f32 %v815, 0.0
  %v903 = vmax.f32 %v817, 0.0
  %v904 = vmax.f32 %v892, 0.0
  %v905 = vmax.f32 %v894, 0.0
  %v906 = vmax.f32 %v821, 0.0
  %v907 = vmax.f32 %v823, 0.0
  %v908 = vmax.f32 %v898, 0.0
  %v909 = vmax.f32 %v900, 0.0
  %s910 = scalar_lea.vmem %s3, 12
  %v911 = vld [vmem:[%s910] sm:$0xf]
  %v913 = vlaneseq
  %v914 = vshrl.u32 %v913, 7
  %v915 = vsub.s32 0, %v914
  %v916 = vrot.slane %v911, %v915
  %v917 = vlaneseq
  %v918 = vshrl.u32 %v917, 7
  %v919 = vsub.s32 1, %v918
  %v920 = vrot.slane %v911, %v919
  %v921 = vlaneseq
  %v922 = vshrl.u32 %v921, 7
  %v923 = vsub.s32 2, %v922
  %v924 = vrot.slane %v911, %v923
  %v925 = vlaneseq
  %v926 = vshrl.u32 %v925, 7
  %v927 = vsub.s32 3, %v926
  %v928 = vrot.slane %v911, %v927
  %v933 = vmul.f32 %v902, %v916
  %v934 = vmul.f32 %v903, %v920
  %v935 = vmul.f32 %v904, %v924
  %v936 = vmul.f32 %v905, %v928
  %v937 = vmul.f32 %v906, %v916
  %v938 = vmul.f32 %v907, %v920
  %v939 = vmul.f32 %v908, %v924
  %v940 = vmul.f32 %v909, %v928
  %v941 = vmax.f32 %v711, %v933
  %v942 = vmax.f32 %v712, %v934
  %v943 = vmax.f32 %v713, %v935
  %v944 = vmax.f32 %v714, %v936
  %v945 = vmax.f32 %v715, %v937
  %v946 = vmax.f32 %v716, %v938
  %v947 = vmax.f32 %v717, %v939
  %v948 = vmax.f32 %v718, %v940
  %949 = vst [vmem:[%s4] sm:$0xff] %v941
  %950 = vst [vmem:[%s4 + $0x8] sm:$0xff] %v942
  %951 = vst [vmem:[%s4 + $0x10] sm:$0xff] %v943
  %vm952 = vcmask 64512
  %953 = vst.msk [vmem:[%s4 + $0x18] sm:$0xff] %vm952, %v944
  %954 = vst [vmem:[%s4 + $0x20] sm:$0x3] %v945
  %955 = vst [vmem:[%s4 + $0x28] sm:$0x3] %v946
  %956 = vst [vmem:[%s4 + $0x30] sm:$0x3] %v947
  %vm957 = vcmask 58368
  %958 = vst.msk [vmem:[%s4 + $0x38] sm:$0x3] %vm957, %v948
  // Predicated region
  $region18: #{cnn_forward.4} parent=0 // pred_check
    _
  $region19: #{cnn_forward.4} parent=0 // pred_check_branch
    %960 = sbr.rel (0) target = $region21
  $region20: #{cnn_forward.4} parent=0 // pred_region
    _
  $region21: #{cnn_forward.4} parent=0 // pred_fallthru
    _
  // Predicated region
  $region22: #{cnn_forward.4} parent=0 // pred_check
    _
  $region23: #{cnn_forward.4} parent=0 // pred_check_branch
    %962 = sbr.rel (0) target = $region25
  $region24: #{cnn_forward.4} parent=0 // pred_region
    _
  $region25: #{cnn_forward.4} parent=0 // pred_fallthru
    _

// kernel: cnn_forward.5
$region0: #{cnn_forward.5}
  #allocation0 [shape = 'u32[]', space=smem, size = 0x4, offset = 0x4, fixed_abs, tag = 'smem constant byte address 0x4 - core index']
  #allocation1 [shape = 'u32[144,128]{1,0:T(1,128)}', space=vmem, size = 0x12000, scoped, tag = 'internal scratch']
  %s0 = inlined_call_operand.vmem [shape: f32[20,250], index: 0, kind: input, shape index: {}]
  %s1 = inlined_call_operand.vmem [shape: f32[20,1], index: 1, kind: input, shape index: {}]
  %s2 = inlined_call_operand.vmem [shape: f32[4,250,98], index: 2, kind: input, shape index: {}]
  %s3 = inlined_call_operand.vmem [shape: f32[4,1,98], index: 3, kind: input, shape index: {}]
  %s4 = inlined_call_operand.vmem [shape: f32[20,98], index: 4, kind: output, shape index: {}]
  %s5 = sld [smem:[#allocation0]]
  $region26: #{cnn_forward.5} parent=0
    _
  %s7 = ssub.s32 1, %s5
  %s8 = scalar_select 0, %s7, %s5
  // Predicated region
  $region2: #{cnn_forward.5} parent=0 // pred_check
    _
  $region3: #{cnn_forward.5} parent=0 // pred_check_branch
    %10 = sbr.rel (0) target = $region5
  $region4: #{cnn_forward.5} parent=0 // pred_region
    _
  $region5: #{cnn_forward.5} parent=0 // pred_fallthru
    _
  // Predicated region
  $region6: #{cnn_forward.5} parent=0 // pred_check
    _
  $region7: #{cnn_forward.5} parent=0 // pred_check_branch
    %12 = sbr.rel (0) target = $region9
  $region8: #{cnn_forward.5} parent=0 // pred_region
    _
  $region9: #{cnn_forward.5} parent=0 // pred_fallthru
    _
  // Predicated region
  $region10: #{cnn_forward.5} parent=0 // pred_check
    _
  $region11: #{cnn_forward.5} parent=0 // pred_check_branch
    %14 = sbr.rel (0) target = $region13
  $region12: #{cnn_forward.5} parent=0 // pred_region
    _
  $region13: #{cnn_forward.5} parent=0 // pred_fallthru
    _
  // Predicated region
  $region14: #{cnn_forward.5} parent=0 // pred_check
    _
  $region15: #{cnn_forward.5} parent=0 // pred_check_branch
    %16 = sbr.rel (0) target = $region17
  $region16: #{cnn_forward.5} parent=0 // pred_region
    _
  $region17: #{cnn_forward.5} parent=0 // pred_fallthru
    _
  %v17 = vld [vmem:[%s0] sm:$0xff]
  %v18 = vld [vmem:[%s0 + $0x8] sm:$0xff]
  %v19 = vld [vmem:[%s0 + $0x10] sm:$0xff]
  %v20 = vld [vmem:[%s0 + $0x18] sm:$0xff]
  %v21 = vld [vmem:[%s0 + $0x20] sm:$0xf]
  %v22 = vld [vmem:[%s0 + $0x28] sm:$0xf]
  %v23 = vld [vmem:[%s1] sm:$0xff]
  %v24 = vld [vmem:[%s1 + $0x8] sm:$0xff]
  %v25 = vld [vmem:[%s1 + $0x10] sm:$0xf]
  %v26 = vld [vmem:[%s2] sm:$0xff]
  %v27 = vld [vmem:[%s2 + $0x8] sm:$0xff]
  %v28 = vld [vmem:[%s2 + $0x10] sm:$0xff]
  %v29 = vld [vmem:[%s2 + $0x18] sm:$0xff]
  %v30 = vld [vmem:[%s2 + $0x20] sm:$0xff]
  %v31 = vld [vmem:[%s2 + $0x28] sm:$0xff]
  %v32 = vld [vmem:[%s2 + $0x30] sm:$0xff]
  %v33 = vld [vmem:[%s2 + $0x38] sm:$0xff]
  %v34 = vld [vmem:[%s2 + $0x40] sm:$0xff]
  %v35 = vld [vmem:[%s2 + $0x48] sm:$0xff]
  %v36 = vld [vmem:[%s2 + $0x50] sm:$0xff]
  %v37 = vld [vmem:[%s2 + $0x58] sm:$0xff]
  %v38 = vld [vmem:[%s2 + $0x60] sm:$0xff]
  %v39 = vld [vmem:[%s2 + $0x68] sm:$0xff]
  %v40 = vld [vmem:[%s2 + $0x70] sm:$0xff]
  %v41 = vld [vmem:[%s2 + $0x78] sm:$0xff]
  %v42 = vld [vmem:[%s2 + $0x80] sm:$0xff]
  %v43 = vld [vmem:[%s2 + $0x88] sm:$0xff]
  %v44 = vld [vmem:[%s2 + $0x90] sm:$0xff]
  %v45 = vld [vmem:[%s2 + $0x98] sm:$0xff]
  %v46 = vld [vmem:[%s2 + $0xa0] sm:$0xff]
  %v47 = vld [vmem:[%s2 + $0xa8] sm:$0xff]
  %v48 = vld [vmem:[%s2 + $0xb0] sm:$0xff]
  %v49 = vld [vmem:[%s2 + $0xb8] sm:$0xff]
  %v50 = vld [vmem:[%s2 + $0xc0] sm:$0xff]
  %v51 = vld [vmem:[%s2 + $0xc8] sm:$0xff]
  %v52 = vld [vmem:[%s2 + $0xd0] sm:$0xff]
  %v53 = vld [vmem:[%s2 + $0xd8] sm:$0xff]
  %v54 = vld [vmem:[%s2 + $0xe0] sm:$0xff]
  %v55 = vld [vmem:[%s2 + $0xe8] sm:$0xff]
  %v56 = vld [vmem:[%s2 + $0xf0] sm:$0xff]
  %v57 = vld [vmem:[%s2 + $0xf8] sm:$0x3]
  %59 = vset.pattern.permute.xlu0 0
  %60 = vperm.xlu0 %59, %v23
  %v61 = vpop.permute.xlu0 %60
  %64 = vset.pattern.permute.xlu0 0
  %65 = vperm.xlu0 %64, %v24
  %v66 = vpop.permute.xlu0 %65
  %69 = vset.pattern.permute.xlu0 0
  %70 = vperm.xlu0 %69, %v25
  %v71 = vpop.permute.xlu0 %70
  %vm73 = vcmask 998400
  %v75 = vsel %vm73, %v18, 0
  %v78 = vsel %vm73, %v20, 0
  %v81 = vsel %vm73, %v22, 0
  %vm83 = vcmask 1041408
  %v85 = vsel %vm83, %v57, 0
  %87 = vmatprep.subr.mxu0 0.0
  %88 = vmatpush1.msra.mxu0 %v26
  %89 = vmatprep.subr.mxu0 0.0
  %90 = vmatpush1.msra.mxu0 %v27
  %91 = vmatprep.subr.mxu0 0.0
  %92 = vmatpush1.msra.mxu0 %v28
  %93 = vmatprep.subr.mxu0 0.0
  %94 = vmatpush1.msra.mxu0 %v29
  %95 = vmatprep.subr.mxu0 0.0
  %96 = vmatpush1.msra.mxu0 %v30
  %97 = vmatprep.subr.mxu0 0.0
  %98 = vmatpush1.msra.mxu0 %v31
  %99 = vmatprep.subr.mxu0 0.0
  %100 = vmatpush1.msra.mxu0 %v32
  %101 = vmatprep.subr.mxu0 0.0
  %102 = vmatpush1.msra.mxu0 %v33
  %103 = vmatprep.subr.mxu0 0.0
  %104 = vmatpush1.msra.mxu0 %v34
  %105 = vmatprep.subr.mxu0 0.0
  %106 = vmatpush1.msra.mxu0 %v35
  %107 = vmatprep.subr.mxu0 0.0
  %108 = vmatpush1.msra.mxu0 %v36
  %109 = vmatprep.subr.mxu0 0.0
  %110 = vmatpush1.msra.mxu0 %v37
  %111 = vmatprep.subr.mxu0 0.0
  %112 = vmatpush1.msra.mxu0 %v38
  %113 = vmatprep.subr.mxu0 0.0
  %114 = vmatpush1.msra.mxu0 %v39
  %115 = vmatprep.subr.mxu0 0.0
  %116 = vmatpush1.msra.mxu0 %v40
  %117 = vmatprep.subr.mxu0 0.0
  %118 = vmatpush1.msra.mxu0 %v41
  %119 = vmatprep.subr.mxu0 0.0
  %120 = vmatpush1.msra.mxu0 %v42
  %121 = vmatprep.subr.mxu0 0.0
  %122 = vmatpush1.msra.mxu0 %v43
  %123 = vmatprep.subr.mxu0 0.0
  %124 = vmatpush1.msra.mxu0 %v44
  %125 = vmatprep.subr.mxu0 0.0
  %126 = vmatpush1.msra.mxu0 %v45
  %127 = vmatprep.subr.mxu0 0.0
  %128 = vmatpush1.msra.mxu0 %v46
  %129 = vmatprep.subr.mxu0 0.0
  %130 = vmatpush1.msra.mxu0 %v47
  %131 = vmatprep.subr.mxu0 0.0
  %132 = vmatpush1.msra.mxu0 %v48
  %133 = vmatprep.subr.mxu0 0.0
  %134 = vmatpush1.msra.mxu0 %v49
  %135 = vmatprep.subr.mxu0 0.0
  %136 = vmatpush1.msra.mxu0 %v50
  %137 = vmatprep.subr.mxu0 0.0
  %138 = vmatpush1.msra.mxu0 %v51
  %139 = vmatprep.subr.mxu0 0.0
  %140 = vmatpush1.msra.mxu0 %v52
  %141 = vmatprep.subr.mxu0 0.0
  %142 = vmatpush1.msra.mxu0 %v53
  %143 = vmatprep.subr.mxu0 0.0
  %144 = vmatpush1.msra.mxu0 %v54
  %145 = vmatprep.subr.mxu0 0.0
  %146 = vmatpush1.msra.mxu0 %v55
  %147 = vmatprep.subr.mxu0 0.0
  %148 = vmatpush1.msra.mxu0 %v56
  %149 = vmatprep.subr.mxu0 0.0
  %150 = vmatpush1.msra.mxu0 %v85
  %151 = vmatprep.mubr.f32.mxu0 %v75
  %152 = vmatmul.mubr.f32.gmra.mrb[0].mxu0 %v17
  %v153 = vpop.f32.mrb[0].mxu0
  %v154 = vadd.f32 %v61, %v153
  %v155 = vpop.f32.mrb[0].mxu0
  %156 = vmatprep.mubr.f32.mxu0 %v78
  %157 = vmatmul.mubr.f32.gmra.mrb[0].mxu0 %v19
  %v158 = vpop.f32.mrb[0].mxu0
  %v159 = vadd.f32 %v66, %v158
  %v160 = vpop.f32.mrb[0].mxu0
  %161 = vmatprep.mubr.f32.mxu0 %v81
  %162 = vmatmul.mubr.f32.gmra.mrb[0].mxu0 %v21
  %v163 = vpop.f32.mrb[0].mxu0
  %v164 = vadd.f32 %v71, %v163
  %v165 = vpop.f32.mrb[0].mxu0
  %166 = vdwg.mxu0
  %v167 = vmax.f32 %v154, 0.0
  %v168 = vmax.f32 %v159, 0.0
  %v169 = vmax.f32 %v164, 0.0
  %v170 = vld [vmem:[%s3] sm:$0x1]
  %v172 = vlaneseq
  %v173 = vshrl.u32 %v172, 7
  %v174 = vsub.s32 0, %v173
  %v175 = vrot.slane %v170, %v174
  %v177 = vmul.f32 %v167, %v175
  %v178 = vmul.f32 %v168, %v175
  %v179 = vmul.f32 %v169, %v175
  %s180 = scalar_lea.vmem %s2, 256
  %v181 = vld [vmem:[%s180] sm:$0xff]
  %v182 = vld [vmem:[%s180 + $0x8] sm:$0xff]
  %v183 = vld [vmem:[%s180 + $0x10] sm:$0xff]
  %v184 = vld [vmem:[%s180 + $0x18] sm:$0xff]
  %v185 = vld [vmem:[%s180 + $0x20] sm:$0xff]
  %v186 = vld [vmem:[%s180 + $0x28] sm:$0xff]
  %v187 = vld [vmem:[%s180 + $0x30] sm:$0xff]
  %v188 = vld [vmem:[%s180 + $0x38] sm:$0xff]
  %v189 = vld [vmem:[%s180 + $0x40] sm:$0xff]
  %v190 = vld [vmem:[%s180 + $0x48] sm:$0xff]
  %v191 = vld [vmem:[%s180 + $0x50] sm:$0xff]
  %v192 = vld [vmem:[%s180 + $0x58] sm:$0xff]
  %v193 = vld [vmem:[%s180 + $0x60] sm:$0xff]
  %v194 = vld [vmem:[%s180 + $0x68] sm:$0xff]
  %v195 = vld [vmem:[%s180 + $0x70] sm:$0xff]
  %v196 = vld [vmem:[%s180 + $0x78] sm:$0xff]
  %v197 = vld [vmem:[%s180 + $0x80] sm:$0xff]
  %v198 = vld [vmem:[%s180 + $0x88] sm:$0xff]
  %v199 = vld [vmem:[%s180 + $0x90] sm:$0xff]
  %v200 = vld [vmem:[%s180 + $0x98] sm:$0xff]
  %v201 = vld [vmem:[%s180 + $0xa0] sm:$0xff]
  %v202 = vld [vmem:[%s180 + $0xa8] sm:$0xff]
  %v203 = vld [vmem:[%s180 + $0xb0] sm:$0xff]
  %v204 = vld [vmem:[%s180 + $0xb8] sm:$0xff]
  %v205 = vld [vmem:[%s180 + $0xc0] sm:$0xff]
  %v206 = vld [vmem:[%s180 + $0xc8] sm:$0xff]
  %v207 = vld [vmem:[%s180 + $0xd0] sm:$0xff]
  %v208 = vld [vmem:[%s180 + $0xd8] sm:$0xff]
  %v209 = vld [vmem:[%s180 + $0xe0] sm:$0xff]
  %v210 = vld [vmem:[%s180 + $0xe8] sm:$0xff]
  %v211 = vld [vmem:[%s180 + $0xf0] sm:$0xff]
  %v212 = vld [vmem:[%s180 + $0xf8] sm:$0x3]
  %v214 = vsel %vm83, %v212, 0
  %216 = vmatprep.subr.mxu0 0.0
  %217 = vmatpush1.msra.mxu0 %v181
  %218 = vmatprep.subr.mxu0 0.0
  %219 = vmatpush1.msra.mxu0 %v182
  %220 = vmatprep.subr.mxu0 0.0
  %221 = vmatpush1.msra.mxu0 %v183
  %222 = vmatprep.subr.mxu0 0.0
  %223 = vmatpush1.msra.mxu0 %v184
  %224 = vmatprep.subr.mxu0 0.0
  %225 = vmatpush1.msra.mxu0 %v185
  %226 = vmatprep.subr.mxu0 0.0
  %227 = vmatpush1.msra.mxu0 %v186
  %228 = vmatprep.subr.mxu0 0.0
  %229 = vmatpush1.msra.mxu0 %v187
  %230 = vmatprep.subr.mxu0 0.0
  %231 = vmatpush1.msra.mxu0 %v188
  %232 = vmatprep.subr.mxu0 0.0
  %233 = vmatpush1.msra.mxu0 %v189
  %234 = vmatprep.subr.mxu0 0.0
  %235 = vmatpush1.msra.mxu0 %v190
  %236 = vmatprep.subr.mxu0 0.0
  %237 = vmatpush1.msra.mxu0 %v191
  %238 = vmatprep.subr.mxu0 0.0
  %239 = vmatpush1.msra.mxu0 %v192
  %240 = vmatprep.subr.mxu0 0.0
  %241 = vmatpush1.msra.mxu0 %v193
  %242 = vmatprep.subr.mxu0 0.0
  %243 = vmatpush1.msra.mxu0 %v194
  %244 = vmatprep.subr.mxu0 0.0
  %245 = vmatpush1.msra.mxu0 %v195
  %246 = vmatprep.subr.mxu0 0.0
  %247 = vmatpush1.msra.mxu0 %v196
  %248 = vmatprep.subr.mxu0 0.0
  %249 = vmatpush1.msra.mxu0 %v197
  %250 = vmatprep.subr.mxu0 0.0
  %251 = vmatpush1.msra.mxu0 %v198
  %252 = vmatprep.subr.mxu0 0.0
  %253 = vmatpush1.msra.mxu0 %v199
  %254 = vmatprep.subr.mxu0 0.0
  %255 = vmatpush1.msra.mxu0 %v200
  %256 = vmatprep.subr.mxu0 0.0
  %257 = vmatpush1.msra.mxu0 %v201
  %258 = vmatprep.subr.mxu0 0.0
  %259 = vmatpush1.msra.mxu0 %v202
  %260 = vmatprep.subr.mxu0 0.0
  %261 = vmatpush1.msra.mxu0 %v203
  %262 = vmatprep.subr.mxu0 0.0
  %263 = vmatpush1.msra.mxu0 %v204
  %264 = vmatprep.subr.mxu0 0.0
  %265 = vmatpush1.msra.mxu0 %v205
  %266 = vmatprep.subr.mxu0 0.0
  %267 = vmatpush1.msra.mxu0 %v206
  %268 = vmatprep.subr.mxu0 0.0
  %269 = vmatpush1.msra.mxu0 %v207
  %270 = vmatprep.subr.mxu0 0.0
  %271 = vmatpush1.msra.mxu0 %v208
  %272 = vmatprep.subr.mxu0 0.0
  %273 = vmatpush1.msra.mxu0 %v209
  %274 = vmatprep.subr.mxu0 0.0
  %275 = vmatpush1.msra.mxu0 %v210
  %276 = vmatprep.subr.mxu0 0.0
  %277 = vmatpush1.msra.mxu0 %v211
  %278 = vmatprep.subr.mxu0 0.0
  %279 = vmatpush1.msra.mxu0 %v214
  %280 = vmatprep.mubr.f32.mxu0 %v75
  %281 = vmatmul.mubr.f32.gmra.mrb[0].mxu0 %v17
  %v282 = vpop.f32.mrb[0].mxu0
  %v283 = vadd.f32 %v61, %v282
  %v284 = vpop.f32.mrb[0].mxu0
  %285 = vmatprep.mubr.f32.mxu0 %v78
  %286 = vmatmul.mubr.f32.gmra.mrb[0].mxu0 %v19
  %v287 = vpop.f32.mrb[0].mxu0
  %v288 = vadd.f32 %v66, %v287
  %v289 = vpop.f32.mrb[0].mxu0
  %290 = vmatprep.mubr.f32.mxu0 %v81
  %291 = vmatmul.mubr.f32.gmra.mrb[0].mxu0 %v21
  %v292 = vpop.f32.mrb[0].mxu0
  %v293 = vadd.f32 %v71, %v292
  %v294 = vpop.f32.mrb[0].mxu0
  %295 = vdwg.mxu0
  %v296 = vmax.f32 %v283, 0.0
  %v297 = vmax.f32 %v288, 0.0
  %v298 = vmax.f32 %v293, 0.0
  %s299 = scalar_lea.vmem %s3, 1
  %v300 = vld [vmem:[%s299] sm:$0x1]
  %v302 = vlaneseq
  %v303 = vshrl.u32 %v302, 7
  %v304 = vsub.s32 0, %v303
  %v305 = vrot.slane %v300, %v304
  %v307 = vmul.f32 %v296, %v305
  %v308 = vmul.f32 %v297, %v305
  %v309 = vmul.f32 %v298, %v305
  %v310 = vmax.f32 %v177, %v307
  %v311 = vmax.f32 %v178, %v308
  %v312 = vmax.f32 %v179, %v309
  %s313 = scalar_lea.vmem %s2, 512
  %v314 = vld [vmem:[%s313] sm:$0xff]
  %v315 = vld [vmem:[%s313 + $0x8] sm:$0xff]
  %v316 = vld [vmem:[%s313 + $0x10] sm:$0xff]
  %v317 = vld [vmem:[%s313 + $0x18] sm:$0xff]
  %v318 = vld [vmem:[%s313 + $0x20] sm:$0xff]
  %v319 = vld [vmem:[%s313 + $0x28] sm:$0xff]
  %v320 = vld [vmem:[%s313 + $0x30] sm:$0xff]
  %v321 = vld [vmem:[%s313 + $0x38] sm:$0xff]
  %v322 = vld [vmem:[%s313 + $0x40] sm:$0xff]
  %v323 = vld [vmem:[%s313 + $0x48] sm:$0xff]
  %v324 = vld [vmem:[%s313 + $0x50] sm:$0xff]
  %v325 = vld [vmem:[%s313 + $0x58] sm:$0xff]
  %v326 = vld [vmem:[%s313 + $0x60] sm:$0xff]
  %v327 = vld [vmem:[%s313 + $0x68] sm:$0xff]
  %v328 = vld [vmem:[%s313 + $0x70] sm:$0xff]
  %v329 = vld [vmem:[%s313 + $0x78] sm:$0xff]
  %v330 = vld [vmem:[%s313 + $0x80] sm:$0xff]
  %v331 = vld [vmem:[%s313 + $0x88] sm:$0xff]
  %v332 = vld [vmem:[%s313 + $0x90] sm:$0xff]
  %v333 = vld [vmem:[%s313 + $0x98] sm:$0xff]
  %v334 = vld [vmem:[%s313 + $0xa0] sm:$0xff]
  %v335 = vld [vmem:[%s313 + $0xa8] sm:$0xff]
  %v336 = vld [vmem:[%s313 + $0xb0] sm:$0xff]
  %v337 = vld [vmem:[%s313 + $0xb8] sm:$0xff]
  %v338 = vld [vmem:[%s313 + $0xc0] sm:$0xff]
  %v339 = vld [vmem:[%s313 + $0xc8] sm:$0xff]
  %v340 = vld [vmem:[%s313 + $0xd0] sm:$0xff]
  %v341 = vld [vmem:[%s313 + $0xd8] sm:$0xff]
  %v342 = vld [vmem:[%s313 + $0xe0] sm:$0xff]
  %v343 = vld [vmem:[%s313 + $0xe8] sm:$0xff]
  %v344 = vld [vmem:[%s313 + $0xf0] sm:$0xff]
  %v345 = vld [vmem:[%s313 + $0xf8] sm:$0x3]
  %v347 = vsel %vm83, %v345, 0
  %349 = vmatprep.subr.mxu0 0.0
  %350 = vmatpush1.msra.mxu0 %v314
  %351 = vmatprep.subr.mxu0 0.0
  %352 = vmatpush1.msra.mxu0 %v315
  %353 = vmatprep.subr.mxu0 0.0
  %354 = vmatpush1.msra.mxu0 %v316
  %355 = vmatprep.subr.mxu0 0.0
  %356 = vmatpush1.msra.mxu0 %v317
  %357 = vmatprep.subr.mxu0 0.0
  %358 = vmatpush1.msra.mxu0 %v318
  %359 = vmatprep.subr.mxu0 0.0
  %360 = vmatpush1.msra.mxu0 %v319
  %361 = vmatprep.subr.mxu0 0.0
  %362 = vmatpush1.msra.mxu0 %v320
  %363 = vmatprep.subr.mxu0 0.0
  %364 = vmatpush1.msra.mxu0 %v321
  %365 = vmatprep.subr.mxu0 0.0
  %366 = vmatpush1.msra.mxu0 %v322
  %367 = vmatprep.subr.mxu0 0.0
  %368 = vmatpush1.msra.mxu0 %v323
  %369 = vmatprep.subr.mxu0 0.0
  %370 = vmatpush1.msra.mxu0 %v324
  %371 = vmatprep.subr.mxu0 0.0
  %372 = vmatpush1.msra.mxu0 %v325
  %373 = vmatprep.subr.mxu0 0.0
  %374 = vmatpush1.msra.mxu0 %v326
  %375 = vmatprep.subr.mxu0 0.0
  %376 = vmatpush1.msra.mxu0 %v327
  %377 = vmatprep.subr.mxu0 0.0
  %378 = vmatpush1.msra.mxu0 %v328
  %379 = vmatprep.subr.mxu0 0.0
  %380 = vmatpush1.msra.mxu0 %v329
  %381 = vmatprep.subr.mxu0 0.0
  %382 = vmatpush1.msra.mxu0 %v330
  %383 = vmatprep.subr.mxu0 0.0
  %384 = vmatpush1.msra.mxu0 %v331
  %385 = vmatprep.subr.mxu0 0.0
  %386 = vmatpush1.msra.mxu0 %v332
  %387 = vmatprep.subr.mxu0 0.0
  %388 = vmatpush1.msra.mxu0 %v333
  %389 = vmatprep.subr.mxu0 0.0
  %390 = vmatpush1.msra.mxu0 %v334
  %391 = vmatprep.subr.mxu0 0.0
  %392 = vmatpush1.msra.mxu0 %v335
  %393 = vmatprep.subr.mxu0 0.0
  %394 = vmatpush1.msra.mxu0 %v336
  %395 = vmatprep.subr.mxu0 0.0
  %396 = vmatpush1.msra.mxu0 %v337
  %397 = vmatprep.subr.mxu0 0.0
  %398 = vmatpush1.msra.mxu0 %v338
  %399 = vmatprep.subr.mxu0 0.0
  %400 = vmatpush1.msra.mxu0 %v339
  %401 = vmatprep.subr.mxu0 0.0
  %402 = vmatpush1.msra.mxu0 %v340
  %403 = vmatprep.subr.mxu0 0.0
  %404 = vmatpush1.msra.mxu0 %v341
  %405 = vmatprep.subr.mxu0 0.0
  %406 = vmatpush1.msra.mxu0 %v342
  %407 = vmatprep.subr.mxu0 0.0
  %408 = vmatpush1.msra.mxu0 %v343
  %409 = vmatprep.subr.mxu0 0.0
  %410 = vmatpush1.msra.mxu0 %v344
  %411 = vmatprep.subr.mxu0 0.0
  %412 = vmatpush1.msra.mxu0 %v347
  %413 = vmatprep.mubr.f32.mxu0 %v75
  %414 = vmatmul.mubr.f32.gmra.mrb[0].mxu0 %v17
  %v415 = vpop.f32.mrb[0].mxu0
  %v416 = vadd.f32 %v61, %v415
  %v417 = vpop.f32.mrb[0].mxu0
  %418 = vmatprep.mubr.f32.mxu0 %v78
  %419 = vmatmul.mubr.f32.gmra.mrb[0].mxu0 %v19
  %v420 = vpop.f32.mrb[0].mxu0
  %v421 = vadd.f32 %v66, %v420
  %v422 = vpop.f32.mrb[0].mxu0
  %423 = vmatprep.mubr.f32.mxu0 %v81
  %424 = vmatmul.mubr.f32.gmra.mrb[0].mxu0 %v21
  %v425 = vpop.f32.mrb[0].mxu0
  %v426 = vadd.f32 %v71, %v425
  %v427 = vpop.f32.mrb[0].mxu0
  %428 = vdwg.mxu0
  %v429 = vmax.f32 %v416, 0.0
  %v430 = vmax.f32 %v421, 0.0
  %v431 = vmax.f32 %v426, 0.0
  %s432 = scalar_lea.vmem %s3, 2
  %v433 = vld [vmem:[%s432] sm:$0x1]
  %v435 = vlaneseq
  %v436 = vshrl.u32 %v435, 7
  %v437 = vsub.s32 0, %v436
  %v438 = vrot.slane %v433, %v437
  %v440 = vmul.f32 %v429, %v438
  %v441 = vmul.f32 %v430, %v438
  %v442 = vmul.f32 %v431, %v438
  %v443 = vmax.f32 %v310, %v440
  %v444 = vmax.f32 %v311, %v441
  %v445 = vmax.f32 %v312, %v442
  %s446 = scalar_lea.vmem %s2, 768
  %v447 = vld [vmem:[%s446] sm:$0xff]
  %v448 = vld [vmem:[%s446 + $0x8] sm:$0xff]
  %v449 = vld [vmem:[%s446 + $0x10] sm:$0xff]
  %v450 = vld [vmem:[%s446 + $0x18] sm:$0xff]
  %v451 = vld [vmem:[%s446 + $0x20] sm:$0xff]
  %v452 = vld [vmem:[%s446 + $0x28] sm:$0xff]
  %v453 = vld [vmem:[%s446 + $0x30] sm:$0xff]
  %v454 = vld [vmem:[%s446 + $0x38] sm:$0xff]
  %v455 = vld [vmem:[%s446 + $0x40] sm:$0xff]
  %v456 = vld [vmem:[%s446 + $0x48] sm:$0xff]
  %v457 = vld [vmem:[%s446 + $0x50] sm:$0xff]
  %v458 = vld [vmem:[%s446 + $0x58] sm:$0xff]
  %v459 = vld [vmem:[%s446 + $0x60] sm:$0xff]
  %v460 = vld [vmem:[%s446 + $0x68] sm:$0xff]
  %v461 = vld [vmem:[%s446 + $0x70] sm:$0xff]
  %v462 = vld [vmem:[%s446 + $0x78] sm:$0xff]
  %v463 = vld [vmem:[%s446 + $0x80] sm:$0xff]
  %v464 = vld [vmem:[%s446 + $0x88] sm:$0xff]
  %v465 = vld [vmem:[%s446 + $0x90] sm:$0xff]
  %v466 = vld [vmem:[%s446 + $0x98] sm:$0xff]
  %v467 = vld [vmem:[%s446 + $0xa0] sm:$0xff]
  %v468 = vld [vmem:[%s446 + $0xa8] sm:$0xff]
  %v469 = vld [vmem:[%s446 + $0xb0] sm:$0xff]
  %v470 = vld [vmem:[%s446 + $0xb8] sm:$0xff]
  %v471 = vld [vmem:[%s446 + $0xc0] sm:$0xff]
  %v472 = vld [vmem:[%s446 + $0xc8] sm:$0xff]
  %v473 = vld [vmem:[%s446 + $0xd0] sm:$0xff]
  %v474 = vld [vmem:[%s446 + $0xd8] sm:$0xff]
  %v475 = vld [vmem:[%s446 + $0xe0] sm:$0xff]
  %v476 = vld [vmem:[%s446 + $0xe8] sm:$0xff]
  %v477 = vld [vmem:[%s446 + $0xf0] sm:$0xff]
  %v478 = vld [vmem:[%s446 + $0xf8] sm:$0x3]
  %v480 = vsel %vm83, %v478, 0
  %482 = vmatprep.subr.mxu0 0.0
  %483 = vmatpush1.msra.mxu0 %v447
  %484 = vmatprep.subr.mxu0 0.0
  %485 = vmatpush1.msra.mxu0 %v448
  %486 = vmatprep.subr.mxu0 0.0
  %487 = vmatpush1.msra.mxu0 %v449
  %488 = vmatprep.subr.mxu0 0.0
  %489 = vmatpush1.msra.mxu0 %v450
  %490 = vmatprep.subr.mxu0 0.0
  %491 = vmatpush1.msra.mxu0 %v451
  %492 = vmatprep.subr.mxu0 0.0
  %493 = vmatpush1.msra.mxu0 %v452
  %494 = vmatprep.subr.mxu0 0.0
  %495 = vmatpush1.msra.mxu0 %v453
  %496 = vmatprep.subr.mxu0 0.0
  %497 = vmatpush1.msra.mxu0 %v454
  %498 = vmatprep.subr.mxu0 0.0
  %499 = vmatpush1.msra.mxu0 %v455
  %500 = vmatprep.subr.mxu0 0.0
  %501 = vmatpush1.msra.mxu0 %v456
  %502 = vmatprep.subr.mxu0 0.0
  %503 = vmatpush1.msra.mxu0 %v457
  %504 = vmatprep.subr.mxu0 0.0
  %505 = vmatpush1.msra.mxu0 %v458
  %506 = vmatprep.subr.mxu0 0.0
  %507 = vmatpush1.msra.mxu0 %v459
  %508 = vmatprep.subr.mxu0 0.0
  %509 = vmatpush1.msra.mxu0 %v460
  %510 = vmatprep.subr.mxu0 0.0
  %511 = vmatpush1.msra.mxu0 %v461
  %512 = vmatprep.subr.mxu0 0.0
  %513 = vmatpush1.msra.mxu0 %v462
  %514 = vmatprep.subr.mxu0 0.0
  %515 = vmatpush1.msra.mxu0 %v463
  %516 = vmatprep.subr.mxu0 0.0
  %517 = vmatpush1.msra.mxu0 %v464
  %518 = vmatprep.subr.mxu0 0.0
  %519 = vmatpush1.msra.mxu0 %v465
  %520 = vmatprep.subr.mxu0 0.0
  %521 = vmatpush1.msra.mxu0 %v466
  %522 = vmatprep.subr.mxu0 0.0
  %523 = vmatpush1.msra.mxu0 %v467
  %524 = vmatprep.subr.mxu0 0.0
  %525 = vmatpush1.msra.mxu0 %v468
  %526 = vmatprep.subr.mxu0 0.0
  %527 = vmatpush1.msra.mxu0 %v469
  %528 = vmatprep.subr.mxu0 0.0
  %529 = vmatpush1.msra.mxu0 %v470
  %530 = vmatprep.subr.mxu0 0.0
  %531 = vmatpush1.msra.mxu0 %v471
  %532 = vmatprep.subr.mxu0 0.0
  %533 = vmatpush1.msra.mxu0 %v472
  %534 = vmatprep.subr.mxu0 0.0
  %535 = vmatpush1.msra.mxu0 %v473
  %536 = vmatprep.subr.mxu0 0.0
  %537 = vmatpush1.msra.mxu0 %v474
  %538 = vmatprep.subr.mxu0 0.0
  %539 = vmatpush1.msra.mxu0 %v475
  %540 = vmatprep.subr.mxu0 0.0
  %541 = vmatpush1.msra.mxu0 %v476
  %542 = vmatprep.subr.mxu0 0.0
  %543 = vmatpush1.msra.mxu0 %v477
  %544 = vmatprep.subr.mxu0 0.0
  %545 = vmatpush1.msra.mxu0 %v480
  %546 = vmatprep.mubr.f32.mxu0 %v75
  %547 = vmatmul.mubr.f32.gmra.mrb[0].mxu0 %v17
  %v548 = vpop.f32.mrb[0].mxu0
  %v549 = vadd.f32 %v61, %v548
  %v550 = vpop.f32.mrb[0].mxu0
  %551 = vmatprep.mubr.f32.mxu0 %v78
  %552 = vmatmul.mubr.f32.gmra.mrb[0].mxu0 %v19
  %v553 = vpop.f32.mrb[0].mxu0
  %v554 = vadd.f32 %v66, %v553
  %v555 = vpop.f32.mrb[0].mxu0
  %556 = vmatprep.mubr.f32.mxu0 %v81
  %557 = vmatmul.mubr.f32.gmra.mrb[0].mxu0 %v21
  %v558 = vpop.f32.mrb[0].mxu0
  %v559 = vadd.f32 %v71, %v558
  %v560 = vpop.f32.mrb[0].mxu0
  %561 = vdwg.mxu0
  %v562 = vmax.f32 %v549, 0.0
  %v563 = vmax.f32 %v554, 0.0
  %v564 = vmax.f32 %v559, 0.0
  %s565 = scalar_lea.vmem %s3, 3
  %v566 = vld [vmem:[%s565] sm:$0x1]
  %v568 = vlaneseq
  %v569 = vshrl.u32 %v568, 7
  %v570 = vsub.s32 0, %v569
  %v571 = vrot.slane %v566, %v570
  %v573 = vmul.f32 %v562, %v571
  %v574 = vmul.f32 %v563, %v571
  %v575 = vmul.f32 %v564, %v571
  %v576 = vmax.f32 %v443, %v573
  %v577 = vmax.f32 %v444, %v574
  %v578 = vmax.f32 %v445, %v575
  %vm579 = vcmask 801792
  %580 = vst.msk [vmem:[%s4] sm:$0xff] %vm579, %v576
  %581 = vst.msk [vmem:[%s4 + $0x8] sm:$0xff] %vm579, %v577
  %vm582 = vcmask 797696
  %583 = vst.msk [vmem:[%s4 + $0x10] sm:$0xf] %vm582, %v578
  // Predicated region
  $region18: #{cnn_forward.5} parent=0 // pred_check
    _
  $region19: #{cnn_forward.5} parent=0 // pred_check_branch
    %585 = sbr.rel (0) target = $region21
  $region20: #{cnn_forward.5} parent=0 // pred_region
    _
  $region21: #{cnn_forward.5} parent=0 // pred_fallthru
    _
  // Predicated region
  $region22: #{cnn_forward.5} parent=0 // pred_check
    _
  $region23: #{cnn_forward.5} parent=0 // pred_check_branch
    %587 = sbr.rel (0) target = $region25
  $region24: #{cnn_forward.5} parent=0 // pred_region
    _
  $region25: #{cnn_forward.5} parent=0 // pred_fallthru
    _

// kernel: cnn_forward.6
$region0: #{cnn_forward.6}
  #allocation0 [shape = 'u32[]', space=smem, size = 0x4, offset = 0x4, fixed_abs, tag = 'smem constant byte address 0x4 - core index']
  #allocation1 [shape = 'u32[144,128]{1,0:T(1,128)}', space=vmem, size = 0x12000, scoped, tag = 'internal scratch']
  %s0 = inlined_call_operand.vmem [shape: f32[40,500], index: 0, kind: input, shape index: {}]
  %s1 = inlined_call_operand.vmem [shape: f32[40,1], index: 1, kind: input, shape index: {}]
  %s2 = inlined_call_operand.vmem [shape: f32[4,500,32], index: 2, kind: input, shape index: {}]
  %s3 = inlined_call_operand.vmem [shape: f32[4,1,32], index: 3, kind: input, shape index: {}]
  %s4 = inlined_call_operand.vmem [shape: f32[40,32], index: 4, kind: output, shape index: {}]
  %s5 = sld [smem:[#allocation0]]
  $region26: #{cnn_forward.6} parent=0
    _
  %s7 = ssub.s32 1, %s5
  %s8 = scalar_select 0, %s7, %s5
  // Predicated region
  $region2: #{cnn_forward.6} parent=0 // pred_check
    _
  $region3: #{cnn_forward.6} parent=0 // pred_check_branch
    %10 = sbr.rel (0) target = $region5
  $region4: #{cnn_forward.6} parent=0 // pred_region
    _
  $region5: #{cnn_forward.6} parent=0 // pred_fallthru
    _
  // Predicated region
  $region6: #{cnn_forward.6} parent=0 // pred_check
    _
  $region7: #{cnn_forward.6} parent=0 // pred_check_branch
    %12 = sbr.rel (0) target = $region9
  $region8: #{cnn_forward.6} parent=0 // pred_region
    _
  $region9: #{cnn_forward.6} parent=0 // pred_fallthru
    _
  // Predicated region
  $region10: #{cnn_forward.6} parent=0 // pred_check
    _
  $region11: #{cnn_forward.6} parent=0 // pred_check_branch
    %14 = sbr.rel (0) target = $region13
  $region12: #{cnn_forward.6} parent=0 // pred_region
    _
  $region13: #{cnn_forward.6} parent=0 // pred_fallthru
    _
  // Predicated region
  $region14: #{cnn_forward.6} parent=0 // pred_check
    _
  $region15: #{cnn_forward.6} parent=0 // pred_check_branch
    %16 = sbr.rel (0) target = $region17
  $region16: #{cnn_forward.6} parent=0 // pred_region
    _
  $region17: #{cnn_forward.6} parent=0 // pred_fallthru
    _
  %v17 = vld [vmem:[%s0] sm:$0xff]
  %v18 = vld [vmem:[%s0 + $0x8] sm:$0xff]
  %v19 = vld [vmem:[%s0 + $0x10] sm:$0xff]
  %v20 = vld [vmem:[%s0 + $0x18] sm:$0xff]
  %v21 = vld [vmem:[%s0 + $0x20] sm:$0xff]
  %v22 = vld [vmem:[%s0 + $0x28] sm:$0xff]
  %v23 = vld [vmem:[%s0 + $0x30] sm:$0xff]
  %v24 = vld [vmem:[%s0 + $0x38] sm:$0xff]
  %v25 = vld [vmem:[%s0 + $0x40] sm:$0xff]
  %v26 = vld [vmem:[%s0 + $0x48] sm:$0xff]
  %v27 = vld [vmem:[%s0 + $0x50] sm:$0xff]
  %v28 = vld [vmem:[%s0 + $0x58] sm:$0xff]
  %v29 = vld [vmem:[%s0 + $0x60] sm:$0xff]
  %v30 = vld [vmem:[%s0 + $0x68] sm:$0xff]
  %v31 = vld [vmem:[%s0 + $0x70] sm:$0xff]
  %v32 = vld [vmem:[%s0 + $0x78] sm:$0xff]
  %v33 = vld [vmem:[%s0 + $0x80] sm:$0xff]
  %v34 = vld [vmem:[%s0 + $0x88] sm:$0xff]
  %v35 = vld [vmem:[%s0 + $0x90] sm:$0xff]
  %v36 = vld [vmem:[%s0 + $0x98] sm:$0xff]
  %v37 = vld [vmem:[%s1] sm:$0xff]
  %v38 = vld [vmem:[%s1 + $0x8] sm:$0xff]
  %v39 = vld [vmem:[%s1 + $0x10] sm:$0xff]
  %v40 = vld [vmem:[%s1 + $0x18] sm:$0xff]
  %v41 = vld [vmem:[%s1 + $0x20] sm:$0xff]
  %v42 = vld [vmem:[%s2] sm:$0xff]
  %v43 = vld [vmem:[%s2 + $0x8] sm:$0xff]
  %v44 = vld [vmem:[%s2 + $0x10] sm:$0xff]
  %v45 = vld [vmem:[%s2 + $0x18] sm:$0xff]
  %v46 = vld [vmem:[%s2 + $0x20] sm:$0xff]
  %v47 = vld [vmem:[%s2 + $0x28] sm:$0xff]
  %v48 = vld [vmem:[%s2 + $0x30] sm:$0xff]
  %v49 = vld [vmem:[%s2 + $0x38] sm:$0xff]
  %v50 = vld [vmem:[%s2 + $0x40] sm:$0xff]
  %v51 = vld [vmem:[%s2 + $0x48] sm:$0xff]
  %v52 = vld [vmem:[%s2 + $0x50] sm:$0xff]
  %v53 = vld [vmem:[%s2 + $0x58] sm:$0xff]
  %v54 = vld [vmem:[%s2 + $0x60] sm:$0xff]
  %v55 = vld [vmem:[%s2 + $0x68] sm:$0xff]
  %v56 = vld [vmem:[%s2 + $0x70] sm:$0xff]
  %v57 = vld [vmem:[%s2 + $0x78] sm:$0xff]
  %v58 = vld [vmem:[%s2 + $0x80] sm:$0xff]
  %v59 = vld [vmem:[%s2 + $0x88] sm:$0xff]
  %v60 = vld [vmem:[%s2 + $0x90] sm:$0xff]
  %v61 = vld [vmem:[%s2 + $0x98] sm:$0xff]
  %v62 = vld [vmem:[%s2 + $0xa0] sm:$0xff]
  %v63 = vld [vmem:[%s2 + $0xa8] sm:$0xff]
  %v64 = vld [vmem:[%s2 + $0xb0] sm:$0xff]
  %v65 = vld [vmem:[%s2 + $0xb8] sm:$0xff]
  %v66 = vld [vmem:[%s2 + $0xc0] sm:$0xff]
  %v67 = vld [vmem:[%s2 + $0xc8] sm:$0xff]
  %v68 = vld [vmem:[%s2 + $0xd0] sm:$0xff]
  %v69 = vld [vmem:[%s2 + $0xd8] sm:$0xff]
  %v70 = vld [vmem:[%s2 + $0xe0] sm:$0xff]
  %v71 = vld [vmem:[%s2 + $0xe8] sm:$0xff]
  %v72 = vld [vmem:[%s2 + $0xf0] sm:$0xff]
  %v73 = vld [vmem:[%s2 + $0xf8] sm:$0xff]
  %v74 = vld [vmem:[%s2 + $0x100] sm:$0xff]
  %v75 = vld [vmem:[%s2 + $0x108] sm:$0xff]
  %v76 = vld [vmem:[%s2 + $0x110] sm:$0xff]
  %v77 = vld [vmem:[%s2 + $0x118] sm:$0xff]
  %v78 = vld [vmem:[%s2 + $0x120] sm:$0xff]
  %v79 = vld [vmem:[%s2 + $0x128] sm:$0xff]
  %v80 = vld [vmem:[%s2 + $0x130] sm:$0xff]
  %v81 = vld [vmem:[%s2 + $0x138] sm:$0xff]
  %v82 = vld [vmem:[%s2 + $0x140] sm:$0xff]
  %v83 = vld [vmem:[%s2 + $0x148] sm:$0xff]
  %v84 = vld [vmem:[%s2 + $0x150] sm:$0xff]
  %v85 = vld [vmem:[%s2 + $0x158] sm:$0xff]
  %v86 = vld [vmem:[%s2 + $0x160] sm:$0xff]
  %v87 = vld [vmem:[%s2 + $0x168] sm:$0xff]
  %v88 = vld [vmem:[%s2 + $0x170] sm:$0xff]
  %v89 = vld [vmem:[%s2 + $0x178] sm:$0xff]
  %v90 = vld [vmem:[%s2 + $0x180] sm:$0xff]
  %v91 = vld [vmem:[%s2 + $0x188] sm:$0xff]
  %v92 = vld [vmem:[%s2 + $0x190] sm:$0xff]
  %v93 = vld [vmem:[%s2 + $0x198] sm:$0xff]
  %v94 = vld [vmem:[%s2 + $0x1a0] sm:$0xff]
  %v95 = vld [vmem:[%s2 + $0x1a8] sm:$0xff]
  %v96 = vld [vmem:[%s2 + $0x1b0] sm:$0xff]
  %v97 = vld [vmem:[%s2 + $0x1b8] sm:$0xff]
  %v98 = vld [vmem:[%s2 + $0x1c0] sm:$0xff]
  %v99 = vld [vmem:[%s2 + $0x1c8] sm:$0xff]
  %v100 = vld [vmem:[%s2 + $0x1d0] sm:$0xff]
  %v101 = vld [vmem:[%s2 + $0x1d8] sm:$0xff]
  %v102 = vld [vmem:[%s2 + $0x1e0] sm:$0xff]
  %v103 = vld [vmem:[%s2 + $0x1e8] sm:$0xff]
  %v104 = vld [vmem:[%s2 + $0x1f0] sm:$0xf]
  %106 = vset.pattern.permute.xlu0 0
  %107 = vperm.xlu0 %106, %v37
  %v108 = vpop.permute.xlu0 %107
  %111 = vset.pattern.permute.xlu0 0
  %112 = vperm.xlu0 %111, %v38
  %v113 = vpop.permute.xlu0 %112
  %116 = vset.pattern.permute.xlu0 0
  %117 = vperm.xlu0 %116, %v39
  %v118 = vpop.permute.xlu0 %117
  %121 = vset.pattern.permute.xlu0 0
  %122 = vperm.xlu0 %121, %v40
  %v123 = vpop.permute.xlu0 %122
  %126 = vset.pattern.permute.xlu0 0
  %127 = vperm.xlu0 %126, %v41
  %v128 = vpop.permute.xlu0 %127
  %vm130 = vcmask 949248
  %v132 = vsel %vm130, %v20, 0
  %v135 = vsel %vm130, %v24, 0
  %v138 = vsel %vm130, %v28, 0
  %v141 = vsel %vm130, %v32, 0
  %v144 = vsel %vm130, %v36, 0
  %vm146 = vcmask 1043456
  %v148 = vsel %vm146, %v104, 0
  %150 = vmatprep.subr.mxu0 0.0
  %151 = vmatpush1.msra.mxu0 %v42
  %152 = vmatprep.subr.mxu0 0.0
  %153 = vmatpush1.msra.mxu0 %v43
  %154 = vmatprep.subr.mxu0 0.0
  %155 = vmatpush1.msra.mxu0 %v44
  %156 = vmatprep.subr.mxu0 0.0
  %157 = vmatpush1.msra.mxu0 %v45
  %158 = vmatprep.subr.mxu0 0.0
  %159 = vmatpush1.msra.mxu0 %v46
  %160 = vmatprep.subr.mxu0 0.0
  %161 = vmatpush1.msra.mxu0 %v47
  %162 = vmatprep.subr.mxu0 0.0
  %163 = vmatpush1.msra.mxu0 %v48
  %164 = vmatprep.subr.mxu0 0.0
  %165 = vmatpush1.msra.mxu0 %v49
  %166 = vmatprep.subr.mxu0 0.0
  %167 = vmatpush1.msra.mxu0 %v50
  %168 = vmatprep.subr.mxu0 0.0
  %169 = vmatpush1.msra.mxu0 %v51
  %170 = vmatprep.subr.mxu0 0.0
  %171 = vmatpush1.msra.mxu0 %v52
  %172 = vmatprep.subr.mxu0 0.0
  %173 = vmatpush1.msra.mxu0 %v53
  %174 = vmatprep.subr.mxu0 0.0
  %175 = vmatpush1.msra.mxu0 %v54
  %176 = vmatprep.subr.mxu0 0.0
  %177 = vmatpush1.msra.mxu0 %v55
  %178 = vmatprep.subr.mxu0 0.0
  %179 = vmatpush1.msra.mxu0 %v56
  %180 = vmatprep.subr.mxu0 0.0
  %181 = vmatpush1.msra.mxu0 %v57
  %182 = vmatprep.subr.mxu0 0.0
  %183 = vmatpush1.msra.mxu0 %v58
  %184 = vmatprep.subr.mxu0 0.0
  %185 = vmatpush1.msra.mxu0 %v59
  %186 = vmatprep.subr.mxu0 0.0
  %187 = vmatpush1.msra.mxu0 %v60
  %188 = vmatprep.subr.mxu0 0.0
  %189 = vmatpush1.msra.mxu0 %v61
  %190 = vmatprep.subr.mxu0 0.0
  %191 = vmatpush1.msra.mxu0 %v62
  %192 = vmatprep.subr.mxu0 0.0
  %193 = vmatpush1.msra.mxu0 %v63
  %194 = vmatprep.subr.mxu0 0.0
  %195 = vmatpush1.msra.mxu0 %v64
  %196 = vmatprep.subr.mxu0 0.0
  %197 = vmatpush1.msra.mxu0 %v65
  %198 = vmatprep.subr.mxu0 0.0
  %199 = vmatpush1.msra.mxu0 %v66
  %200 = vmatprep.subr.mxu0 0.0
  %201 = vmatpush1.msra.mxu0 %v67
  %202 = vmatprep.subr.mxu0 0.0
  %203 = vmatpush1.msra.mxu0 %v68
  %204 = vmatprep.subr.mxu0 0.0
  %205 = vmatpush1.msra.mxu0 %v69
  %206 = vmatprep.subr.mxu0 0.0
  %207 = vmatpush1.msra.mxu0 %v70
  %208 = vmatprep.subr.mxu0 0.0
  %209 = vmatpush1.msra.mxu0 %v71
  %210 = vmatprep.subr.mxu0 0.0
  %211 = vmatpush1.msra.mxu0 %v72
  %212 = vmatprep.subr.mxu0 0.0
  %213 = vmatpush1.msra.mxu0 %v73
  %214 = vmatprep.mubr.f32.mxu0 %v18
  %215 = vmatmul.mubr.f32.gmra.mrb[0].mxu0 %v17
  %v216 = vpop.f32.mrb[0].mxu0
  %v217 = vadd.f32 %v108, %v216
  %v218 = vpop.f32.mrb[0].mxu0
  %219 = vmatprep.mubr.f32.mxu0 %v22
  %220 = vmatmul.mubr.f32.gmra.mrb[0].mxu0 %v21
  %v221 = vpop.f32.mrb[0].mxu0
  %v222 = vadd.f32 %v113, %v221
  %v223 = vpop.f32.mrb[0].mxu0
  %224 = vmatprep.mubr.f32.mxu0 %v26
  %225 = vmatmul.mubr.f32.gmra.mrb[0].mxu0 %v25
  %v226 = vpop.f32.mrb[0].mxu0
  %v227 = vadd.f32 %v118, %v226
  %v228 = vpop.f32.mrb[0].mxu0
  %229 = vmatprep.mubr.f32.mxu0 %v30
  %230 = vmatmul.mubr.f32.gmra.mrb[0].mxu0 %v29
  %v231 = vpop.f32.mrb[0].mxu0
  %v232 = vadd.f32 %v123, %v231
  %v233 = vpop.f32.mrb[0].mxu0
  %234 = vmatprep.mubr.f32.mxu0 %v34
  %235 = vmatmul.mubr.f32.gmra.mrb[0].mxu0 %v33
  %v236 = vpop.f32.mrb[0].mxu0
  %v237 = vadd.f32 %v128, %v236
  %v238 = vpop.f32.mrb[0].mxu0
  %239 = vdwg.mxu0
  %240 = vmatprep.subr.mxu0 0.0
  %241 = vmatpush1.msra.mxu0 %v74
  %242 = vmatprep.subr.mxu0 0.0
  %243 = vmatpush1.msra.mxu0 %v75
  %244 = vmatprep.subr.mxu0 0.0
  %245 = vmatpush1.msra.mxu0 %v76
  %246 = vmatprep.subr.mxu0 0.0
  %247 = vmatpush1.msra.mxu0 %v77
  %248 = vmatprep.subr.mxu0 0.0
  %249 = vmatpush1.msra.mxu0 %v78
  %250 = vmatprep.subr.mxu0 0.0
  %251 = vmatpush1.msra.mxu0 %v79
  %252 = vmatprep.subr.mxu0 0.0
  %253 = vmatpush1.msra.mxu0 %v80
  %254 = vmatprep.subr.mxu0 0.0
  %255 = vmatpush1.msra.mxu0 %v81
  %256 = vmatprep.subr.mxu0 0.0
  %257 = vmatpush1.msra.mxu0 %v82
  %258 = vmatprep.subr.mxu0 0.0
  %259 = vmatpush1.msra.mxu0 %v83
  %260 = vmatprep.subr.mxu0 0.0
  %261 = vmatpush1.msra.mxu0 %v84
  %262 = vmatprep.subr.mxu0 0.0
  %263 = vmatpush1.msra.mxu0 %v85
  %264 = vmatprep.subr.mxu0 0.0
  %265 = vmatpush1.msra.mxu0 %v86
  %266 = vmatprep.subr.mxu0 0.0
  %267 = vmatpush1.msra.mxu0 %v87
  %268 = vmatprep.subr.mxu0 0.0
  %269 = vmatpush1.msra.mxu0 %v88
  %270 = vmatprep.subr.mxu0 0.0
  %271 = vmatpush1.msra.mxu0 %v89
  %272 = vmatprep.subr.mxu0 0.0
  %273 = vmatpush1.msra.mxu0 %v90
  %274 = vmatprep.subr.mxu0 0.0
  %275 = vmatpush1.msra.mxu0 %v91
  %276 = vmatprep.subr.mxu0 0.0
  %277 = vmatpush1.msra.mxu0 %v92
  %278 = vmatprep.subr.mxu0 0.0
  %279 = vmatpush1.msra.mxu0 %v93
  %280 = vmatprep.subr.mxu0 0.0
  %281 = vmatpush1.msra.mxu0 %v94
  %282 = vmatprep.subr.mxu0 0.0
  %283 = vmatpush1.msra.mxu0 %v95
  %284 = vmatprep.subr.mxu0 0.0
  %285 = vmatpush1.msra.mxu0 %v96
  %286 = vmatprep.subr.mxu0 0.0
  %287 = vmatpush1.msra.mxu0 %v97
  %288 = vmatprep.subr.mxu0 0.0
  %289 = vmatpush1.msra.mxu0 %v98
  %290 = vmatprep.subr.mxu0 0.0
  %291 = vmatpush1.msra.mxu0 %v99
  %292 = vmatprep.subr.mxu0 0.0
  %293 = vmatpush1.msra.mxu0 %v100
  %294 = vmatprep.subr.mxu0 0.0
  %295 = vmatpush1.msra.mxu0 %v101
  %296 = vmatprep.subr.mxu0 0.0
  %297 = vmatpush1.msra.mxu0 %v102
  %298 = vmatprep.subr.mxu0 0.0
  %299 = vmatpush1.msra.mxu0 %v103
  %300 = vmatprep.subr.mxu0 0.0
  %301 = vmatpush1.msra.mxu0 %v148
  %302 = vmatprep.subr.mxu0 0.0
  %303 = vmatpush1.msra.mxu0 0.0
  %304 = vmatprep.mubr.f32.mxu0 %v132
  %305 = vmatmul.mubr.f32.gmra.mrb[0].mxu0 %v19
  %v306 = vpop.f32.mrb[0].mxu0
  %v307 = vadd.f32 %v217, %v306
  %v308 = vpop.f32.mrb[0].mxu0
  %309 = vmatprep.mubr.f32.mxu0 %v135
  %310 = vmatmul.mubr.f32.gmra.mrb[0].mxu0 %v23
  %v311 = vpop.f32.mrb[0].mxu0
  %v312 = vadd.f32 %v222, %v311
  %v313 = vpop.f32.mrb[0].mxu0
  %314 = vmatprep.mubr.f32.mxu0 %v138
  %315 = vmatmul.mubr.f32.gmra.mrb[0].mxu0 %v27
  %v316 = vpop.f32.mrb[0].mxu0
  %v317 = vadd.f32 %v227, %v316
  %v318 = vpop.f32.mrb[0].mxu0
  %319 = vmatprep.mubr.f32.mxu0 %v141
  %320 = vmatmul.mubr.f32.gmra.mrb[0].mxu0 %v31
  %v321 = vpop.f32.mrb[0].mxu0
  %v322 = vadd.f32 %v232, %v321
  %v323 = vpop.f32.mrb[0].mxu0
  %324 = vmatprep.mubr.f32.mxu0 %v144
  %325 = vmatmul.mubr.f32.gmra.mrb[0].mxu0 %v35
  %v326 = vpop.f32.mrb[0].mxu0
  %v327 = vadd.f32 %v237, %v326
  %v328 = vpop.f32.mrb[0].mxu0
  %329 = vdwg.mxu0
  %v330 = vmax.f32 %v307, 0.0
  %v331 = vmax.f32 %v312, 0.0
  %v332 = vmax.f32 %v317, 0.0
  %v333 = vmax.f32 %v322, 0.0
  %v334 = vmax.f32 %v327, 0.0
  %v335 = vld [vmem:[%s3] sm:$0x1]
  %v337 = vlaneseq
  %v338 = vshrl.u32 %v337, 7
  %v339 = vsub.s32 0, %v338
  %v340 = vrot.slane %v335, %v339
  %v342 = vmul.f32 %v330, %v340
  %v343 = vmul.f32 %v331, %v340
  %v344 = vmul.f32 %v332, %v340
  %v345 = vmul.f32 %v333, %v340
  %v346 = vmul.f32 %v334, %v340
  %s347 = scalar_lea.vmem %s2, 504
  %v348 = vld [vmem:[%s347] sm:$0xff]
  %v349 = vld [vmem:[%s347 + $0x8] sm:$0xff]
  %v350 = vld [vmem:[%s347 + $0x10] sm:$0xff]
  %v351 = vld [vmem:[%s347 + $0x18] sm:$0xff]
  %v352 = vld [vmem:[%s347 + $0x20] sm:$0xff]
  %v353 = vld [vmem:[%s347 + $0x28] sm:$0xff]
  %v354 = vld [vmem:[%s347 + $0x30] sm:$0xff]
  %v355 = vld [vmem:[%s347 + $0x38] sm:$0xff]
  %v356 = vld [vmem:[%s347 + $0x40] sm:$0xff]
  %v357 = vld [vmem:[%s347 + $0x48] sm:$0xff]
  %v358 = vld [vmem:[%s347 + $0x50] sm:$0xff]
  %v359 = vld [vmem:[%s347 + $0x58] sm:$0xff]
  %v360 = vld [vmem:[%s347 + $0x60] sm:$0xff]
  %v361 = vld [vmem:[%s347 + $0x68] sm:$0xff]
  %v362 = vld [vmem:[%s347 + $0x70] sm:$0xff]
  %v363 = vld [vmem:[%s347 + $0x78] sm:$0xff]
  %v364 = vld [vmem:[%s347 + $0x80] sm:$0xff]
  %v365 = vld [vmem:[%s347 + $0x88] sm:$0xff]
  %v366 = vld [vmem:[%s347 + $0x90] sm:$0xff]
  %v367 = vld [vmem:[%s347 + $0x98] sm:$0xff]
  %v368 = vld [vmem:[%s347 + $0xa0] sm:$0xff]
  %v369 = vld [vmem:[%s347 + $0xa8] sm:$0xff]
  %v370 = vld [vmem:[%s347 + $0xb0] sm:$0xff]
  %v371 = vld [vmem:[%s347 + $0xb8] sm:$0xff]
  %v372 = vld [vmem:[%s347 + $0xc0] sm:$0xff]
  %v373 = vld [vmem:[%s347 + $0xc8] sm:$0xff]
  %v374 = vld [vmem:[%s347 + $0xd0] sm:$0xff]
  %v375 = vld [vmem:[%s347 + $0xd8] sm:$0xff]
  %v376 = vld [vmem:[%s347 + $0xe0] sm:$0xff]
  %v377 = vld [vmem:[%s347 + $0xe8] sm:$0xff]
  %v378 = vld [vmem:[%s347 + $0xf0] sm:$0xff]
  %v379 = vld [vmem:[%s347 + $0xf8] sm:$0xff]
  %v380 = vld [vmem:[%s347 + $0x100] sm:$0xff]
  %v381 = vld [vmem:[%s347 + $0x108] sm:$0xff]
  %v382 = vld [vmem:[%s347 + $0x110] sm:$0xff]
  %v383 = vld [vmem:[%s347 + $0x118] sm:$0xff]
  %v384 = vld [vmem:[%s347 + $0x120] sm:$0xff]
  %v385 = vld [vmem:[%s347 + $0x128] sm:$0xff]
  %v386 = vld [vmem:[%s347 + $0x130] sm:$0xff]
  %v387 = vld [vmem:[%s347 + $0x138] sm:$0xff]
  %v388 = vld [vmem:[%s347 + $0x140] sm:$0xff]
  %v389 = vld [vmem:[%s347 + $0x148] sm:$0xff]
  %v390 = vld [vmem:[%s347 + $0x150] sm:$0xff]
  %v391 = vld [vmem:[%s347 + $0x158] sm:$0xff]
  %v392 = vld [vmem:[%s347 + $0x160] sm:$0xff]
  %v393 = vld [vmem:[%s347 + $0x168] sm:$0xff]
  %v394 = vld [vmem:[%s347 + $0x170] sm:$0xff]
  %v395 = vld [vmem:[%s347 + $0x178] sm:$0xff]
  %v396 = vld [vmem:[%s347 + $0x180] sm:$0xff]
  %v397 = vld [vmem:[%s347 + $0x188] sm:$0xff]
  %v398 = vld [vmem:[%s347 + $0x190] sm:$0xff]
  %v399 = vld [vmem:[%s347 + $0x198] sm:$0xff]
  %v400 = vld [vmem:[%s347 + $0x1a0] sm:$0xff]
  %v401 = vld [vmem:[%s347 + $0x1a8] sm:$0xff]
  %v402 = vld [vmem:[%s347 + $0x1b0] sm:$0xff]
  %v403 = vld [vmem:[%s347 + $0x1b8] sm:$0xff]
  %v404 = vld [vmem:[%s347 + $0x1c0] sm:$0xff]
  %v405 = vld [vmem:[%s347 + $0x1c8] sm:$0xff]
  %v406 = vld [vmem:[%s347 + $0x1d0] sm:$0xff]
  %v407 = vld [vmem:[%s347 + $0x1d8] sm:$0xff]
  %v408 = vld [vmem:[%s347 + $0x1e0] sm:$0xff]
  %v409 = vld [vmem:[%s347 + $0x1e8] sm:$0xff]
  %v410 = vld [vmem:[%s347 + $0x1f0] sm:$0xf]
  %v412 = vsel %vm146, %v410, 0
  %414 = vmatprep.subr.mxu0 0.0
  %415 = vmatpush1.msra.mxu0 %v348
  %416 = vmatprep.subr.mxu0 0.0
  %417 = vmatpush1.msra.mxu0 %v349
  %418 = vmatprep.subr.mxu0 0.0
  %419 = vmatpush1.msra.mxu0 %v350
  %420 = vmatprep.subr.mxu0 0.0
  %421 = vmatpush1.msra.mxu0 %v351
  %422 = vmatprep.subr.mxu0 0.0
  %423 = vmatpush1.msra.mxu0 %v352
  %424 = vmatprep.subr.mxu0 0.0
  %425 = vmatpush1.msra.mxu0 %v353
  %426 = vmatprep.subr.mxu0 0.0
  %427 = vmatpush1.msra.mxu0 %v354
  %428 = vmatprep.subr.mxu0 0.0
  %429 = vmatpush1.msra.mxu0 %v355
  %430 = vmatprep.subr.mxu0 0.0
  %431 = vmatpush1.msra.mxu0 %v356
  %432 = vmatprep.subr.mxu0 0.0
  %433 = vmatpush1.msra.mxu0 %v357
  %434 = vmatprep.subr.mxu0 0.0
  %435 = vmatpush1.msra.mxu0 %v358
  %436 = vmatprep.subr.mxu0 0.0
  %437 = vmatpush1.msra.mxu0 %v359
  %438 = vmatprep.subr.mxu0 0.0
  %439 = vmatpush1.msra.mxu0 %v360
  %440 = vmatprep.subr.mxu0 0.0
  %441 = vmatpush1.msra.mxu0 %v361
  %442 = vmatprep.subr.mxu0 0.0
  %443 = vmatpush1.msra.mxu0 %v362
  %444 = vmatprep.subr.mxu0 0.0
  %445 = vmatpush1.msra.mxu0 %v363
  %446 = vmatprep.subr.mxu0 0.0
  %447 = vmatpush1.msra.mxu0 %v364
  %448 = vmatprep.subr.mxu0 0.0
  %449 = vmatpush1.msra.mxu0 %v365
  %450 = vmatprep.subr.mxu0 0.0
  %451 = vmatpush1.msra.mxu0 %v366
  %452 = vmatprep.subr.mxu0 0.0
  %453 = vmatpush1.msra.mxu0 %v367
  %454 = vmatprep.subr.mxu0 0.0
  %455 = vmatpush1.msra.mxu0 %v368
  %456 = vmatprep.subr.mxu0 0.0
  %457 = vmatpush1.msra.mxu0 %v369
  %458 = vmatprep.subr.mxu0 0.0
  %459 = vmatpush1.msra.mxu0 %v370
  %460 = vmatprep.subr.mxu0 0.0
  %461 = vmatpush1.msra.mxu0 %v371
  %462 = vmatprep.subr.mxu0 0.0
  %463 = vmatpush1.msra.mxu0 %v372
  %464 = vmatprep.subr.mxu0 0.0
  %465 = vmatpush1.msra.mxu0 %v373
  %466 = vmatprep.subr.mxu0 0.0
  %467 = vmatpush1.msra.mxu0 %v374
  %468 = vmatprep.subr.mxu0 0.0
  %469 = vmatpush1.msra.mxu0 %v375
  %470 = vmatprep.subr.mxu0 0.0
  %471 = vmatpush1.msra.mxu0 %v376
  %472 = vmatprep.subr.mxu0 0.0
  %473 = vmatpush1.msra.mxu0 %v377
  %474 = vmatprep.subr.mxu0 0.0
  %475 = vmatpush1.msra.mxu0 %v378
  %476 = vmatprep.subr.mxu0 0.0
  %477 = vmatpush1.msra.mxu0 %v379
  %478 = vmatprep.mubr.f32.mxu0 %v18
  %479 = vmatmul.mubr.f32.gmra.mrb[0].mxu0 %v17
  %v480 = vpop.f32.mrb[0].mxu0
  %v481 = vadd.f32 %v108, %v480
  %v482 = vpop.f32.mrb[0].mxu0
  %483 = vmatprep.mubr.f32.mxu0 %v22
  %484 = vmatmul.mubr.f32.gmra.mrb[0].mxu0 %v21
  %v485 = vpop.f32.mrb[0].mxu0
  %v486 = vadd.f32 %v113, %v485
  %v487 = vpop.f32.mrb[0].mxu0
  %488 = vmatprep.mubr.f32.mxu0 %v26
  %489 = vmatmul.mubr.f32.gmra.mrb[0].mxu0 %v25
  %v490 = vpop.f32.mrb[0].mxu0
  %v491 = vadd.f32 %v118, %v490
  %v492 = vpop.f32.mrb[0].mxu0
  %493 = vmatprep.mubr.f32.mxu0 %v30
  %494 = vmatmul.mubr.f32.gmra.mrb[0].mxu0 %v29
  %v495 = vpop.f32.mrb[0].mxu0
  %v496 = vadd.f32 %v123, %v495
  %v497 = vpop.f32.mrb[0].mxu0
  %498 = vmatprep.mubr.f32.mxu0 %v34
  %499 = vmatmul.mubr.f32.gmra.mrb[0].mxu0 %v33
  %v500 = vpop.f32.mrb[0].mxu0
  %v501 = vadd.f32 %v128, %v500
  %v502 = vpop.f32.mrb[0].mxu0
  %503 = vdwg.mxu0
  %504 = vmatprep.subr.mxu0 0.0
  %505 = vmatpush1.msra.mxu0 %v380
  %506 = vmatprep.subr.mxu0 0.0
  %507 = vmatpush1.msra.mxu0 %v381
  %508 = vmatprep.subr.mxu0 0.0
  %509 = vmatpush1.msra.mxu0 %v382
  %510 = vmatprep.subr.mxu0 0.0
  %511 = vmatpush1.msra.mxu0 %v383
  %512 = vmatprep.subr.mxu0 0.0
  %513 = vmatpush1.msra.mxu0 %v384
  %514 = vmatprep.subr.mxu0 0.0
  %515 = vmatpush1.msra.mxu0 %v385
  %516 = vmatprep.subr.mxu0 0.0
  %517 = vmatpush1.msra.mxu0 %v386
  %518 = vmatprep.subr.mxu0 0.0
  %519 = vmatpush1.msra.mxu0 %v387
  %520 = vmatprep.subr.mxu0 0.0
  %521 = vmatpush1.msra.mxu0 %v388
  %522 = vmatprep.subr.mxu0 0.0
  %523 = vmatpush1.msra.mxu0 %v389
  %524 = vmatprep.subr.mxu0 0.0
  %525 = vmatpush1.msra.mxu0 %v390
  %526 = vmatprep.subr.mxu0 0.0
  %527 = vmatpush1.msra.mxu0 %v391
  %528 = vmatprep.subr.mxu0 0.0
  %529 = vmatpush1.msra.mxu0 %v392
  %530 = vmatprep.subr.mxu0 0.0
  %531 = vmatpush1.msra.mxu0 %v393
  %532 = vmatprep.subr.mxu0 0.0
  %533 = vmatpush1.msra.mxu0 %v394
  %534 = vmatprep.subr.mxu0 0.0
  %535 = vmatpush1.msra.mxu0 %v395
  %536 = vmatprep.subr.mxu0 0.0
  %537 = vmatpush1.msra.mxu0 %v396
  %538 = vmatprep.subr.mxu0 0.0
  %539 = vmatpush1.msra.mxu0 %v397
  %540 = vmatprep.subr.mxu0 0.0
  %541 = vmatpush1.msra.mxu0 %v398
  %542 = vmatprep.subr.mxu0 0.0
  %543 = vmatpush1.msra.mxu0 %v399
  %544 = vmatprep.subr.mxu0 0.0
  %545 = vmatpush1.msra.mxu0 %v400
  %546 = vmatprep.subr.mxu0 0.0
  %547 = vmatpush1.msra.mxu0 %v401
  %548 = vmatprep.subr.mxu0 0.0
  %549 = vmatpush1.msra.mxu0 %v402
  %550 = vmatprep.subr.mxu0 0.0
  %551 = vmatpush1.msra.mxu0 %v403
  %552 = vmatprep.subr.mxu0 0.0
  %553 = vmatpush1.msra.mxu0 %v404
  %554 = vmatprep.subr.mxu0 0.0
  %555 = vmatpush1.msra.mxu0 %v405
  %556 = vmatprep.subr.mxu0 0.0
  %557 = vmatpush1.msra.mxu0 %v406
  %558 = vmatprep.subr.mxu0 0.0
  %559 = vmatpush1.msra.mxu0 %v407
  %560 = vmatprep.subr.mxu0 0.0
  %561 = vmatpush1.msra.mxu0 %v408
  %562 = vmatprep.subr.mxu0 0.0
  %563 = vmatpush1.msra.mxu0 %v409
  %564 = vmatprep.subr.mxu0 0.0
  %565 = vmatpush1.msra.mxu0 %v412
  %566 = vmatprep.subr.mxu0 0.0
  %567 = vmatpush1.msra.mxu0 0.0
  %568 = vmatprep.mubr.f32.mxu0 %v132
  %569 = vmatmul.mubr.f32.gmra.mrb[0].mxu0 %v19
  %v570 = vpop.f32.mrb[0].mxu0
  %v571 = vadd.f32 %v481, %v570
  %v572 = vpop.f32.mrb[0].mxu0
  %573 = vmatprep.mubr.f32.mxu0 %v135
  %574 = vmatmul.mubr.f32.gmra.mrb[0].mxu0 %v23
  %v575 = vpop.f32.mrb[0].mxu0
  %v576 = vadd.f32 %v486, %v575
  %v577 = vpop.f32.mrb[0].mxu0
  %578 = vmatprep.mubr.f32.mxu0 %v138
  %579 = vmatmul.mubr.f32.gmra.mrb[0].mxu0 %v27
  %v580 = vpop.f32.mrb[0].mxu0
  %v581 = vadd.f32 %v491, %v580
  %v582 = vpop.f32.mrb[0].mxu0
  %583 = vmatprep.mubr.f32.mxu0 %v141
  %584 = vmatmul.mubr.f32.gmra.mrb[0].mxu0 %v31
  %v585 = vpop.f32.mrb[0].mxu0
  %v586 = vadd.f32 %v496, %v585
  %v587 = vpop.f32.mrb[0].mxu0
  %588 = vmatprep.mubr.f32.mxu0 %v144
  %589 = vmatmul.mubr.f32.gmra.mrb[0].mxu0 %v35
  %v590 = vpop.f32.mrb[0].mxu0
  %v591 = vadd.f32 %v501, %v590
  %v592 = vpop.f32.mrb[0].mxu0
  %593 = vdwg.mxu0
  %v594 = vmax.f32 %v571, 0.0
  %v595 = vmax.f32 %v576, 0.0
  %v596 = vmax.f32 %v581, 0.0
  %v597 = vmax.f32 %v586, 0.0
  %v598 = vmax.f32 %v591, 0.0
  %s599 = scalar_lea.vmem %s3, 1
  %v600 = vld [vmem:[%s599] sm:$0x1]
  %v602 = vlaneseq
  %v603 = vshrl.u32 %v602, 7
  %v604 = vsub.s32 0, %v603
  %v605 = vrot.slane %v600, %v604
  %v607 = vmul.f32 %v594, %v605
  %v608 = vmul.f32 %v595, %v605
  %v609 = vmul.f32 %v596, %v605
  %v610 = vmul.f32 %v597, %v605
  %v611 = vmul.f32 %v598, %v605
  %v612 = vmax.f32 %v342, %v607
  %v613 = vmax.f32 %v343, %v608
  %v614 = vmax.f32 %v344, %v609
  %v615 = vmax.f32 %v345, %v610
  %v616 = vmax.f32 %v346, %v611
  %s617 = scalar_lea.vmem %s2, 1008
  %v618 = vld [vmem:[%s617] sm:$0xff]
  %v619 = vld [vmem:[%s617 + $0x8] sm:$0xff]
  %v620 = vld [vmem:[%s617 + $0x10] sm:$0xff]
  %v621 = vld [vmem:[%s617 + $0x18] sm:$0xff]
  %v622 = vld [vmem:[%s617 + $0x20] sm:$0xff]
  %v623 = vld [vmem:[%s617 + $0x28] sm:$0xff]
  %v624 = vld [vmem:[%s617 + $0x30] sm:$0xff]
  %v625 = vld [vmem:[%s617 + $0x38] sm:$0xff]
  %v626 = vld [vmem:[%s617 + $0x40] sm:$0xff]
  %v627 = vld [vmem:[%s617 + $0x48] sm:$0xff]
  %v628 = vld [vmem:[%s617 + $0x50] sm:$0xff]
  %v629 = vld [vmem:[%s617 + $0x58] sm:$0xff]
  %v630 = vld [vmem:[%s617 + $0x60] sm:$0xff]
  %v631 = vld [vmem:[%s617 + $0x68] sm:$0xff]
  %v632 = vld [vmem:[%s617 + $0x70] sm:$0xff]
  %v633 = vld [vmem:[%s617 + $0x78] sm:$0xff]
  %v634 = vld [vmem:[%s617 + $0x80] sm:$0xff]
  %v635 = vld [vmem:[%s617 + $0x88] sm:$0xff]
  %v636 = vld [vmem:[%s617 + $0x90] sm:$0xff]
  %v637 = vld [vmem:[%s617 + $0x98] sm:$0xff]
  %v638 = vld [vmem:[%s617 + $0xa0] sm:$0xff]
  %v639 = vld [vmem:[%s617 + $0xa8] sm:$0xff]
  %v640 = vld [vmem:[%s617 + $0xb0] sm:$0xff]
  %v641 = vld [vmem:[%s617 + $0xb8] sm:$0xff]
  %v642 = vld [vmem:[%s617 + $0xc0] sm:$0xff]
  %v643 = vld [vmem:[%s617 + $0xc8] sm:$0xff]
  %v644 = vld [vmem:[%s617 + $0xd0] sm:$0xff]
  %v645 = vld [vmem:[%s617 + $0xd8] sm:$0xff]
  %v646 = vld [vmem:[%s617 + $0xe0] sm:$0xff]
  %v647 = vld [vmem:[%s617 + $0xe8] sm:$0xff]
  %v648 = vld [vmem:[%s617 + $0xf0] sm:$0xff]
  %v649 = vld [vmem:[%s617 + $0xf8] sm:$0xff]
  %v650 = vld [vmem:[%s617 + $0x100] sm:$0xff]
  %v651 = vld [vmem:[%s617 + $0x108] sm:$0xff]
  %v652 = vld [vmem:[%s617 + $0x110] sm:$0xff]
  %v653 = vld [vmem:[%s617 + $0x118] sm:$0xff]
  %v654 = vld [vmem:[%s617 + $0x120] sm:$0xff]
  %v655 = vld [vmem:[%s617 + $0x128] sm:$0xff]
  %v656 = vld [vmem:[%s617 + $0x130] sm:$0xff]
  %v657 = vld [vmem:[%s617 + $0x138] sm:$0xff]
  %v658 = vld [vmem:[%s617 + $0x140] sm:$0xff]
  %v659 = vld [vmem:[%s617 + $0x148] sm:$0xff]
  %v660 = vld [vmem:[%s617 + $0x150] sm:$0xff]
  %v661 = vld [vmem:[%s617 + $0x158] sm:$0xff]
  %v662 = vld [vmem:[%s617 + $0x160] sm:$0xff]
  %v663 = vld [vmem:[%s617 + $0x168] sm:$0xff]
  %v664 = vld [vmem:[%s617 + $0x170] sm:$0xff]
  %v665 = vld [vmem:[%s617 + $0x178] sm:$0xff]
  %v666 = vld [vmem:[%s617 + $0x180] sm:$0xff]
  %v667 = vld [vmem:[%s617 + $0x188] sm:$0xff]
  %v668 = vld [vmem:[%s617 + $0x190] sm:$0xff]
  %v669 = vld [vmem:[%s617 + $0x198] sm:$0xff]
  %v670 = vld [vmem:[%s617 + $0x1a0] sm:$0xff]
  %v671 = vld [vmem:[%s617 + $0x1a8] sm:$0xff]
  %v672 = vld [vmem:[%s617 + $0x1b0] sm:$0xff]
  %v673 = vld [vmem:[%s617 + $0x1b8] sm:$0xff]
  %v674 = vld [vmem:[%s617 + $0x1c0] sm:$0xff]
  %v675 = vld [vmem:[%s617 + $0x1c8] sm:$0xff]
  %v676 = vld [vmem:[%s617 + $0x1d0] sm:$0xff]
  %v677 = vld [vmem:[%s617 + $0x1d8] sm:$0xff]
  %v678 = vld [vmem:[%s617 + $0x1e0] sm:$0xff]
  %v679 = vld [vmem:[%s617 + $0x1e8] sm:$0xff]
  %v680 = vld [vmem:[%s617 + $0x1f0] sm:$0xf]
  %v682 = vsel %vm146, %v680, 0
  %684 = vmatprep.subr.mxu0 0.0
  %685 = vmatpush1.msra.mxu0 %v618
  %686 = vmatprep.subr.mxu0 0.0
  %687 = vmatpush1.msra.mxu0 %v619
  %688 = vmatprep.subr.mxu0 0.0
  %689 = vmatpush1.msra.mxu0 %v620
  %690 = vmatprep.subr.mxu0 0.0
  %691 = vmatpush1.msra.mxu0 %v621
  %692 = vmatprep.subr.mxu0 0.0
  %693 = vmatpush1.msra.mxu0 %v622
  %694 = vmatprep.subr.mxu0 0.0
  %695 = vmatpush1.msra.mxu0 %v623
  %696 = vmatprep.subr.mxu0 0.0
  %697 = vmatpush1.msra.mxu0 %v624
  %698 = vmatprep.subr.mxu0 0.0
  %699 = vmatpush1.msra.mxu0 %v625
  %700 = vmatprep.subr.mxu0 0.0
  %701 = vmatpush1.msra.mxu0 %v626
  %702 = vmatprep.subr.mxu0 0.0
  %703 = vmatpush1.msra.mxu0 %v627
  %704 = vmatprep.subr.mxu0 0.0
  %705 = vmatpush1.msra.mxu0 %v628
  %706 = vmatprep.subr.mxu0 0.0
  %707 = vmatpush1.msra.mxu0 %v629
  %708 = vmatprep.subr.mxu0 0.0
  %709 = vmatpush1.msra.mxu0 %v630
  %710 = vmatprep.subr.mxu0 0.0
  %711 = vmatpush1.msra.mxu0 %v631
  %712 = vmatprep.subr.mxu0 0.0
  %713 = vmatpush1.msra.mxu0 %v632
  %714 = vmatprep.subr.mxu0 0.0
  %715 = vmatpush1.msra.mxu0 %v633
  %716 = vmatprep.subr.mxu0 0.0
  %717 = vmatpush1.msra.mxu0 %v634
  %718 = vmatprep.subr.mxu0 0.0
  %719 = vmatpush1.msra.mxu0 %v635
  %720 = vmatprep.subr.mxu0 0.0
  %721 = vmatpush1.msra.mxu0 %v636
  %722 = vmatprep.subr.mxu0 0.0
  %723 = vmatpush1.msra.mxu0 %v637
  %724 = vmatprep.subr.mxu0 0.0
  %725 = vmatpush1.msra.mxu0 %v638
  %726 = vmatprep.subr.mxu0 0.0
  %727 = vmatpush1.msra.mxu0 %v639
  %728 = vmatprep.subr.mxu0 0.0
  %729 = vmatpush1.msra.mxu0 %v640
  %730 = vmatprep.subr.mxu0 0.0
  %731 = vmatpush1.msra.mxu0 %v641
  %732 = vmatprep.subr.mxu0 0.0
  %733 = vmatpush1.msra.mxu0 %v642
  %734 = vmatprep.subr.mxu0 0.0
  %735 = vmatpush1.msra.mxu0 %v643
  %736 = vmatprep.subr.mxu0 0.0
  %737 = vmatpush1.msra.mxu0 %v644
  %738 = vmatprep.subr.mxu0 0.0
  %739 = vmatpush1.msra.mxu0 %v645
  %740 = vmatprep.subr.mxu0 0.0
  %741 = vmatpush1.msra.mxu0 %v646
  %742 = vmatprep.subr.mxu0 0.0
  %743 = vmatpush1.msra.mxu0 %v647
  %744 = vmatprep.subr.mxu0 0.0
  %745 = vmatpush1.msra.mxu0 %v648
  %746 = vmatprep.subr.mxu0 0.0
  %747 = vmatpush1.msra.mxu0 %v649
  %748 = vmatprep.mubr.f32.mxu0 %v18
  %749 = vmatmul.mubr.f32.gmra.mrb[0].mxu0 %v17
  %v750 = vpop.f32.mrb[0].mxu0
  %v751 = vadd.f32 %v108, %v750
  %v752 = vpop.f32.mrb[0].mxu0
  %753 = vmatprep.mubr.f32.mxu0 %v22
  %754 = vmatmul.mubr.f32.gmra.mrb[0].mxu0 %v21
  %v755 = vpop.f32.mrb[0].mxu0
  %v756 = vadd.f32 %v113, %v755
  %v757 = vpop.f32.mrb[0].mxu0
  %758 = vmatprep.mubr.f32.mxu0 %v26
  %759 = vmatmul.mubr.f32.gmra.mrb[0].mxu0 %v25
  %v760 = vpop.f32.mrb[0].mxu0
  %v761 = vadd.f32 %v118, %v760
  %v762 = vpop.f32.mrb[0].mxu0
  %763 = vmatprep.mubr.f32.mxu0 %v30
  %764 = vmatmul.mubr.f32.gmra.mrb[0].mxu0 %v29
  %v765 = vpop.f32.mrb[0].mxu0
  %v766 = vadd.f32 %v123, %v765
  %v767 = vpop.f32.mrb[0].mxu0
  %768 = vmatprep.mubr.f32.mxu0 %v34
  %769 = vmatmul.mubr.f32.gmra.mrb[0].mxu0 %v33
  %v770 = vpop.f32.mrb[0].mxu0
  %v771 = vadd.f32 %v128, %v770
  %v772 = vpop.f32.mrb[0].mxu0
  %773 = vdwg.mxu0
  %774 = vmatprep.subr.mxu0 0.0
  %775 = vmatpush1.msra.mxu0 %v650
  %776 = vmatprep.subr.mxu0 0.0
  %777 = vmatpush1.msra.mxu0 %v651
  %778 = vmatprep.subr.mxu0 0.0
  %779 = vmatpush1.msra.mxu0 %v652
  %780 = vmatprep.subr.mxu0 0.0
  %781 = vmatpush1.msra.mxu0 %v653
  %782 = vmatprep.subr.mxu0 0.0
  %783 = vmatpush1.msra.mxu0 %v654
  %784 = vmatprep.subr.mxu0 0.0
  %785 = vmatpush1.msra.mxu0 %v655
  %786 = vmatprep.subr.mxu0 0.0
  %787 = vmatpush1.msra.mxu0 %v656
  %788 = vmatprep.subr.mxu0 0.0
  %789 = vmatpush1.msra.mxu0 %v657
  %790 = vmatprep.subr.mxu0 0.0
  %791 = vmatpush1.msra.mxu0 %v658
  %792 = vmatprep.subr.mxu0 0.0
  %793 = vmatpush1.msra.mxu0 %v659
  %794 = vmatprep.subr.mxu0 0.0
  %795 = vmatpush1.msra.mxu0 %v660
  %796 = vmatprep.subr.mxu0 0.0
  %797 = vmatpush1.msra.mxu0 %v661
  %798 = vmatprep.subr.mxu0 0.0
  %799 = vmatpush1.msra.mxu0 %v662
  %800 = vmatprep.subr.mxu0 0.0
  %801 = vmatpush1.msra.mxu0 %v663
  %802 = vmatprep.subr.mxu0 0.0
  %803 = vmatpush1.msra.mxu0 %v664
  %804 = vmatprep.subr.mxu0 0.0
  %805 = vmatpush1.msra.mxu0 %v665
  %806 = vmatprep.subr.mxu0 0.0
  %807 = vmatpush1.msra.mxu0 %v666
  %808 = vmatprep.subr.mxu0 0.0
  %809 = vmatpush1.msra.mxu0 %v667
  %810 = vmatprep.subr.mxu0 0.0
  %811 = vmatpush1.msra.mxu0 %v668
  %812 = vmatprep.subr.mxu0 0.0
  %813 = vmatpush1.msra.mxu0 %v669
  %814 = vmatprep.subr.mxu0 0.0
  %815 = vmatpush1.msra.mxu0 %v670
  %816 = vmatprep.subr.mxu0 0.0
  %817 = vmatpush1.msra.mxu0 %v671
  %818 = vmatprep.subr.mxu0 0.0
  %819 = vmatpush1.msra.mxu0 %v672
  %820 = vmatprep.subr.mxu0 0.0
  %821 = vmatpush1.msra.mxu0 %v673
  %822 = vmatprep.subr.mxu0 0.0
  %823 = vmatpush1.msra.mxu0 %v674
  %824 = vmatprep.subr.mxu0 0.0
  %825 = vmatpush1.msra.mxu0 %v675
  %826 = vmatprep.subr.mxu0 0.0
  %827 = vmatpush1.msra.mxu0 %v676
  %828 = vmatprep.subr.mxu0 0.0
  %829 = vmatpush1.msra.mxu0 %v677
  %830 = vmatprep.subr.mxu0 0.0
  %831 = vmatpush1.msra.mxu0 %v678
  %832 = vmatprep.subr.mxu0 0.0
  %833 = vmatpush1.msra.mxu0 %v679
  %834 = vmatprep.subr.mxu0 0.0
  %835 = vmatpush1.msra.mxu0 %v682
  %836 = vmatprep.subr.mxu0 0.0
  %837 = vmatpush1.msra.mxu0 0.0
  %838 = vmatprep.mubr.f32.mxu0 %v132
  %839 = vmatmul.mubr.f32.gmra.mrb[0].mxu0 %v19
  %v840 = vpop.f32.mrb[0].mxu0
  %v841 = vadd.f32 %v751, %v840
  %v842 = vpop.f32.mrb[0].mxu0
  %843 = vmatprep.mubr.f32.mxu0 %v135
  %844 = vmatmul.mubr.f32.gmra.mrb[0].mxu0 %v23
  %v845 = vpop.f32.mrb[0].mxu0
  %v846 = vadd.f32 %v756, %v845
  %v847 = vpop.f32.mrb[0].mxu0
  %848 = vmatprep.mubr.f32.mxu0 %v138
  %849 = vmatmul.mubr.f32.gmra.mrb[0].mxu0 %v27
  %v850 = vpop.f32.mrb[0].mxu0
  %v851 = vadd.f32 %v761, %v850
  %v852 = vpop.f32.mrb[0].mxu0
  %853 = vmatprep.mubr.f32.mxu0 %v141
  %854 = vmatmul.mubr.f32.gmra.mrb[0].mxu0 %v31
  %v855 = vpop.f32.mrb[0].mxu0
  %v856 = vadd.f32 %v766, %v855
  %v857 = vpop.f32.mrb[0].mxu0
  %858 = vmatprep.mubr.f32.mxu0 %v144
  %859 = vmatmul.mubr.f32.gmra.mrb[0].mxu0 %v35
  %v860 = vpop.f32.mrb[0].mxu0
  %v861 = vadd.f32 %v771, %v860
  %v862 = vpop.f32.mrb[0].mxu0
  %863 = vdwg.mxu0
  %v864 = vmax.f32 %v841, 0.0
  %v865 = vmax.f32 %v846, 0.0
  %v866 = vmax.f32 %v851, 0.0
  %v867 = vmax.f32 %v856, 0.0
  %v868 = vmax.f32 %v861, 0.0
  %s869 = scalar_lea.vmem %s3, 2
  %v870 = vld [vmem:[%s869] sm:$0x1]
  %v872 = vlaneseq
  %v873 = vshrl.u32 %v872, 7
  %v874 = vsub.s32 0, %v873
  %v875 = vrot.slane %v870, %v874
  %v877 = vmul.f32 %v864, %v875
  %v878 = vmul.f32 %v865, %v875
  %v879 = vmul.f32 %v866, %v875
  %v880 = vmul.f32 %v867, %v875
  %v881 = vmul.f32 %v868, %v875
  %v882 = vmax.f32 %v612, %v877
  %v883 = vmax.f32 %v613, %v878
  %v884 = vmax.f32 %v614, %v879
  %v885 = vmax.f32 %v615, %v880
  %v886 = vmax.f32 %v616, %v881
  %s887 = scalar_lea.vmem %s2, 1512
  %v888 = vld [vmem:[%s887] sm:$0xff]
  %v889 = vld [vmem:[%s887 + $0x8] sm:$0xff]
  %v890 = vld [vmem:[%s887 + $0x10] sm:$0xff]
  %v891 = vld [vmem:[%s887 + $0x18] sm:$0xff]
  %v892 = vld [vmem:[%s887 + $0x20] sm:$0xff]
  %v893 = vld [vmem:[%s887 + $0x28] sm:$0xff]
  %v894 = vld [vmem:[%s887 + $0x30] sm:$0xff]
  %v895 = vld [vmem:[%s887 + $0x38] sm:$0xff]
  %v896 = vld [vmem:[%s887 + $0x40] sm:$0xff]
  %v897 = vld [vmem:[%s887 + $0x48] sm:$0xff]
  %v898 = vld [vmem:[%s887 + $0x50] sm:$0xff]
  %v899 = vld [vmem:[%s887 + $0x58] sm:$0xff]
  %v900 = vld [vmem:[%s887 + $0x60] sm:$0xff]
  %v901 = vld [vmem:[%s887 + $0x68] sm:$0xff]
  %v902 = vld [vmem:[%s887 + $0x70] sm:$0xff]
  %v903 = vld [vmem:[%s887 + $0x78] sm:$0xff]
  %v904 = vld [vmem:[%s887 + $0x80] sm:$0xff]
  %v905 = vld [vmem:[%s887 + $0x88] sm:$0xff]
  %v906 = vld [vmem:[%s887 + $0x90] sm:$0xff]
  %v907 = vld [vmem:[%s887 + $0x98] sm:$0xff]
  %v908 = vld [vmem:[%s887 + $0xa0] sm:$0xff]
  %v909 = vld [vmem:[%s887 + $0xa8] sm:$0xff]
  %v910 = vld [vmem:[%s887 + $0xb0] sm:$0xff]
  %v911 = vld [vmem:[%s887 + $0xb8] sm:$0xff]
  %v912 = vld [vmem:[%s887 + $0xc0] sm:$0xff]
  %v913 = vld [vmem:[%s887 + $0xc8] sm:$0xff]
  %v914 = vld [vmem:[%s887 + $0xd0] sm:$0xff]
  %v915 = vld [vmem:[%s887 + $0xd8] sm:$0xff]
  %v916 = vld [vmem:[%s887 + $0xe0] sm:$0xff]
  %v917 = vld [vmem:[%s887 + $0xe8] sm:$0xff]
  %v918 = vld [vmem:[%s887 + $0xf0] sm:$0xff]
  %v919 = vld [vmem:[%s887 + $0xf8] sm:$0xff]
  %v920 = vld [vmem:[%s887 + $0x100] sm:$0xff]
  %v921 = vld [vmem:[%s887 + $0x108] sm:$0xff]
  %v922 = vld [vmem:[%s887 + $0x110] sm:$0xff]
  %v923 = vld [vmem:[%s887 + $0x118] sm:$0xff]
  %v924 = vld [vmem:[%s887 + $0x120] sm:$0xff]
  %v925 = vld [vmem:[%s887 + $0x128] sm:$0xff]
  %v926 = vld [vmem:[%s887 + $0x130] sm:$0xff]
  %v927 = vld [vmem:[%s887 + $0x138] sm:$0xff]
  %v928 = vld [vmem:[%s887 + $0x140] sm:$0xff]
  %v929 = vld [vmem:[%s887 + $0x148] sm:$0xff]
  %v930 = vld [vmem:[%s887 + $0x150] sm:$0xff]
  %v931 = vld [vmem:[%s887 + $0x158] sm:$0xff]
  %v932 = vld [vmem:[%s887 + $0x160] sm:$0xff]
  %v933 = vld [vmem:[%s887 + $0x168] sm:$0xff]
  %v934 = vld [vmem:[%s887 + $0x170] sm:$0xff]
  %v935 = vld [vmem:[%s887 + $0x178] sm:$0xff]
  %v936 = vld [vmem:[%s887 + $0x180] sm:$0xff]
  %v937 = vld [vmem:[%s887 + $0x188] sm:$0xff]
  %v938 = vld [vmem:[%s887 + $0x190] sm:$0xff]
  %v939 = vld [vmem:[%s887 + $0x198] sm:$0xff]
  %v940 = vld [vmem:[%s887 + $0x1a0] sm:$0xff]
  %v941 = vld [vmem:[%s887 + $0x1a8] sm:$0xff]
  %v942 = vld [vmem:[%s887 + $0x1b0] sm:$0xff]
  %v943 = vld [vmem:[%s887 + $0x1b8] sm:$0xff]
  %v944 = vld [vmem:[%s887 + $0x1c0] sm:$0xff]
  %v945 = vld [vmem:[%s887 + $0x1c8] sm:$0xff]
  %v946 = vld [vmem:[%s887 + $0x1d0] sm:$0xff]
  %v947 = vld [vmem:[%s887 + $0x1d8] sm:$0xff]
  %v948 = vld [vmem:[%s887 + $0x1e0] sm:$0xff]
  %v949 = vld [vmem:[%s887 + $0x1e8] sm:$0xff]
  %v950 = vld [vmem:[%s887 + $0x1f0] sm:$0xf]
  %v952 = vsel %vm146, %v950, 0
  %954 = vmatprep.subr.mxu0 0.0
  %955 = vmatpush1.msra.mxu0 %v888
  %956 = vmatprep.subr.mxu0 0.0
  %957 = vmatpush1.msra.mxu0 %v889
  %958 = vmatprep.subr.mxu0 0.0
  %959 = vmatpush1.msra.mxu0 %v890
  %960 = vmatprep.subr.mxu0 0.0
  %961 = vmatpush1.msra.mxu0 %v891
  %962 = vmatprep.subr.mxu0 0.0
  %963 = vmatpush1.msra.mxu0 %v892
  %964 = vmatprep.subr.mxu0 0.0
  %965 = vmatpush1.msra.mxu0 %v893
  %966 = vmatprep.subr.mxu0 0.0
  %967 = vmatpush1.msra.mxu0 %v894
  %968 = vmatprep.subr.mxu0 0.0
  %969 = vmatpush1.msra.mxu0 %v895
  %970 = vmatprep.subr.mxu0 0.0
  %971 = vmatpush1.msra.mxu0 %v896
  %972 = vmatprep.subr.mxu0 0.0
  %973 = vmatpush1.msra.mxu0 %v897
  %974 = vmatprep.subr.mxu0 0.0
  %975 = vmatpush1.msra.mxu0 %v898
  %976 = vmatprep.subr.mxu0 0.0
  %977 = vmatpush1.msra.mxu0 %v899
  %978 = vmatprep.subr.mxu0 0.0
  %979 = vmatpush1.msra.mxu0 %v900
  %980 = vmatprep.subr.mxu0 0.0
  %981 = vmatpush1.msra.mxu0 %v901
  %982 = vmatprep.subr.mxu0 0.0
  %983 = vmatpush1.msra.mxu0 %v902
  %984 = vmatprep.subr.mxu0 0.0
  %985 = vmatpush1.msra.mxu0 %v903
  %986 = vmatprep.subr.mxu0 0.0
  %987 = vmatpush1.msra.mxu0 %v904
  %988 = vmatprep.subr.mxu0 0.0
  %989 = vmatpush1.msra.mxu0 %v905
  %990 = vmatprep.subr.mxu0 0.0
  %991 = vmatpush1.msra.mxu0 %v906
  %992 = vmatprep.subr.mxu0 0.0
  %993 = vmatpush1.msra.mxu0 %v907
  %994 = vmatprep.subr.mxu0 0.0
  %995 = vmatpush1.msra.mxu0 %v908
  %996 = vmatprep.subr.mxu0 0.0
  %997 = vmatpush1.msra.mxu0 %v909
  %998 = vmatprep.subr.mxu0 0.0
  %999 = vmatpush1.msra.mxu0 %v910
  %1000 = vmatprep.subr.mxu0 0.0
  %1001 = vmatpush1.msra.mxu0 %v911
  %1002 = vmatprep.subr.mxu0 0.0
  %1003 = vmatpush1.msra.mxu0 %v912
  %1004 = vmatprep.subr.mxu0 0.0
  %1005 = vmatpush1.msra.mxu0 %v913
  %1006 = vmatprep.subr.mxu0 0.0
  %1007 = vmatpush1.msra.mxu0 %v914
  %1008 = vmatprep.subr.mxu0 0.0
  %1009 = vmatpush1.msra.mxu0 %v915
  %1010 = vmatprep.subr.mxu0 0.0
  %1011 = vmatpush1.msra.mxu0 %v916
  %1012 = vmatprep.subr.mxu0 0.0
  %1013 = vmatpush1.msra.mxu0 %v917
  %1014 = vmatprep.subr.mxu0 0.0
  %1015 = vmatpush1.msra.mxu0 %v918
  %1016 = vmatprep.subr.mxu0 0.0
  %1017 = vmatpush1.msra.mxu0 %v919
  %1018 = vmatprep.mubr.f32.mxu0 %v18
  %1019 = vmatmul.mubr.f32.gmra.mrb[0].mxu0 %v17
  %v1020 = vpop.f32.mrb[0].mxu0
  %v1021 = vadd.f32 %v108, %v1020
  %v1022 = vpop.f32.mrb[0].mxu0
  %1023 = vmatprep.mubr.f32.mxu0 %v22
  %1024 = vmatmul.mubr.f32.gmra.mrb[0].mxu0 %v21
  %v1025 = vpop.f32.mrb[0].mxu0
  %v1026 = vadd.f32 %v113, %v1025
  %v1027 = vpop.f32.mrb[0].mxu0
  %1028 = vmatprep.mubr.f32.mxu0 %v26
  %1029 = vmatmul.mubr.f32.gmra.mrb[0].mxu0 %v25
  %v1030 = vpop.f32.mrb[0].mxu0
  %v1031 = vadd.f32 %v118, %v1030
  %v1032 = vpop.f32.mrb[0].mxu0
  %1033 = vmatprep.mubr.f32.mxu0 %v30
  %1034 = vmatmul.mubr.f32.gmra.mrb[0].mxu0 %v29
  %v1035 = vpop.f32.mrb[0].mxu0
  %v1036 = vadd.f32 %v123, %v1035
  %v1037 = vpop.f32.mrb[0].mxu0
  %1038 = vmatprep.mubr.f32.mxu0 %v34
  %1039 = vmatmul.mubr.f32.gmra.mrb[0].mxu0 %v33
  %v1040 = vpop.f32.mrb[0].mxu0
  %v1041 = vadd.f32 %v128, %v1040
  %v1042 = vpop.f32.mrb[0].mxu0
  %1043 = vdwg.mxu0
  %1044 = vmatprep.subr.mxu0 0.0
  %1045 = vmatpush1.msra.mxu0 %v920
  %1046 = vmatprep.subr.mxu0 0.0
  %1047 = vmatpush1.msra.mxu0 %v921
  %1048 = vmatprep.subr.mxu0 0.0
  %1049 = vmatpush1.msra.mxu0 %v922
  %1050 = vmatprep.subr.mxu0 0.0
  %1051 = vmatpush1.msra.mxu0 %v923
  %1052 = vmatprep.subr.mxu0 0.0
  %1053 = vmatpush1.msra.mxu0 %v924
  %1054 = vmatprep.subr.mxu0 0.0
  %1055 = vmatpush1.msra.mxu0 %v925
  %1056 = vmatprep.subr.mxu0 0.0
  %1057 = vmatpush1.msra.mxu0 %v926
  %1058 = vmatprep.subr.mxu0 0.0
  %1059 = vmatpush1.msra.mxu0 %v927
  %1060 = vmatprep.subr.mxu0 0.0
  %1061 = vmatpush1.msra.mxu0 %v928
  %1062 = vmatprep.subr.mxu0 0.0
  %1063 = vmatpush1.msra.mxu0 %v929
  %1064 = vmatprep.subr.mxu0 0.0
  %1065 = vmatpush1.msra.mxu0 %v930
  %1066 = vmatprep.subr.mxu0 0.0
  %1067 = vmatpush1.msra.mxu0 %v931
  %1068 = vmatprep.subr.mxu0 0.0
  %1069 = vmatpush1.msra.mxu0 %v932
  %1070 = vmatprep.subr.mxu0 0.0
  %1071 = vmatpush1.msra.mxu0 %v933
  %1072 = vmatprep.subr.mxu0 0.0
  %1073 = vmatpush1.msra.mxu0 %v934
  %1074 = vmatprep.subr.mxu0 0.0
  %1075 = vmatpush1.msra.mxu0 %v935
  %1076 = vmatprep.subr.mxu0 0.0
  %1077 = vmatpush1.msra.mxu0 %v936
  %1078 = vmatprep.subr.mxu0 0.0
  %1079 = vmatpush1.msra.mxu0 %v937
  %1080 = vmatprep.subr.mxu0 0.0
  %1081 = vmatpush1.msra.mxu0 %v938
  %1082 = vmatprep.subr.mxu0 0.0
  %1083 = vmatpush1.msra.mxu0 %v939
  %1084 = vmatprep.subr.mxu0 0.0
  %1085 = vmatpush1.msra.mxu0 %v940
  %1086 = vmatprep.subr.mxu0 0.0
  %1087 = vmatpush1.msra.mxu0 %v941
  %1088 = vmatprep.subr.mxu0 0.0
  %1089 = vmatpush1.msra.mxu0 %v942
  %1090 = vmatprep.subr.mxu0 0.0
  %1091 = vmatpush1.msra.mxu0 %v943
  %1092 = vmatprep.subr.mxu0 0.0
  %1093 = vmatpush1.msra.mxu0 %v944
  %1094 = vmatprep.subr.mxu0 0.0
  %1095 = vmatpush1.msra.mxu0 %v945
  %1096 = vmatprep.subr.mxu0 0.0
  %1097 = vmatpush1.msra.mxu0 %v946
  %1098 = vmatprep.subr.mxu0 0.0
  %1099 = vmatpush1.msra.mxu0 %v947
  %1100 = vmatprep.subr.mxu0 0.0
  %1101 = vmatpush1.msra.mxu0 %v948
  %1102 = vmatprep.subr.mxu0 0.0
  %1103 = vmatpush1.msra.mxu0 %v949
  %1104 = vmatprep.subr.mxu0 0.0
  %1105 = vmatpush1.msra.mxu0 %v952
  %1106 = vmatprep.subr.mxu0 0.0
  %1107 = vmatpush1.msra.mxu0 0.0
  %1108 = vmatprep.mubr.f32.mxu0 %v132
  %1109 = vmatmul.mubr.f32.gmra.mrb[0].mxu0 %v19
  %v1110 = vpop.f32.mrb[0].mxu0
  %v1111 = vadd.f32 %v1021, %v1110
  %v1112 = vpop.f32.mrb[0].mxu0
  %1113 = vmatprep.mubr.f32.mxu0 %v135
  %1114 = vmatmul.mubr.f32.gmra.mrb[0].mxu0 %v23
  %v1115 = vpop.f32.mrb[0].mxu0
  %v1116 = vadd.f32 %v1026, %v1115
  %v1117 = vpop.f32.mrb[0].mxu0
  %1118 = vmatprep.mubr.f32.mxu0 %v138
  %1119 = vmatmul.mubr.f32.gmra.mrb[0].mxu0 %v27
  %v1120 = vpop.f32.mrb[0].mxu0
  %v1121 = vadd.f32 %v1031, %v1120
  %v1122 = vpop.f32.mrb[0].mxu0
  %1123 = vmatprep.mubr.f32.mxu0 %v141
  %1124 = vmatmul.mubr.f32.gmra.mrb[0].mxu0 %v31
  %v1125 = vpop.f32.mrb[0].mxu0
  %v1126 = vadd.f32 %v1036, %v1125
  %v1127 = vpop.f32.mrb[0].mxu0
  %1128 = vmatprep.mubr.f32.mxu0 %v144
  %1129 = vmatmul.mubr.f32.gmra.mrb[0].mxu0 %v35
  %v1130 = vpop.f32.mrb[0].mxu0
  %v1131 = vadd.f32 %v1041, %v1130
  %v1132 = vpop.f32.mrb[0].mxu0
  %1133 = vdwg.mxu0
  %v1134 = vmax.f32 %v1111, 0.0
  %v1135 = vmax.f32 %v1116, 0.0
  %v1136 = vmax.f32 %v1121, 0.0
  %v1137 = vmax.f32 %v1126, 0.0
  %v1138 = vmax.f32 %v1131, 0.0
  %s1139 = scalar_lea.vmem %s3, 3
  %v1140 = vld [vmem:[%s1139] sm:$0x1]
  %v1142 = vlaneseq
  %v1143 = vshrl.u32 %v1142, 7
  %v1144 = vsub.s32 0, %v1143
  %v1145 = vrot.slane %v1140, %v1144
  %v1147 = vmul.f32 %v1134, %v1145
  %v1148 = vmul.f32 %v1135, %v1145
  %v1149 = vmul.f32 %v1136, %v1145
  %v1150 = vmul.f32 %v1137, %v1145
  %v1151 = vmul.f32 %v1138, %v1145
  %v1152 = vmax.f32 %v882, %v1147
  %v1153 = vmax.f32 %v883, %v1148
  %v1154 = vmax.f32 %v884, %v1149
  %v1155 = vmax.f32 %v885, %v1150
  %v1156 = vmax.f32 %v886, %v1151
  %vm1157 = vcmask 261120
  %1158 = vst.msk [vmem:[%s4] sm:$0xff] %vm1157, %v1152
  %1159 = vst.msk [vmem:[%s4 + $0x8] sm:$0xff] %vm1157, %v1153
  %1160 = vst.msk [vmem:[%s4 + $0x10] sm:$0xff] %vm1157, %v1154
  %1161 = vst.msk [vmem:[%s4 + $0x18] sm:$0xff] %vm1157, %v1155
  %1162 = vst.msk [vmem:[%s4 + $0x20] sm:$0xff] %vm1157, %v1156
  // Predicated region
  $region18: #{cnn_forward.6} parent=0 // pred_check
    _
  $region19: #{cnn_forward.6} parent=0 // pred_check_branch
    %1164 = sbr.rel (0) target = $region21
  $region20: #{cnn_forward.6} parent=0 // pred_region
    _
  $region21: #{cnn_forward.6} parent=0 // pred_fallthru
    _
  // Predicated region
  $region22: #{cnn_forward.6} parent=0 // pred_check
    _
  $region23: #{cnn_forward.6} parent=0 // pred_check_branch
    %1166 = sbr.rel (0) target = $region25
  $region24: #{cnn_forward.6} parent=0 // pred_region
    _
  $region25: #{cnn_forward.6} parent=0 // pred_fallthru
    _

// kernel: cnn_forward.7
$region0: #{cnn_forward.7}
  #allocation0 [shape = 'u32[]', space=smem, size = 0x4, offset = 0x4, fixed_abs, tag = 'smem constant byte address 0x4 - core index']
  #allocation1 [shape = 'u32[144,128]{1,0:T(1,128)}', space=vmem, size = 0x12000, scoped, tag = 'internal scratch']
  %s0 = inlined_call_operand.vmem [shape: f32[2,640], index: 0, kind: input, shape index: {}]
  %s1 = inlined_call_operand.vmem [shape: f32[640,40], index: 1, kind: input, shape index: {}]
  %s2 = inlined_call_operand.vmem [shape: f32[1,40], index: 2, kind: input, shape index: {}]
  %s3 = inlined_call_operand.hbm [shape: f32[2,40], index: 3, kind: output, shape index: {}]
  %s4 = sld [smem:[#allocation0]]
  $region22: #{cnn_forward.7} parent=0
    _
  %s6 = ssub.s32 1, %s4
  %s7 = scalar_select 0, %s6, %s4
  $region1: #{cnn_forward.7} parent=0
    #allocation2 [shape = 'u8[1024]{0}', space=vmem, size = 0x400, scoped, tag = 'output window, operand 0, single buffered']
    #allocation3 [shape = 's32[1]{0}', space=sflag, size = 0x4, scoped, tag = 'scoped memory for cnn_forward.7']
    %8 = vsyncpa [#allocation3], 0
    // Predicated region
    $region2: #{cnn_forward.7} parent=1 // pred_check
      _
    $region3: #{cnn_forward.7} parent=1 // pred_check_branch
      %10 = sbr.rel (0) target = $region5
    $region4: #{cnn_forward.7} parent=1 // pred_region
      _
    $region5: #{cnn_forward.7} parent=1 // pred_fallthru
      _
    // Predicated region
    $region6: #{cnn_forward.7} parent=1 // pred_check
      _
    $region7: #{cnn_forward.7} parent=1 // pred_check_branch
      %12 = sbr.rel (0) target = $region9
    $region8: #{cnn_forward.7} parent=1 // pred_region
      _
    $region9: #{cnn_forward.7} parent=1 // pred_fallthru
      _
    // Predicated region
    $region10: #{cnn_forward.7} parent=1 // pred_check
      _
    $region11: #{cnn_forward.7} parent=1 // pred_check_branch
      %14 = sbr.rel (0) target = $region13
    $region12: #{cnn_forward.7} parent=1 // pred_region
      _
    $region13: #{cnn_forward.7} parent=1 // pred_fallthru
      _
    %v15 = vld [vmem:[%s0] sm:$0xff]
    %v16 = vld [vmem:[%s0 + $0x8] sm:$0x3]
    %v17 = vld [vmem:[%s1] sm:$0xff]
    %v18 = vld [vmem:[%s1 + $0x8] sm:$0xff]
    %v19 = vld [vmem:[%s1 + $0x10] sm:$0xff]
    %v20 = vld [vmem:[%s1 + $0x18] sm:$0xff]
    %v21 = vld [vmem:[%s1 + $0x20] sm:$0xff]
    %v22 = vld [vmem:[%s1 + $0x28] sm:$0xff]
    %v23 = vld [vmem:[%s1 + $0x30] sm:$0xff]
    %v24 = vld [vmem:[%s1 + $0x38] sm:$0xff]
    %v25 = vld [vmem:[%s1 + $0x40] sm:$0xff]
    %v26 = vld [vmem:[%s1 + $0x48] sm:$0xff]
    %v27 = vld [vmem:[%s1 + $0x50] sm:$0xff]
    %v28 = vld [vmem:[%s1 + $0x58] sm:$0xff]
    %v29 = vld [vmem:[%s1 + $0x60] sm:$0xff]
    %v30 = vld [vmem:[%s1 + $0x68] sm:$0xff]
    %v31 = vld [vmem:[%s1 + $0x70] sm:$0xff]
    %v32 = vld [vmem:[%s1 + $0x78] sm:$0xff]
    %v33 = vld [vmem:[%s1 + $0x80] sm:$0xff]
    %v34 = vld [vmem:[%s1 + $0x88] sm:$0xff]
    %v35 = vld [vmem:[%s1 + $0x90] sm:$0xff]
    %v36 = vld [vmem:[%s1 + $0x98] sm:$0xff]
    %v37 = vld [vmem:[%s1 + $0xa0] sm:$0xff]
    %v38 = vld [vmem:[%s1 + $0xa8] sm:$0xff]
    %v39 = vld [vmem:[%s1 + $0xb0] sm:$0xff]
    %v40 = vld [vmem:[%s1 + $0xb8] sm:$0xff]
    %v41 = vld [vmem:[%s1 + $0xc0] sm:$0xff]
    %v42 = vld [vmem:[%s1 + $0xc8] sm:$0xff]
    %v43 = vld [vmem:[%s1 + $0xd0] sm:$0xff]
    %v44 = vld [vmem:[%s1 + $0xd8] sm:$0xff]
    %v45 = vld [vmem:[%s1 + $0xe0] sm:$0xff]
    %v46 = vld [vmem:[%s1 + $0xe8] sm:$0xff]
    %v47 = vld [vmem:[%s1 + $0xf0] sm:$0xff]
    %v48 = vld [vmem:[%s1 + $0xf8] sm:$0xff]
    %v49 = vld [vmem:[%s1 + $0x100] sm:$0xff]
    %v50 = vld [vmem:[%s1 + $0x108] sm:$0xff]
    %v51 = vld [vmem:[%s1 + $0x110] sm:$0xff]
    %v52 = vld [vmem:[%s1 + $0x118] sm:$0xff]
    %v53 = vld [vmem:[%s1 + $0x120] sm:$0xff]
    %v54 = vld [vmem:[%s1 + $0x128] sm:$0xff]
    %v55 = vld [vmem:[%s1 + $0x130] sm:$0xff]
    %v56 = vld [vmem:[%s1 + $0x138] sm:$0xff]
    %v57 = vld [vmem:[%s1 + $0x140] sm:$0xff]
    %v58 = vld [vmem:[%s1 + $0x148] sm:$0xff]
    %v59 = vld [vmem:[%s1 + $0x150] sm:$0xff]
    %v60 = vld [vmem:[%s1 + $0x158] sm:$0xff]
    %v61 = vld [vmem:[%s1 + $0x160] sm:$0xff]
    %v62 = vld [vmem:[%s1 + $0x168] sm:$0xff]
    %v63 = vld [vmem:[%s1 + $0x170] sm:$0xff]
    %v64 = vld [vmem:[%s1 + $0x178] sm:$0xff]
    %v65 = vld [vmem:[%s1 + $0x180] sm:$0xff]
    %v66 = vld [vmem:[%s1 + $0x188] sm:$0xff]
    %v67 = vld [vmem:[%s1 + $0x190] sm:$0xff]
    %v68 = vld [vmem:[%s1 + $0x198] sm:$0xff]
    %v69 = vld [vmem:[%s1 + $0x1a0] sm:$0xff]
    %v70 = vld [vmem:[%s1 + $0x1a8] sm:$0xff]
    %v71 = vld [vmem:[%s1 + $0x1b0] sm:$0xff]
    %v72 = vld [vmem:[%s1 + $0x1b8] sm:$0xff]
    %v73 = vld [vmem:[%s1 + $0x1c0] sm:$0xff]
    %v74 = vld [vmem:[%s1 + $0x1c8] sm:$0xff]
    %v75 = vld [vmem:[%s1 + $0x1d0] sm:$0xff]
    %v76 = vld [vmem:[%s1 + $0x1d8] sm:$0xff]
    %v77 = vld [vmem:[%s1 + $0x1e0] sm:$0xff]
    %v78 = vld [vmem:[%s1 + $0x1e8] sm:$0xff]
    %v79 = vld [vmem:[%s1 + $0x1f0] sm:$0xff]
    %v80 = vld [vmem:[%s1 + $0x1f8] sm:$0xff]
    %v81 = vld [vmem:[%s1 + $0x200] sm:$0xff]
    %v82 = vld [vmem:[%s1 + $0x208] sm:$0xff]
    %v83 = vld [vmem:[%s1 + $0x210] sm:$0xff]
    %v84 = vld [vmem:[%s1 + $0x218] sm:$0xff]
    %v85 = vld [vmem:[%s1 + $0x220] sm:$0xff]
    %v86 = vld [vmem:[%s1 + $0x228] sm:$0xff]
    %v87 = vld [vmem:[%s1 + $0x230] sm:$0xff]
    %v88 = vld [vmem:[%s1 + $0x238] sm:$0xff]
    %v89 = vld [vmem:[%s1 + $0x240] sm:$0xff]
    %v90 = vld [vmem:[%s1 + $0x248] sm:$0xff]
    %v91 = vld [vmem:[%s1 + $0x250] sm:$0xff]
    %v92 = vld [vmem:[%s1 + $0x258] sm:$0xff]
    %v93 = vld [vmem:[%s1 + $0x260] sm:$0xff]
    %v94 = vld [vmem:[%s1 + $0x268] sm:$0xff]
    %v95 = vld [vmem:[%s1 + $0x270] sm:$0xff]
    %v96 = vld [vmem:[%s1 + $0x278] sm:$0xff]
    %v97 = vld [vmem:[%s2] sm:$0x1]
    %v99 = vlaneseq
    %v100 = vshrl.u32 %v99, 7
    %v101 = vsub.s32 0, %v100
    %v102 = vrot.slane %v97, %v101
    %v106 = vcombine.high %v15, %v15
    %v108 = vunpack.c.l.s4 1983009808
    %v109 = vunpack.c.0.s8 %v108
    %v110 = vlaneseq
    %v111 = vshrl.u32 %v110, 7
    %v112 = vsub.s32 %v109, %v111
    %v113 = vrot.slane %v15, %v112
    %v115 = vunpack.c.l.s4 1983009808
    %v116 = vunpack.c.0.s8 %v115
    %v117 = vlaneseq
    %v118 = vshrl.u32 %v117, 7
    %v119 = vsub.s32 %v116, %v118
    %v120 = vrot.slane %v106, %v119
    %v121 = vcombine.high %v113, %v113
    %v122 = vcombine.high %v120, %v120
    %v124 = vunpack.c.l.s4 1983009808
    %v125 = vunpack.c.0.s8 %v124
    %v126 = vlaneseq
    %v127 = vshrl.u32 %v126, 7
    %v128 = vsub.s32 %v125, %v127
    %v129 = vrot.slane %v16, %v128
    %135 = vmatprep.subr.mxu0 0.0
    %136 = vmatpush1.msra.mxu0 %v17
    %137 = vmatprep.subr.mxu0 0.0
    %138 = vmatpush1.msra.mxu0 %v18
    %139 = vmatprep.subr.mxu0 0.0
    %140 = vmatpush1.msra.mxu0 %v19
    %141 = vmatprep.subr.mxu0 0.0
    %142 = vmatpush1.msra.mxu0 %v20
    %143 = vmatprep.subr.mxu0 0.0
    %144 = vmatpush1.msra.mxu0 %v21
    %145 = vmatprep.subr.mxu0 0.0
    %146 = vmatpush1.msra.mxu0 %v22
    %147 = vmatprep.subr.mxu0 0.0
    %148 = vmatpush1.msra.mxu0 %v23
    %149 = vmatprep.subr.mxu0 0.0
    %150 = vmatpush1.msra.mxu0 %v24
    %151 = vmatprep.subr.mxu0 0.0
    %152 = vmatpush1.msra.mxu0 %v25
    %153 = vmatprep.subr.mxu0 0.0
    %154 = vmatpush1.msra.mxu0 %v26
    %155 = vmatprep.subr.mxu0 0.0
    %156 = vmatpush1.msra.mxu0 %v27
    %157 = vmatprep.subr.mxu0 0.0
    %158 = vmatpush1.msra.mxu0 %v28
    %159 = vmatprep.subr.mxu0 0.0
    %160 = vmatpush1.msra.mxu0 %v29
    %161 = vmatprep.subr.mxu0 0.0
    %162 = vmatpush1.msra.mxu0 %v30
    %163 = vmatprep.subr.mxu0 0.0
    %164 = vmatpush1.msra.mxu0 %v31
    %165 = vmatprep.subr.mxu0 0.0
    %166 = vmatpush1.msra.mxu0 %v32
    %167 = vmatprep.subr.mxu0 0.0
    %168 = vmatpush1.msra.mxu0 %v33
    %169 = vmatprep.subr.mxu0 0.0
    %170 = vmatpush1.msra.mxu0 %v34
    %171 = vmatprep.subr.mxu0 0.0
    %172 = vmatpush1.msra.mxu0 %v35
    %173 = vmatprep.subr.mxu0 0.0
    %174 = vmatpush1.msra.mxu0 %v36
    %175 = vmatprep.subr.mxu0 0.0
    %176 = vmatpush1.msra.mxu0 %v37
    %177 = vmatprep.subr.mxu0 0.0
    %178 = vmatpush1.msra.mxu0 %v38
    %179 = vmatprep.subr.mxu0 0.0
    %180 = vmatpush1.msra.mxu0 %v39
    %181 = vmatprep.subr.mxu0 0.0
    %182 = vmatpush1.msra.mxu0 %v40
    %183 = vmatprep.subr.mxu0 0.0
    %184 = vmatpush1.msra.mxu0 %v41
    %185 = vmatprep.subr.mxu0 0.0
    %186 = vmatpush1.msra.mxu0 %v42
    %187 = vmatprep.subr.mxu0 0.0
    %188 = vmatpush1.msra.mxu0 %v43
    %189 = vmatprep.subr.mxu0 0.0
    %190 = vmatpush1.msra.mxu0 %v44
    %191 = vmatprep.subr.mxu0 0.0
    %192 = vmatpush1.msra.mxu0 %v45
    %193 = vmatprep.subr.mxu0 0.0
    %194 = vmatpush1.msra.mxu0 %v46
    %195 = vmatprep.subr.mxu0 0.0
    %196 = vmatpush1.msra.mxu0 %v47
    %197 = vmatprep.subr.mxu0 0.0
    %198 = vmatpush1.msra.mxu0 %v48
    %199 = vmatprep.mubr.f32.mxu0 %v121
    %200 = vmatmul.mubr.f32.gmra.mrb[0].mxu0 %v113
    %v201 = vpop.f32.mrb[0].mxu0
    %v202 = vadd.f32 %v102, %v201
    %v203 = vpop.f32.mrb[0].mxu0
    %204 = vdwg.mxu0
    %205 = vmatprep.subr.mxu0 0.0
    %206 = vmatpush1.msra.mxu0 %v49
    %207 = vmatprep.subr.mxu0 0.0
    %208 = vmatpush1.msra.mxu0 %v50
    %209 = vmatprep.subr.mxu0 0.0
    %210 = vmatpush1.msra.mxu0 %v51
    %211 = vmatprep.subr.mxu0 0.0
    %212 = vmatpush1.msra.mxu0 %v52
    %213 = vmatprep.subr.mxu0 0.0
    %214 = vmatpush1.msra.mxu0 %v53
    %215 = vmatprep.subr.mxu0 0.0
    %216 = vmatpush1.msra.mxu0 %v54
    %217 = vmatprep.subr.mxu0 0.0
    %218 = vmatpush1.msra.mxu0 %v55
    %219 = vmatprep.subr.mxu0 0.0
    %220 = vmatpush1.msra.mxu0 %v56
    %221 = vmatprep.subr.mxu0 0.0
    %222 = vmatpush1.msra.mxu0 %v57
    %223 = vmatprep.subr.mxu0 0.0
    %224 = vmatpush1.msra.mxu0 %v58
    %225 = vmatprep.subr.mxu0 0.0
    %226 = vmatpush1.msra.mxu0 %v59
    %227 = vmatprep.subr.mxu0 0.0
    %228 = vmatpush1.msra.mxu0 %v60
    %229 = vmatprep.subr.mxu0 0.0
    %230 = vmatpush1.msra.mxu0 %v61
    %231 = vmatprep.subr.mxu0 0.0
    %232 = vmatpush1.msra.mxu0 %v62
    %233 = vmatprep.subr.mxu0 0.0
    %234 = vmatpush1.msra.mxu0 %v63
    %235 = vmatprep.subr.mxu0 0.0
    %236 = vmatpush1.msra.mxu0 %v64
    %237 = vmatprep.subr.mxu0 0.0
    %238 = vmatpush1.msra.mxu0 %v65
    %239 = vmatprep.subr.mxu0 0.0
    %240 = vmatpush1.msra.mxu0 %v66
    %241 = vmatprep.subr.mxu0 0.0
    %242 = vmatpush1.msra.mxu0 %v67
    %243 = vmatprep.subr.mxu0 0.0
    %244 = vmatpush1.msra.mxu0 %v68
    %245 = vmatprep.subr.mxu0 0.0
    %246 = vmatpush1.msra.mxu0 %v69
    %247 = vmatprep.subr.mxu0 0.0
    %248 = vmatpush1.msra.mxu0 %v70
    %249 = vmatprep.subr.mxu0 0.0
    %250 = vmatpush1.msra.mxu0 %v71
    %251 = vmatprep.subr.mxu0 0.0
    %252 = vmatpush1.msra.mxu0 %v72
    %253 = vmatprep.subr.mxu0 0.0
    %254 = vmatpush1.msra.mxu0 %v73
    %255 = vmatprep.subr.mxu0 0.0
    %256 = vmatpush1.msra.mxu0 %v74
    %257 = vmatprep.subr.mxu0 0.0
    %258 = vmatpush1.msra.mxu0 %v75
    %259 = vmatprep.subr.mxu0 0.0
    %260 = vmatpush1.msra.mxu0 %v76
    %261 = vmatprep.subr.mxu0 0.0
    %262 = vmatpush1.msra.mxu0 %v77
    %263 = vmatprep.subr.mxu0 0.0
    %264 = vmatpush1.msra.mxu0 %v78
    %265 = vmatprep.subr.mxu0 0.0
    %266 = vmatpush1.msra.mxu0 %v79
    %267 = vmatprep.subr.mxu0 0.0
    %268 = vmatpush1.msra.mxu0 %v80
    %269 = vmatprep.mubr.f32.mxu0 %v122
    %270 = vmatmul.mubr.f32.gmra.mrb[0].mxu0 %v120
    %v271 = vpop.f32.mrb[0].mxu0
    %v272 = vadd.f32 %v202, %v271
    %v273 = vpop.f32.mrb[0].mxu0
    %274 = vdwg.mxu0
    %275 = vmatprep.subr.mxu0 0.0
    %276 = vmatpush1.msra.mxu0 %v81
    %277 = vmatprep.subr.mxu0 0.0
    %278 = vmatpush1.msra.mxu0 %v82
    %279 = vmatprep.subr.mxu0 0.0
    %280 = vmatpush1.msra.mxu0 %v83
    %281 = vmatprep.subr.mxu0 0.0
    %282 = vmatpush1.msra.mxu0 %v84
    %283 = vmatprep.subr.mxu0 0.0
    %284 = vmatpush1.msra.mxu0 %v85
    %285 = vmatprep.subr.mxu0 0.0
    %286 = vmatpush1.msra.mxu0 %v86
    %287 = vmatprep.subr.mxu0 0.0
    %288 = vmatpush1.msra.mxu0 %v87
    %289 = vmatprep.subr.mxu0 0.0
    %290 = vmatpush1.msra.mxu0 %v88
    %291 = vmatprep.subr.mxu0 0.0
    %292 = vmatpush1.msra.mxu0 %v89
    %293 = vmatprep.subr.mxu0 0.0
    %294 = vmatpush1.msra.mxu0 %v90
    %295 = vmatprep.subr.mxu0 0.0
    %296 = vmatpush1.msra.mxu0 %v91
    %297 = vmatprep.subr.mxu0 0.0
    %298 = vmatpush1.msra.mxu0 %v92
    %299 = vmatprep.subr.mxu0 0.0
    %300 = vmatpush1.msra.mxu0 %v93
    %301 = vmatprep.subr.mxu0 0.0
    %302 = vmatpush1.msra.mxu0 %v94
    %303 = vmatprep.subr.mxu0 0.0
    %304 = vmatpush1.msra.mxu0 %v95
    %305 = vmatprep.subr.mxu0 0.0
    %306 = vmatpush1.msra.mxu0 %v96
    %307 = vmatprep.subr.mxu0 0.0
    %308 = vmatpush1.msra.mxu0 0.0
    %309 = vmatprep.subr.mxu0 0.0
    %310 = vmatpush1.msra.mxu0 0.0
    %311 = vmatprep.subr.mxu0 0.0
    %312 = vmatpush1.msra.mxu0 0.0
    %313 = vmatprep.subr.mxu0 0.0
    %314 = vmatpush1.msra.mxu0 0.0
    %315 = vmatprep.subr.mxu0 0.0
    %316 = vmatpush1.msra.mxu0 0.0
    %317 = vmatprep.subr.mxu0 0.0
    %318 = vmatpush1.msra.mxu0 0.0
    %319 = vmatprep.subr.mxu0 0.0
    %320 = vmatpush1.msra.mxu0 0.0
    %321 = vmatprep.subr.mxu0 0.0
    %322 = vmatpush1.msra.mxu0 0.0
    %323 = vmatprep.subr.mxu0 0.0
    %324 = vmatpush1.msra.mxu0 0.0
    %325 = vmatprep.subr.mxu0 0.0
    %326 = vmatpush1.msra.mxu0 0.0
    %327 = vmatprep.subr.mxu0 0.0
    %328 = vmatpush1.msra.mxu0 0.0
    %329 = vmatprep.subr.mxu0 0.0
    %330 = vmatpush1.msra.mxu0 0.0
    %331 = vmatprep.subr.mxu0 0.0
    %332 = vmatpush1.msra.mxu0 0.0
    %333 = vmatprep.subr.mxu0 0.0
    %334 = vmatpush1.msra.mxu0 0.0
    %335 = vmatprep.subr.mxu0 0.0
    %336 = vmatpush1.msra.mxu0 0.0
    %337 = vmatprep.subr.mxu0 0.0
    %338 = vmatpush1.msra.mxu0 0.0
    %339 = vmatprep.mubr.f32.mxu0 0.0
    %340 = vmatmul.mubr.f32.gmra.mrb[0].mxu0 %v129
    %v341 = vpop.f32.mrb[0].mxu0
    %v342 = vadd.f32 %v272, %v341
    %v343 = vpop.f32.mrb[0].mxu0
    %344 = vdwg.mxu0
    %vm345 = vcmask 320512
    %346 = vst.msk [vmem:[#allocation2] sm:$0x3] %vm345, %v342
    // Predicated region
    $region14: #{cnn_forward.7} parent=1 // pred_check
      _
    $region15: #{cnn_forward.7} parent=1 // pred_check_branch
      %348 = sbr.rel (0) target = $region17
    $region16: #{cnn_forward.7} parent=1 // pred_region
      %s350 = ssub.s32 32, 32
      %351 = vsyncadd [#allocation3], %s350
      %s353 = sshll.u32 [#allocation2], 4
      %s354 = int_to_ptr.vmem [resolvable:$true] %s353
      %356 = dma.vmem_to_hbm [thread:$0]  %s354, 32, %s3, [#allocation3]
    $region17: #{cnn_forward.7} parent=1 // pred_fallthru
      _
    // Predicated region
    $region18: #{cnn_forward.7} parent=1 // pred_check
      _
    $region19: #{cnn_forward.7} parent=1 // pred_check_branch
      %358 = sbr.rel (0) target = $region21
    $region20: #{cnn_forward.7} parent=1 // pred_region
      %359 = dma.done [#allocation3], 32
    $region21: #{cnn_forward.7} parent=1 // pred_fallthru
      _
    %360 = vsyncpa [#allocation3], 1

</llo_original>
